<compile_context>
chip_gen: v5e
topology: v5e:2x2
jax: 0.10.0
libtpu: 0.0.40
codegen_flags: <defaults>
</compile_context>

<pallas_src>
import functools

import jax
import jax.numpy as jnp
from jax import lax
from jax.experimental import pallas as pl
from jax.experimental.pallas import tpu as pltpu


HALO = 8  # halo rows per tile edge; must be >= 7 (seven fused 3x3 convs)

# (Cin, Cout) of the seven convolutions (concat layers take 64 input channels).
_CONV_SPECS = [(3, 32), (32, 32), (32, 32), (32, 32), (64, 32), (64, 32), (64, 6)]


# ----------------------------------------------------------------------------
# VMEM-aware tiling heuristics
# ----------------------------------------------------------------------------
def _vmem_capacity_bytes():
    try:
        return int(pltpu.get_tpu_info().vmem_capacity_bytes)
    except Exception:
        return 64 * 1024 * 1024  # conservative (v7x-sized) fallback


def _pick_tile_h(img_h, img_w, requested=None):
    """Pick the row-tile height from a per-generation VMEM budget."""
    if requested is None:
        budget = int(_vmem_capacity_bytes() * 0.45)
        per_row = 1100 * (img_w + 2)  # ~live VMEM bytes per extended-tile row
        requested = budget // per_row - 2 * HALO
    th = int(max(8, min(int(requested), 256)))
    return int(min(th, ((img_h + 7) // 8) * 8))


# ----------------------------------------------------------------------------
# In-kernel helpers (value-level; Mosaic keeps activations in VMEM / vregs)
# ----------------------------------------------------------------------------
def _conv3x3_flat(a_ext, w_ref, b_ref, mask, *, lout, wp, relu):
    """3x3 "same" conv in flat channels-first form as 3 MXU matmuls (per ky).

    a_ext: (Cin, L2) value; flat padded-grid activation with guard ring zeros.
    w_ref: (3, Cout, 3*Cin) bf16 ref  (ky, co, kx*Cin+ci)
    b_ref: (Cout, 1) f32 ref
    mask : (1, Lout) f32 (zeroes pad columns + out-of-image rows) or None
    returns (Cout, Lout) f32
    """
    acc = None
    for dy in range(3):
        taps = [a_ext[:, dy * wp + dx: dy * wp + dx + lout] for dx in range(3)]
        rhs = jnp.concatenate(taps, axis=0).astype(jnp.bfloat16)   # (3Cin, Lout)
        d = jnp.dot(w_ref[dy], rhs, preferred_element_type=jnp.float32)
        acc = d if acc is None else acc + d
    y = acc + b_ref[...]
    if relu:
        y = jnp.maximum(y, 0.0)
    if mask is not None:
        y = y * mask
    return y


def _embed(y, wp):
    """Re-embed a (C, Lout) activation into the guarded flat grid (C, L2)."""
    z = jnp.zeros((y.shape[0], wp + 1), y.dtype)
    return jnp.concatenate([z, y, z], axis=1)


# ----------------------------------------------------------------------------
# Fused kernel: 7 convs + enhance stage for one (batch, row-tile) grid point
# ----------------------------------------------------------------------------
def _fused_kernel(x_ref, m_ref,
                  w1, b1, w2, b2, w3, b3, w4, b4, w5, b5, w6, b6, w7, b7,
                  enh_ref, xr_ref, xb_ref, *, lout, wp):
    xf = x_ref[0, 0, :, :]                 # (3, L2) f32 guarded flat input tile
    mask = m_ref[0]                        # (1, Lout) f32

    conv = functools.partial(_conv3x3_flat, lout=lout, wp=wp)
    emb = lambda y: _embed(y.astype(jnp.bfloat16), wp)

    x1 = conv(xf, w1, b1, mask, relu=True)
    a1 = emb(x1)
    x2 = conv(a1, w2, b2, mask, relu=True)
    a2 = emb(x2)
    x3 = conv(a2, w3, b3, mask, relu=True)
    a3 = emb(x3)
    x4 = conv(a3, w4, b4, mask, relu=True)
    a4 = emb(x4)
    x5 = conv(jnp.concatenate([a3, a4], axis=0), w5, b5, mask, relu=True)
    a5 = emb(x5)
    x6 = conv(jnp.concatenate([a2, a5], axis=0), w6, b6, mask, relu=True)
    a6 = emb(x6)
    x7 = conv(jnp.concatenate([a1, a6], axis=0), w7, b7, None, relu=False)  # (6, Lout)

    # Fused curve-enhancement stage (junk at pad cols / out-of-image rows is
    # discarded by the wrapper slice).
    x_in = xf[:, wp + 1: wp + 1 + lout]    # original f32 input, output-aligned
    x_r = jnp.tanh(x7[0:3])
    x_b = jnp.maximum(x7[3:6], 0.0)
    enh = -(x_r + x_b) * (x_in * x_in) + (1.0 + x_r) * x_in

    enh_ref[0, 0, :, :] = enh
    xr_ref[0, 0, :, :] = x_r
    xb_ref[0, 0, :, :] = x_b


# ----------------------------------------------------------------------------
# Wrapper: NCHW in / NCHW out, one fused pallas_call
# ----------------------------------------------------------------------------
def enhance_net_forward(x_nchw, params, *, tile_h=None):
    assert HALO >= 7
    x = x_nchw.astype(jnp.float32)
    n, c, h, w = x.shape
    assert c == 3
    wp = w + 2
    th = _pick_tile_h(h, w, tile_h)
    n_th = -(-h // th)
    hpad = n_th * th
    the = th + 2 * HALO
    lout = the * wp
    l2 = lout + 2 * (wp + 1)

    # Zero-pad H (halo + round-up) and W (1px "same" pad).  Overlapping halo'd
    # row tiles, flattened to the guarded flat-spatial layout.
    xp = jnp.pad(x, ((0, 0), (0, 0), (HALO, HALO + hpad - h), (1, 1)))
    tiles = [xp[:, :, t * th: t * th + the, :].reshape(n, 3, lout)
             for t in range(n_th)]
    xt = jnp.stack(tiles, axis=1)                                 # (N, n_th, 3, Lout)
    guard = jnp.zeros((n, n_th, 3, wp + 1), jnp.float32)
    xt = jnp.concatenate([guard, xt, guard], axis=-1)             # (N, n_th, 3, L2)

    # Per-row-tile flat mask: zero pad columns and rows outside the real image.
    rows = jnp.arange(the)[None, :, None]
    cols = jnp.arange(wp)[None, None, :]
    row0 = (jnp.arange(n_th) * th - HALO)[:, None, None]
    g = row0 + rows
    masks = ((g >= 0) & (g < h) & (cols >= 1) & (cols <= w))
    masks = masks.astype(jnp.float32).reshape(n_th, 1, lout)

    # Kernel-layout weights: (3, Cout, 3*Cin) bf16 (ky, co, kx*Cin+ci); bias (Cout, 1) f32.
    flat_params = []
    w_specs = []
    for wt, bt in params:
        co, ci = wt.shape[0], wt.shape[1]
        wk = jnp.transpose(wt, (2, 0, 3, 1)).reshape(3, co, 3 * ci).astype(jnp.bfloat16)
        bk = bt.reshape(co, 1).astype(jnp.float32)
        flat_params += [wk, bk]
        w_specs += [pl.BlockSpec(wk.shape, lambda i, j: (0, 0, 0)),
                    pl.BlockSpec(bk.shape, lambda i, j: (0, 0))]

    kernel = functools.partial(_fused_kernel, lout=lout, wp=wp)
    out_sds = jax.ShapeDtypeStruct((n, n_th, 3, lout), jnp.float32)
    out_spec = pl.BlockSpec((1, 1, 3, lout), lambda i, j: (i, j, 0, 0))

    vmem_cap = _vmem_capacity_bytes()
    vmem_limit = int(min(vmem_cap * 3 // 4, 100 * 1024 * 1024))

    enh, x_r, x_b = pl.pallas_call(
        kernel,
        out_shape=(out_sds, out_sds, out_sds),
        grid_spec=pltpu.PrefetchScalarGridSpec(
            num_scalar_prefetch=0,
            grid=(n, n_th),
            in_specs=[pl.BlockSpec((1, 1, 3, l2), lambda i, j: (i, j, 0, 0)),
                      pl.BlockSpec((1, 1, lout), lambda i, j: (j, 0, 0))] + w_specs,
            out_specs=(out_spec, out_spec, out_spec)),
        compiler_params=pltpu.CompilerParams(
            dimension_semantics=("parallel", "parallel"),
            vmem_limit_bytes=vmem_limit),
    )(xt, masks, *flat_params)

    def unflatten(o):
        o = o.reshape(n, n_th, 3, the, wp)[:, :, :, HALO:HALO + th, 1:1 + w]
        o = jnp.transpose(o, (0, 2, 1, 3, 4)).reshape(n, 3, hpad, w)
        return o[:, :, :h, :]

    enh = unflatten(enh)
    x_r = unflatten(x_r)
    x_b = unflatten(x_b)
    return enh, enh, x_r, x_b


# ----------------------------------------------------------------------------
# Parameters (deterministic init; PyTorch conv layout (Cout, Cin, 3, 3))
# ----------------------------------------------------------------------------
def make_params(seed=42):
    key = jax.random.PRNGKey(seed)
    params = []
    for cin, cout in _CONV_SPECS:
        key, kw, kb = jax.random.split(key, 3)
        wt = jax.random.normal(kw, (cout, cin, 3, 3), jnp.float32) / jnp.sqrt(cin * 9.0)
        bt = 0.01 * jax.random.normal(kb, (cout,), jnp.float32)
        params.append((wt, bt))
    return params


# ----------------------------------------------------------------------------
# Pure-JAX reference (bf16 matmul operands / f32 accumulation, like the kernel)
# ----------------------------------------------------------------------------
def _ref_conv(x, wt, bt, relu):
    y = lax.conv_general_dilated(
        x.astype(jnp.bfloat16), wt.astype(jnp.bfloat16),
        window_strides=(1, 1), padding="SAME",
        dimension_numbers=("NCHW", "OIHW", "NCHW"),
        preferred_element_type=jnp.float32)
    y = y + bt.reshape(1, -1, 1, 1)
    return jnp.maximum(y, 0.0) if relu else y


def reference_forward(x_nchw, params):
    x = x_nchw.astype(jnp.float32)
    x1 = _ref_conv(x, *params[0], True)
    x2 = _ref_conv(x1, *params[1], True)
    x3 = _ref_conv(x2, *params[2], True)
    x4 = _ref_conv(x3, *params[3], True)
    x5 = _ref_conv(jnp.concatenate([x3, x4], 1), *params[4], True)
    x6 = _ref_conv(jnp.concatenate([x2, x5], 1), *params[5], True)
    x7 = _ref_conv(jnp.concatenate([x1, x6], 1), *params[6], False)
    x_r = jnp.tanh(x7[:, 0:3])
    x_b = jnp.maximum(x7[:, 3:6], 0.0)
    out = -(x_r + x_b) * (x * x) + (1.0 + x_r) * x
    return out, out, x_r, x_b


if __name__ == "__main__":
    N, C, H, W = 2, 3, 16, 16
    key = jax.random.PRNGKey(0)
    x = jax.random.uniform(key, (N, C, H, W), jnp.float32)   # image-like input
    params = make_params(seed=42)

    # tile_h=8 -> two row tiles per image: exercises the halo + masking path.
    fwd = jax.jit(functools.partial(enhance_net_forward, tile_h=8))
    outs = jax.block_until_ready(fwd(x, params))

    refs = reference_forward(x, params)
    names = ["enhance_image_1", "enhance_image", "x_r", "x_b"]
    for nm, o, r in zip(names, outs, refs):
        assert o.shape == r.shape and o.dtype == r.dtype, nm
        max_err = float(jnp.max(jnp.abs(o - r)))
        if max_err > 5e-3:
            raise AssertionError(f"{nm}: mismatch vs reference, max_err={max_err}")

    print("KERNEL_OK")
</pallas_src>

<mosaic_0001>
module attributes {stable_mosaic.version = 11 : i64} {
  func.func @_fused_kernel(%arg0: i32, %arg1: i32, %arg2: memref<1x1x3x470xf32, #tpu.memory_space<vmem>>, %arg3: memref<1x1x432xf32, #tpu.memory_space<vmem>>, %arg4: memref<3x32x9xbf16, #tpu.memory_space<vmem>>, %arg5: memref<32x1xf32, #tpu.memory_space<vmem>>, %arg6: memref<3x32x96xbf16, #tpu.memory_space<vmem>>, %arg7: memref<32x1xf32, #tpu.memory_space<vmem>>, %arg8: memref<3x32x96xbf16, #tpu.memory_space<vmem>>, %arg9: memref<32x1xf32, #tpu.memory_space<vmem>>, %arg10: memref<3x32x96xbf16, #tpu.memory_space<vmem>>, %arg11: memref<32x1xf32, #tpu.memory_space<vmem>>, %arg12: memref<3x32x192xbf16, #tpu.memory_space<vmem>>, %arg13: memref<32x1xf32, #tpu.memory_space<vmem>>, %arg14: memref<3x32x192xbf16, #tpu.memory_space<vmem>>, %arg15: memref<32x1xf32, #tpu.memory_space<vmem>>, %arg16: memref<3x6x192xbf16, #tpu.memory_space<vmem>>, %arg17: memref<6x1xf32, #tpu.memory_space<vmem>>, %arg18: memref<1x1x3x432xf32, #tpu.memory_space<vmem>>, %arg19: memref<1x1x3x432xf32, #tpu.memory_space<vmem>>, %arg20: memref<1x1x3x432xf32, #tpu.memory_space<vmem>>) attributes {dimension_semantics = [#tpu.dimension_semantics<parallel>, #tpu.dimension_semantics<parallel>], iteration_bounds = array<i64: 2, 2>, scalar_prefetch = 0 : i64, scratch_operands = 0 : i64, tpu.core_type = #tpu.core_type<tc>, window_params = [{transform_indices = @transform_0, window_bounds = array<i64: 1, 1, 3, 470>}, {transform_indices = @transform_1, window_bounds = array<i64: 1, 1, 432>}, {pipeline_mode = #tpu.pipeline_mode<synchronous>, transform_indices = @transform_2, window_bounds = array<i64: 3, 32, 9>}, {pipeline_mode = #tpu.pipeline_mode<synchronous>, transform_indices = @transform_3, window_bounds = array<i64: 32, 1>}, {pipeline_mode = #tpu.pipeline_mode<synchronous>, transform_indices = @transform_4, window_bounds = array<i64: 3, 32, 96>}, {pipeline_mode = #tpu.pipeline_mode<synchronous>, transform_indices = @transform_5, window_bounds = array<i64: 32, 1>}, {pipeline_mode = #tpu.pipeline_mode<synchronous>, transform_indices = @transform_6, window_bounds = array<i64: 3, 32, 96>}, {pipeline_mode = #tpu.pipeline_mode<synchronous>, transform_indices = @transform_7, window_bounds = array<i64: 32, 1>}, {pipeline_mode = #tpu.pipeline_mode<synchronous>, transform_indices = @transform_8, window_bounds = array<i64: 3, 32, 96>}, {pipeline_mode = #tpu.pipeline_mode<synchronous>, transform_indices = @transform_9, window_bounds = array<i64: 32, 1>}, {pipeline_mode = #tpu.pipeline_mode<synchronous>, transform_indices = @transform_10, window_bounds = array<i64: 3, 32, 192>}, {pipeline_mode = #tpu.pipeline_mode<synchronous>, transform_indices = @transform_11, window_bounds = array<i64: 32, 1>}, {pipeline_mode = #tpu.pipeline_mode<synchronous>, transform_indices = @transform_12, window_bounds = array<i64: 3, 32, 192>}, {pipeline_mode = #tpu.pipeline_mode<synchronous>, transform_indices = @transform_13, window_bounds = array<i64: 32, 1>}, {pipeline_mode = #tpu.pipeline_mode<synchronous>, transform_indices = @transform_14, window_bounds = array<i64: 3, 6, 192>}, {pipeline_mode = #tpu.pipeline_mode<synchronous>, transform_indices = @transform_15, window_bounds = array<i64: 6, 1>}, {transform_indices = @transform_16, window_bounds = array<i64: 1, 1, 3, 432>}, {transform_indices = @transform_17, window_bounds = array<i64: 1, 1, 3, 432>}, {transform_indices = @transform_18, window_bounds = array<i64: 1, 1, 3, 432>}]} {
    %c0 = arith.constant 0 : index
    %c0_0 = arith.constant 0 : index
    %c0_1 = arith.constant 0 : index
    %c0_2 = arith.constant 0 : index
    %0 = vector.load %arg2[%c0, %c0_0, %c0_1, %c0_2] : memref<1x1x3x470xf32, #tpu.memory_space<vmem>>, vector<1x1x3x470xf32>
    %1 = vector.shape_cast %0 : vector<1x1x3x470xf32> to vector<3x470xf32>
    %c0_3 = arith.constant 0 : index
    %c0_4 = arith.constant 0 : index
    %c0_5 = arith.constant 0 : index
    %2 = vector.load %arg3[%c0_3, %c0_4, %c0_5] : memref<1x1x432xf32, #tpu.memory_space<vmem>>, vector<1x1x432xf32>
    %3 = vector.shape_cast %2 : vector<1x1x432xf32> to vector<1x432xf32>
    %4 = vector.extract_strided_slice %1 {offsets = [0, 0], sizes = [3, 432], strides = [1, 1]} : vector<3x470xf32> to vector<3x432xf32>
    %5 = vector.extract_strided_slice %1 {offsets = [0, 1], sizes = [3, 432], strides = [1, 1]} : vector<3x470xf32> to vector<3x432xf32>
    %6 = vector.extract_strided_slice %1 {offsets = [0, 2], sizes = [3, 432], strides = [1, 1]} : vector<3x470xf32> to vector<3x432xf32>
    %7 = tpu.concatenate %4, %5, %6 in 0 : vector<3x432xf32>, vector<3x432xf32>, vector<3x432xf32> -> vector<9x432xf32>
    %8 = arith.truncf %7 : vector<9x432xf32> to vector<9x432xbf16>
    %c0_6 = arith.constant 0 : index
    %c0_7 = arith.constant 0 : index
    %c0_8 = arith.constant 0 : index
    %9 = vector.load %arg4[%c0_6, %c0_7, %c0_8] : memref<3x32x9xbf16, #tpu.memory_space<vmem>>, vector<1x32x9xbf16>
    %10 = vector.shape_cast %9 : vector<1x32x9xbf16> to vector<32x9xbf16>
    %cst = arith.constant dense<0.000000e+00> : vector<32x432xf32>
    %11 = tpu.matmul %10, %8, %cst {dimension_numbers = #tpu.dot_dimension_numbers<[1], [0], [0], [1], [0, 0, 1, 1], [], []>} : vector<32x9xbf16>, vector<9x432xbf16>, vector<32x432xf32> -> vector<32x432xf32>
    %12 = vector.extract_strided_slice %1 {offsets = [0, 18], sizes = [3, 432], strides = [1, 1]} : vector<3x470xf32> to vector<3x432xf32>
    %13 = vector.extract_strided_slice %1 {offsets = [0, 19], sizes = [3, 432], strides = [1, 1]} : vector<3x470xf32> to vector<3x432xf32>
    %14 = vector.extract_strided_slice %1 {offsets = [0, 20], sizes = [3, 432], strides = [1, 1]} : vector<3x470xf32> to vector<3x432xf32>
    %15 = tpu.concatenate %12, %13, %14 in 0 : vector<3x432xf32>, vector<3x432xf32>, vector<3x432xf32> -> vector<9x432xf32>
    %16 = arith.truncf %15 : vector<9x432xf32> to vector<9x432xbf16>
    %c1 = arith.constant 1 : index
    %c0_9 = arith.constant 0 : index
    %c0_10 = arith.constant 0 : index
    %17 = vector.load %arg4[%c1, %c0_9, %c0_10] : memref<3x32x9xbf16, #tpu.memory_space<vmem>>, vector<1x32x9xbf16>
    %18 = vector.shape_cast %17 : vector<1x32x9xbf16> to vector<32x9xbf16>
    %cst_11 = arith.constant dense<0.000000e+00> : vector<32x432xf32>
    %19 = tpu.matmul %18, %16, %cst_11 {dimension_numbers = #tpu.dot_dimension_numbers<[1], [0], [0], [1], [0, 0, 1, 1], [], []>} : vector<32x9xbf16>, vector<9x432xbf16>, vector<32x432xf32> -> vector<32x432xf32>
    %20 = arith.addf %11, %19 : vector<32x432xf32>
    %21 = vector.extract_strided_slice %1 {offsets = [0, 36], sizes = [3, 432], strides = [1, 1]} : vector<3x470xf32> to vector<3x432xf32>
    %22 = vector.extract_strided_slice %1 {offsets = [0, 37], sizes = [3, 432], strides = [1, 1]} : vector<3x470xf32> to vector<3x432xf32>
    %23 = vector.extract_strided_slice %1 {offsets = [0, 38], sizes = [3, 432], strides = [1, 1]} : vector<3x470xf32> to vector<3x432xf32>
    %24 = tpu.concatenate %21, %22, %23 in 0 : vector<3x432xf32>, vector<3x432xf32>, vector<3x432xf32> -> vector<9x432xf32>
    %25 = arith.truncf %24 : vector<9x432xf32> to vector<9x432xbf16>
    %c2 = arith.constant 2 : index
    %c0_12 = arith.constant 0 : index
    %c0_13 = arith.constant 0 : index
    %26 = vector.load %arg4[%c2, %c0_12, %c0_13] : memref<3x32x9xbf16, #tpu.memory_space<vmem>>, vector<1x32x9xbf16>
    %27 = vector.shape_cast %26 : vector<1x32x9xbf16> to vector<32x9xbf16>
    %cst_14 = arith.constant dense<0.000000e+00> : vector<32x432xf32>
    %28 = tpu.matmul %27, %25, %cst_14 {dimension_numbers = #tpu.dot_dimension_numbers<[1], [0], [0], [1], [0, 0, 1, 1], [], []>} : vector<32x9xbf16>, vector<9x432xbf16>, vector<32x432xf32> -> vector<32x432xf32>
    %29 = arith.addf %20, %28 : vector<32x432xf32>
    %c0_15 = arith.constant 0 : index
    %c0_16 = arith.constant 0 : index
    %30 = vector.load %arg5[%c0_15, %c0_16] : memref<32x1xf32, #tpu.memory_space<vmem>>, vector<32x1xf32>
    %31 = vector.broadcast %30 : vector<32x1xf32> to vector<32x432xf32>
    %32 = arith.addf %29, %31 : vector<32x432xf32>
    %cst_17 = arith.constant 0.000000e+00 : f32
    %33 = vector.broadcast %cst_17 : f32 to vector<32x432xf32>
    %34 = arith.maximumf %32, %33 : vector<32x432xf32>
    %35 = vector.broadcast %3 : vector<1x432xf32> to vector<32x432xf32>
    %36 = arith.mulf %34, %35 : vector<32x432xf32>
    %37 = arith.truncf %36 : vector<32x432xf32> to vector<32x432xbf16>
    %cst_18 = arith.constant 0.000000e+00 : bf16
    %38 = vector.broadcast %cst_18 : bf16 to vector<32x19xbf16>
    %39 = tpu.concatenate %38, %37, %38 in 1 : vector<32x19xbf16>, vector<32x432xbf16>, vector<32x19xbf16> -> vector<32x470xbf16>
    %40 = vector.extract_strided_slice %39 {offsets = [0, 0], sizes = [32, 432], strides = [1, 1]} : vector<32x470xbf16> to vector<32x432xbf16>
    %41 = vector.extract_strided_slice %39 {offsets = [0, 1], sizes = [32, 432], strides = [1, 1]} : vector<32x470xbf16> to vector<32x432xbf16>
    %42 = vector.extract_strided_slice %39 {offsets = [0, 2], sizes = [32, 432], strides = [1, 1]} : vector<32x470xbf16> to vector<32x432xbf16>
    %43 = tpu.concatenate %40, %41, %42 in 0 : vector<32x432xbf16>, vector<32x432xbf16>, vector<32x432xbf16> -> vector<96x432xbf16>
    %c0_19 = arith.constant 0 : index
    %c0_20 = arith.constant 0 : index
    %c0_21 = arith.constant 0 : index
    %44 = vector.load %arg6[%c0_19, %c0_20, %c0_21] : memref<3x32x96xbf16, #tpu.memory_space<vmem>>, vector<1x32x96xbf16>
    %45 = vector.shape_cast %44 : vector<1x32x96xbf16> to vector<32x96xbf16>
    %cst_22 = arith.constant dense<0.000000e+00> : vector<32x432xf32>
    %46 = tpu.matmul %45, %43, %cst_22 {dimension_numbers = #tpu.dot_dimension_numbers<[1], [0], [0], [1], [0, 0, 1, 1], [], []>} : vector<32x96xbf16>, vector<96x432xbf16>, vector<32x432xf32> -> vector<32x432xf32>
    %47 = vector.extract_strided_slice %39 {offsets = [0, 18], sizes = [32, 432], strides = [1, 1]} : vector<32x470xbf16> to vector<32x432xbf16>
    %48 = vector.extract_strided_slice %39 {offsets = [0, 19], sizes = [32, 432], strides = [1, 1]} : vector<32x470xbf16> to vector<32x432xbf16>
    %49 = vector.extract_strided_slice %39 {offsets = [0, 20], sizes = [32, 432], strides = [1, 1]} : vector<32x470xbf16> to vector<32x432xbf16>
    %50 = tpu.concatenate %47, %48, %49 in 0 : vector<32x432xbf16>, vector<32x432xbf16>, vector<32x432xbf16> -> vector<96x432xbf16>
    %c1_23 = arith.constant 1 : index
    %c0_24 = arith.constant 0 : index
    %c0_25 = arith.constant 0 : index
    %51 = vector.load %arg6[%c1_23, %c0_24, %c0_25] : memref<3x32x96xbf16, #tpu.memory_space<vmem>>, vector<1x32x96xbf16>
    %52 = vector.shape_cast %51 : vector<1x32x96xbf16> to vector<32x96xbf16>
    %cst_26 = arith.constant dense<0.000000e+00> : vector<32x432xf32>
    %53 = tpu.matmul %52, %50, %cst_26 {dimension_numbers = #tpu.dot_dimension_numbers<[1], [0], [0], [1], [0, 0, 1, 1], [], []>} : vector<32x96xbf16>, vector<96x432xbf16>, vector<32x432xf32> -> vector<32x432xf32>
    %54 = arith.addf %46, %53 : vector<32x432xf32>
    %55 = vector.extract_strided_slice %39 {offsets = [0, 36], sizes = [32, 432], strides = [1, 1]} : vector<32x470xbf16> to vector<32x432xbf16>
    %56 = vector.extract_strided_slice %39 {offsets = [0, 37], sizes = [32, 432], strides = [1, 1]} : vector<32x470xbf16> to vector<32x432xbf16>
    %57 = vector.extract_strided_slice %39 {offsets = [0, 38], sizes = [32, 432], strides = [1, 1]} : vector<32x470xbf16> to vector<32x432xbf16>
    %58 = tpu.concatenate %55, %56, %57 in 0 : vector<32x432xbf16>, vector<32x432xbf16>, vector<32x432xbf16> -> vector<96x432xbf16>
    %c2_27 = arith.constant 2 : index
    %c0_28 = arith.constant 0 : index
    %c0_29 = arith.constant 0 : index
    %59 = vector.load %arg6[%c2_27, %c0_28, %c0_29] : memref<3x32x96xbf16, #tpu.memory_space<vmem>>, vector<1x32x96xbf16>
    %60 = vector.shape_cast %59 : vector<1x32x96xbf16> to vector<32x96xbf16>
    %cst_30 = arith.constant dense<0.000000e+00> : vector<32x432xf32>
    %61 = tpu.matmul %60, %58, %cst_30 {dimension_numbers = #tpu.dot_dimension_numbers<[1], [0], [0], [1], [0, 0, 1, 1], [], []>} : vector<32x96xbf16>, vector<96x432xbf16>, vector<32x432xf32> -> vector<32x432xf32>
    %62 = arith.addf %54, %61 : vector<32x432xf32>
    %c0_31 = arith.constant 0 : index
    %c0_32 = arith.constant 0 : index
    %63 = vector.load %arg7[%c0_31, %c0_32] : memref<32x1xf32, #tpu.memory_space<vmem>>, vector<32x1xf32>
    %64 = vector.broadcast %63 : vector<32x1xf32> to vector<32x432xf32>
    %65 = arith.addf %62, %64 : vector<32x432xf32>
    %cst_33 = arith.constant 0.000000e+00 : f32
    %66 = vector.broadcast %cst_33 : f32 to vector<32x432xf32>
    %67 = arith.maximumf %65, %66 : vector<32x432xf32>
    %68 = vector.broadcast %3 : vector<1x432xf32> to vector<32x432xf32>
    %69 = arith.mulf %67, %68 : vector<32x432xf32>
    %70 = arith.truncf %69 : vector<32x432xf32> to vector<32x432xbf16>
    %cst_34 = arith.constant 0.000000e+00 : bf16
    %71 = vector.broadcast %cst_34 : bf16 to vector<32x19xbf16>
    %72 = tpu.concatenate %71, %70, %71 in 1 : vector<32x19xbf16>, vector<32x432xbf16>, vector<32x19xbf16> -> vector<32x470xbf16>
    %73 = vector.extract_strided_slice %72 {offsets = [0, 0], sizes = [32, 432], strides = [1, 1]} : vector<32x470xbf16> to vector<32x432xbf16>
    %74 = vector.extract_strided_slice %72 {offsets = [0, 1], sizes = [32, 432], strides = [1, 1]} : vector<32x470xbf16> to vector<32x432xbf16>
    %75 = vector.extract_strided_slice %72 {offsets = [0, 2], sizes = [32, 432], strides = [1, 1]} : vector<32x470xbf16> to vector<32x432xbf16>
    %76 = tpu.concatenate %73, %74, %75 in 0 : vector<32x432xbf16>, vector<32x432xbf16>, vector<32x432xbf16> -> vector<96x432xbf16>
    %c0_35 = arith.constant 0 : index
    %c0_36 = arith.constant 0 : index
    %c0_37 = arith.constant 0 : index
    %77 = vector.load %arg8[%c0_35, %c0_36, %c0_37] : memref<3x32x96xbf16, #tpu.memory_space<vmem>>, vector<1x32x96xbf16>
    %78 = vector.shape_cast %77 : vector<1x32x96xbf16> to vector<32x96xbf16>
    %cst_38 = arith.constant dense<0.000000e+00> : vector<32x432xf32>
    %79 = tpu.matmul %78, %76, %cst_38 {dimension_numbers = #tpu.dot_dimension_numbers<[1], [0], [0], [1], [0, 0, 1, 1], [], []>} : vector<32x96xbf16>, vector<96x432xbf16>, vector<32x432xf32> -> vector<32x432xf32>
    %80 = vector.extract_strided_slice %72 {offsets = [0, 18], sizes = [32, 432], strides = [1, 1]} : vector<32x470xbf16> to vector<32x432xbf16>
    %81 = vector.extract_strided_slice %72 {offsets = [0, 19], sizes = [32, 432], strides = [1, 1]} : vector<32x470xbf16> to vector<32x432xbf16>
    %82 = vector.extract_strided_slice %72 {offsets = [0, 20], sizes = [32, 432], strides = [1, 1]} : vector<32x470xbf16> to vector<32x432xbf16>
    %83 = tpu.concatenate %80, %81, %82 in 0 : vector<32x432xbf16>, vector<32x432xbf16>, vector<32x432xbf16> -> vector<96x432xbf16>
    %c1_39 = arith.constant 1 : index
    %c0_40 = arith.constant 0 : index
    %c0_41 = arith.constant 0 : index
    %84 = vector.load %arg8[%c1_39, %c0_40, %c0_41] : memref<3x32x96xbf16, #tpu.memory_space<vmem>>, vector<1x32x96xbf16>
    %85 = vector.shape_cast %84 : vector<1x32x96xbf16> to vector<32x96xbf16>
    %cst_42 = arith.constant dense<0.000000e+00> : vector<32x432xf32>
    %86 = tpu.matmul %85, %83, %cst_42 {dimension_numbers = #tpu.dot_dimension_numbers<[1], [0], [0], [1], [0, 0, 1, 1], [], []>} : vector<32x96xbf16>, vector<96x432xbf16>, vector<32x432xf32> -> vector<32x432xf32>
    %87 = arith.addf %79, %86 : vector<32x432xf32>
    %88 = vector.extract_strided_slice %72 {offsets = [0, 36], sizes = [32, 432], strides = [1, 1]} : vector<32x470xbf16> to vector<32x432xbf16>
    %89 = vector.extract_strided_slice %72 {offsets = [0, 37], sizes = [32, 432], strides = [1, 1]} : vector<32x470xbf16> to vector<32x432xbf16>
    %90 = vector.extract_strided_slice %72 {offsets = [0, 38], sizes = [32, 432], strides = [1, 1]} : vector<32x470xbf16> to vector<32x432xbf16>
    %91 = tpu.concatenate %88, %89, %90 in 0 : vector<32x432xbf16>, vector<32x432xbf16>, vector<32x432xbf16> -> vector<96x432xbf16>
    %c2_43 = arith.constant 2 : index
    %c0_44 = arith.constant 0 : index
    %c0_45 = arith.constant 0 : index
    %92 = vector.load %arg8[%c2_43, %c0_44, %c0_45] : memref<3x32x96xbf16, #tpu.memory_space<vmem>>, vector<1x32x96xbf16>
    %93 = vector.shape_cast %92 : vector<1x32x96xbf16> to vector<32x96xbf16>
    %cst_46 = arith.constant dense<0.000000e+00> : vector<32x432xf32>
    %94 = tpu.matmul %93, %91, %cst_46 {dimension_numbers = #tpu.dot_dimension_numbers<[1], [0], [0], [1], [0, 0, 1, 1], [], []>} : vector<32x96xbf16>, vector<96x432xbf16>, vector<32x432xf32> -> vector<32x432xf32>
    %95 = arith.addf %87, %94 : vector<32x432xf32>
    %c0_47 = arith.constant 0 : index
    %c0_48 = arith.constant 0 : index
    %96 = vector.load %arg9[%c0_47, %c0_48] : memref<32x1xf32, #tpu.memory_space<vmem>>, vector<32x1xf32>
    %97 = vector.broadcast %96 : vector<32x1xf32> to vector<32x432xf32>
    %98 = arith.addf %95, %97 : vector<32x432xf32>
    %cst_49 = arith.constant 0.000000e+00 : f32
    %99 = vector.broadcast %cst_49 : f32 to vector<32x432xf32>
    %100 = arith.maximumf %98, %99 : vector<32x432xf32>
    %101 = vector.broadcast %3 : vector<1x432xf32> to vector<32x432xf32>
    %102 = arith.mulf %100, %101 : vector<32x432xf32>
    %103 = arith.truncf %102 : vector<32x432xf32> to vector<32x432xbf16>
    %cst_50 = arith.constant 0.000000e+00 : bf16
    %104 = vector.broadcast %cst_50 : bf16 to vector<32x19xbf16>
    %105 = tpu.concatenate %104, %103, %104 in 1 : vector<32x19xbf16>, vector<32x432xbf16>, vector<32x19xbf16> -> vector<32x470xbf16>
    %106 = vector.extract_strided_slice %105 {offsets = [0, 0], sizes = [32, 432], strides = [1, 1]} : vector<32x470xbf16> to vector<32x432xbf16>
    %107 = vector.extract_strided_slice %105 {offsets = [0, 1], sizes = [32, 432], strides = [1, 1]} : vector<32x470xbf16> to vector<32x432xbf16>
    %108 = vector.extract_strided_slice %105 {offsets = [0, 2], sizes = [32, 432], strides = [1, 1]} : vector<32x470xbf16> to vector<32x432xbf16>
    %109 = tpu.concatenate %106, %107, %108 in 0 : vector<32x432xbf16>, vector<32x432xbf16>, vector<32x432xbf16> -> vector<96x432xbf16>
    %c0_51 = arith.constant 0 : index
    %c0_52 = arith.constant 0 : index
    %c0_53 = arith.constant 0 : index
    %110 = vector.load %arg10[%c0_51, %c0_52, %c0_53] : memref<3x32x96xbf16, #tpu.memory_space<vmem>>, vector<1x32x96xbf16>
    %111 = vector.shape_cast %110 : vector<1x32x96xbf16> to vector<32x96xbf16>
    %cst_54 = arith.constant dense<0.000000e+00> : vector<32x432xf32>
    %112 = tpu.matmul %111, %109, %cst_54 {dimension_numbers = #tpu.dot_dimension_numbers<[1], [0], [0], [1], [0, 0, 1, 1], [], []>} : vector<32x96xbf16>, vector<96x432xbf16>, vector<32x432xf32> -> vector<32x432xf32>
    %113 = vector.extract_strided_slice %105 {offsets = [0, 18], sizes = [32, 432], strides = [1, 1]} : vector<32x470xbf16> to vector<32x432xbf16>
    %114 = vector.extract_strided_slice %105 {offsets = [0, 19], sizes = [32, 432], strides = [1, 1]} : vector<32x470xbf16> to vector<32x432xbf16>
    %115 = vector.extract_strided_slice %105 {offsets = [0, 20], sizes = [32, 432], strides = [1, 1]} : vector<32x470xbf16> to vector<32x432xbf16>
    %116 = tpu.concatenate %113, %114, %115 in 0 : vector<32x432xbf16>, vector<32x432xbf16>, vector<32x432xbf16> -> vector<96x432xbf16>
    %c1_55 = arith.constant 1 : index
    %c0_56 = arith.constant 0 : index
    %c0_57 = arith.constant 0 : index
    %117 = vector.load %arg10[%c1_55, %c0_56, %c0_57] : memref<3x32x96xbf16, #tpu.memory_space<vmem>>, vector<1x32x96xbf16>
    %118 = vector.shape_cast %117 : vector<1x32x96xbf16> to vector<32x96xbf16>
    %cst_58 = arith.constant dense<0.000000e+00> : vector<32x432xf32>
    %119 = tpu.matmul %118, %116, %cst_58 {dimension_numbers = #tpu.dot_dimension_numbers<[1], [0], [0], [1], [0, 0, 1, 1], [], []>} : vector<32x96xbf16>, vector<96x432xbf16>, vector<32x432xf32> -> vector<32x432xf32>
    %120 = arith.addf %112, %119 : vector<32x432xf32>
    %121 = vector.extract_strided_slice %105 {offsets = [0, 36], sizes = [32, 432], strides = [1, 1]} : vector<32x470xbf16> to vector<32x432xbf16>
    %122 = vector.extract_strided_slice %105 {offsets = [0, 37], sizes = [32, 432], strides = [1, 1]} : vector<32x470xbf16> to vector<32x432xbf16>
    %123 = vector.extract_strided_slice %105 {offsets = [0, 38], sizes = [32, 432], strides = [1, 1]} : vector<32x470xbf16> to vector<32x432xbf16>
    %124 = tpu.concatenate %121, %122, %123 in 0 : vector<32x432xbf16>, vector<32x432xbf16>, vector<32x432xbf16> -> vector<96x432xbf16>
    %c2_59 = arith.constant 2 : index
    %c0_60 = arith.constant 0 : index
    %c0_61 = arith.constant 0 : index
    %125 = vector.load %arg10[%c2_59, %c0_60, %c0_61] : memref<3x32x96xbf16, #tpu.memory_space<vmem>>, vector<1x32x96xbf16>
    %126 = vector.shape_cast %125 : vector<1x32x96xbf16> to vector<32x96xbf16>
    %cst_62 = arith.constant dense<0.000000e+00> : vector<32x432xf32>
    %127 = tpu.matmul %126, %124, %cst_62 {dimension_numbers = #tpu.dot_dimension_numbers<[1], [0], [0], [1], [0, 0, 1, 1], [], []>} : vector<32x96xbf16>, vector<96x432xbf16>, vector<32x432xf32> -> vector<32x432xf32>
    %128 = arith.addf %120, %127 : vector<32x432xf32>
    %c0_63 = arith.constant 0 : index
    %c0_64 = arith.constant 0 : index
    %129 = vector.load %arg11[%c0_63, %c0_64] : memref<32x1xf32, #tpu.memory_space<vmem>>, vector<32x1xf32>
    %130 = vector.broadcast %129 : vector<32x1xf32> to vector<32x432xf32>
    %131 = arith.addf %128, %130 : vector<32x432xf32>
    %cst_65 = arith.constant 0.000000e+00 : f32
    %132 = vector.broadcast %cst_65 : f32 to vector<32x432xf32>
    %133 = arith.maximumf %131, %132 : vector<32x432xf32>
    %134 = vector.broadcast %3 : vector<1x432xf32> to vector<32x432xf32>
    %135 = arith.mulf %133, %134 : vector<32x432xf32>
    %136 = arith.truncf %135 : vector<32x432xf32> to vector<32x432xbf16>
    %cst_66 = arith.constant 0.000000e+00 : bf16
    %137 = vector.broadcast %cst_66 : bf16 to vector<32x19xbf16>
    %138 = tpu.concatenate %137, %136, %137 in 1 : vector<32x19xbf16>, vector<32x432xbf16>, vector<32x19xbf16> -> vector<32x470xbf16>
    %139 = tpu.concatenate %105, %138 in 0 : vector<32x470xbf16>, vector<32x470xbf16> -> vector<64x470xbf16>
    %140 = vector.extract_strided_slice %139 {offsets = [0, 0], sizes = [64, 432], strides = [1, 1]} : vector<64x470xbf16> to vector<64x432xbf16>
    %141 = vector.extract_strided_slice %139 {offsets = [0, 1], sizes = [64, 432], strides = [1, 1]} : vector<64x470xbf16> to vector<64x432xbf16>
    %142 = vector.extract_strided_slice %139 {offsets = [0, 2], sizes = [64, 432], strides = [1, 1]} : vector<64x470xbf16> to vector<64x432xbf16>
    %143 = tpu.concatenate %140, %141, %142 in 0 : vector<64x432xbf16>, vector<64x432xbf16>, vector<64x432xbf16> -> vector<192x432xbf16>
    %c0_67 = arith.constant 0 : index
    %c0_68 = arith.constant 0 : index
    %c0_69 = arith.constant 0 : index
    %144 = vector.load %arg12[%c0_67, %c0_68, %c0_69] : memref<3x32x192xbf16, #tpu.memory_space<vmem>>, vector<1x32x192xbf16>
    %145 = vector.shape_cast %144 : vector<1x32x192xbf16> to vector<32x192xbf16>
    %cst_70 = arith.constant dense<0.000000e+00> : vector<32x432xf32>
    %146 = tpu.matmul %145, %143, %cst_70 {dimension_numbers = #tpu.dot_dimension_numbers<[1], [0], [0], [1], [0, 0, 1, 1], [], []>} : vector<32x192xbf16>, vector<192x432xbf16>, vector<32x432xf32> -> vector<32x432xf32>
    %147 = vector.extract_strided_slice %139 {offsets = [0, 18], sizes = [64, 432], strides = [1, 1]} : vector<64x470xbf16> to vector<64x432xbf16>
    %148 = vector.extract_strided_slice %139 {offsets = [0, 19], sizes = [64, 432], strides = [1, 1]} : vector<64x470xbf16> to vector<64x432xbf16>
    %149 = vector.extract_strided_slice %139 {offsets = [0, 20], sizes = [64, 432], strides = [1, 1]} : vector<64x470xbf16> to vector<64x432xbf16>
    %150 = tpu.concatenate %147, %148, %149 in 0 : vector<64x432xbf16>, vector<64x432xbf16>, vector<64x432xbf16> -> vector<192x432xbf16>
    %c1_71 = arith.constant 1 : index
    %c0_72 = arith.constant 0 : index
    %c0_73 = arith.constant 0 : index
    %151 = vector.load %arg12[%c1_71, %c0_72, %c0_73] : memref<3x32x192xbf16, #tpu.memory_space<vmem>>, vector<1x32x192xbf16>
    %152 = vector.shape_cast %151 : vector<1x32x192xbf16> to vector<32x192xbf16>
    %cst_74 = arith.constant dense<0.000000e+00> : vector<32x432xf32>
    %153 = tpu.matmul %152, %150, %cst_74 {dimension_numbers = #tpu.dot_dimension_numbers<[1], [0], [0], [1], [0, 0, 1, 1], [], []>} : vector<32x192xbf16>, vector<192x432xbf16>, vector<32x432xf32> -> vector<32x432xf32>
    %154 = arith.addf %146, %153 : vector<32x432xf32>
    %155 = vector.extract_strided_slice %139 {offsets = [0, 36], sizes = [64, 432], strides = [1, 1]} : vector<64x470xbf16> to vector<64x432xbf16>
    %156 = vector.extract_strided_slice %139 {offsets = [0, 37], sizes = [64, 432], strides = [1, 1]} : vector<64x470xbf16> to vector<64x432xbf16>
    %157 = vector.extract_strided_slice %139 {offsets = [0, 38], sizes = [64, 432], strides = [1, 1]} : vector<64x470xbf16> to vector<64x432xbf16>
    %158 = tpu.concatenate %155, %156, %157 in 0 : vector<64x432xbf16>, vector<64x432xbf16>, vector<64x432xbf16> -> vector<192x432xbf16>
    %c2_75 = arith.constant 2 : index
    %c0_76 = arith.constant 0 : index
    %c0_77 = arith.constant 0 : index
    %159 = vector.load %arg12[%c2_75, %c0_76, %c0_77] : memref<3x32x192xbf16, #tpu.memory_space<vmem>>, vector<1x32x192xbf16>
    %160 = vector.shape_cast %159 : vector<1x32x192xbf16> to vector<32x192xbf16>
    %cst_78 = arith.constant dense<0.000000e+00> : vector<32x432xf32>
    %161 = tpu.matmul %160, %158, %cst_78 {dimension_numbers = #tpu.dot_dimension_numbers<[1], [0], [0], [1], [0, 0, 1, 1], [], []>} : vector<32x192xbf16>, vector<192x432xbf16>, vector<32x432xf32> -> vector<32x432xf32>
    %162 = arith.addf %154, %161 : vector<32x432xf32>
    %c0_79 = arith.constant 0 : index
    %c0_80 = arith.constant 0 : index
    %163 = vector.load %arg13[%c0_79, %c0_80] : memref<32x1xf32, #tpu.memory_space<vmem>>, vector<32x1xf32>
    %164 = vector.broadcast %163 : vector<32x1xf32> to vector<32x432xf32>
    %165 = arith.addf %162, %164 : vector<32x432xf32>
    %cst_81 = arith.constant 0.000000e+00 : f32
    %166 = vector.broadcast %cst_81 : f32 to vector<32x432xf32>
    %167 = arith.maximumf %165, %166 : vector<32x432xf32>
    %168 = vector.broadcast %3 : vector<1x432xf32> to vector<32x432xf32>
    %169 = arith.mulf %167, %168 : vector<32x432xf32>
    %170 = arith.truncf %169 : vector<32x432xf32> to vector<32x432xbf16>
    %cst_82 = arith.constant 0.000000e+00 : bf16
    %171 = vector.broadcast %cst_82 : bf16 to vector<32x19xbf16>
    %172 = tpu.concatenate %171, %170, %171 in 1 : vector<32x19xbf16>, vector<32x432xbf16>, vector<32x19xbf16> -> vector<32x470xbf16>
    %173 = tpu.concatenate %72, %172 in 0 : vector<32x470xbf16>, vector<32x470xbf16> -> vector<64x470xbf16>
    %174 = vector.extract_strided_slice %173 {offsets = [0, 0], sizes = [64, 432], strides = [1, 1]} : vector<64x470xbf16> to vector<64x432xbf16>
    %175 = vector.extract_strided_slice %173 {offsets = [0, 1], sizes = [64, 432], strides = [1, 1]} : vector<64x470xbf16> to vector<64x432xbf16>
    %176 = vector.extract_strided_slice %173 {offsets = [0, 2], sizes = [64, 432], strides = [1, 1]} : vector<64x470xbf16> to vector<64x432xbf16>
    %177 = tpu.concatenate %174, %175, %176 in 0 : vector<64x432xbf16>, vector<64x432xbf16>, vector<64x432xbf16> -> vector<192x432xbf16>
    %c0_83 = arith.constant 0 : index
    %c0_84 = arith.constant 0 : index
    %c0_85 = arith.constant 0 : index
    %178 = vector.load %arg14[%c0_83, %c0_84, %c0_85] : memref<3x32x192xbf16, #tpu.memory_space<vmem>>, vector<1x32x192xbf16>
    %179 = vector.shape_cast %178 : vector<1x32x192xbf16> to vector<32x192xbf16>
    %cst_86 = arith.constant dense<0.000000e+00> : vector<32x432xf32>
    %180 = tpu.matmul %179, %177, %cst_86 {dimension_numbers = #tpu.dot_dimension_numbers<[1], [0], [0], [1], [0, 0, 1, 1], [], []>} : vector<32x192xbf16>, vector<192x432xbf16>, vector<32x432xf32> -> vector<32x432xf32>
    %181 = vector.extract_strided_slice %173 {offsets = [0, 18], sizes = [64, 432], strides = [1, 1]} : vector<64x470xbf16> to vector<64x432xbf16>
    %182 = vector.extract_strided_slice %173 {offsets = [0, 19], sizes = [64, 432], strides = [1, 1]} : vector<64x470xbf16> to vector<64x432xbf16>
    %183 = vector.extract_strided_slice %173 {offsets = [0, 20], sizes = [64, 432], strides = [1, 1]} : vector<64x470xbf16> to vector<64x432xbf16>
    %184 = tpu.concatenate %181, %182, %183 in 0 : vector<64x432xbf16>, vector<64x432xbf16>, vector<64x432xbf16> -> vector<192x432xbf16>
    %c1_87 = arith.constant 1 : index
    %c0_88 = arith.constant 0 : index
    %c0_89 = arith.constant 0 : index
    %185 = vector.load %arg14[%c1_87, %c0_88, %c0_89] : memref<3x32x192xbf16, #tpu.memory_space<vmem>>, vector<1x32x192xbf16>
    %186 = vector.shape_cast %185 : vector<1x32x192xbf16> to vector<32x192xbf16>
    %cst_90 = arith.constant dense<0.000000e+00> : vector<32x432xf32>
    %187 = tpu.matmul %186, %184, %cst_90 {dimension_numbers = #tpu.dot_dimension_numbers<[1], [0], [0], [1], [0, 0, 1, 1], [], []>} : vector<32x192xbf16>, vector<192x432xbf16>, vector<32x432xf32> -> vector<32x432xf32>
    %188 = arith.addf %180, %187 : vector<32x432xf32>
    %189 = vector.extract_strided_slice %173 {offsets = [0, 36], sizes = [64, 432], strides = [1, 1]} : vector<64x470xbf16> to vector<64x432xbf16>
    %190 = vector.extract_strided_slice %173 {offsets = [0, 37], sizes = [64, 432], strides = [1, 1]} : vector<64x470xbf16> to vector<64x432xbf16>
    %191 = vector.extract_strided_slice %173 {offsets = [0, 38], sizes = [64, 432], strides = [1, 1]} : vector<64x470xbf16> to vector<64x432xbf16>
    %192 = tpu.concatenate %189, %190, %191 in 0 : vector<64x432xbf16>, vector<64x432xbf16>, vector<64x432xbf16> -> vector<192x432xbf16>
    %c2_91 = arith.constant 2 : index
    %c0_92 = arith.constant 0 : index
    %c0_93 = arith.constant 0 : index
    %193 = vector.load %arg14[%c2_91, %c0_92, %c0_93] : memref<3x32x192xbf16, #tpu.memory_space<vmem>>, vector<1x32x192xbf16>
    %194 = vector.shape_cast %193 : vector<1x32x192xbf16> to vector<32x192xbf16>
    %cst_94 = arith.constant dense<0.000000e+00> : vector<32x432xf32>
    %195 = tpu.matmul %194, %192, %cst_94 {dimension_numbers = #tpu.dot_dimension_numbers<[1], [0], [0], [1], [0, 0, 1, 1], [], []>} : vector<32x192xbf16>, vector<192x432xbf16>, vector<32x432xf32> -> vector<32x432xf32>
    %196 = arith.addf %188, %195 : vector<32x432xf32>
    %c0_95 = arith.constant 0 : index
    %c0_96 = arith.constant 0 : index
    %197 = vector.load %arg15[%c0_95, %c0_96] : memref<32x1xf32, #tpu.memory_space<vmem>>, vector<32x1xf32>
    %198 = vector.broadcast %197 : vector<32x1xf32> to vector<32x432xf32>
    %199 = arith.addf %196, %198 : vector<32x432xf32>
    %cst_97 = arith.constant 0.000000e+00 : f32
    %200 = vector.broadcast %cst_97 : f32 to vector<32x432xf32>
    %201 = arith.maximumf %199, %200 : vector<32x432xf32>
    %202 = vector.broadcast %3 : vector<1x432xf32> to vector<32x432xf32>
    %203 = arith.mulf %201, %202 : vector<32x432xf32>
    %204 = arith.truncf %203 : vector<32x432xf32> to vector<32x432xbf16>
    %cst_98 = arith.constant 0.000000e+00 : bf16
    %205 = vector.broadcast %cst_98 : bf16 to vector<32x19xbf16>
    %206 = tpu.concatenate %205, %204, %205 in 1 : vector<32x19xbf16>, vector<32x432xbf16>, vector<32x19xbf16> -> vector<32x470xbf16>
    %207 = tpu.concatenate %39, %206 in 0 : vector<32x470xbf16>, vector<32x470xbf16> -> vector<64x470xbf16>
    %208 = vector.extract_strided_slice %207 {offsets = [0, 0], sizes = [64, 432], strides = [1, 1]} : vector<64x470xbf16> to vector<64x432xbf16>
    %209 = vector.extract_strided_slice %207 {offsets = [0, 1], sizes = [64, 432], strides = [1, 1]} : vector<64x470xbf16> to vector<64x432xbf16>
    %210 = vector.extract_strided_slice %207 {offsets = [0, 2], sizes = [64, 432], strides = [1, 1]} : vector<64x470xbf16> to vector<64x432xbf16>
    %211 = tpu.concatenate %208, %209, %210 in 0 : vector<64x432xbf16>, vector<64x432xbf16>, vector<64x432xbf16> -> vector<192x432xbf16>
    %c0_99 = arith.constant 0 : index
    %c0_100 = arith.constant 0 : index
    %c0_101 = arith.constant 0 : index
    %212 = vector.load %arg16[%c0_99, %c0_100, %c0_101] : memref<3x6x192xbf16, #tpu.memory_space<vmem>>, vector<1x6x192xbf16>
    %213 = vector.shape_cast %212 : vector<1x6x192xbf16> to vector<6x192xbf16>
    %cst_102 = arith.constant dense<0.000000e+00> : vector<6x432xf32>
    %214 = tpu.matmul %213, %211, %cst_102 {dimension_numbers = #tpu.dot_dimension_numbers<[1], [0], [0], [1], [0, 0, 1, 1], [], []>} : vector<6x192xbf16>, vector<192x432xbf16>, vector<6x432xf32> -> vector<6x432xf32>
    %215 = vector.extract_strided_slice %207 {offsets = [0, 18], sizes = [64, 432], strides = [1, 1]} : vector<64x470xbf16> to vector<64x432xbf16>
    %216 = vector.extract_strided_slice %207 {offsets = [0, 19], sizes = [64, 432], strides = [1, 1]} : vector<64x470xbf16> to vector<64x432xbf16>
    %217 = vector.extract_strided_slice %207 {offsets = [0, 20], sizes = [64, 432], strides = [1, 1]} : vector<64x470xbf16> to vector<64x432xbf16>
    %218 = tpu.concatenate %215, %216, %217 in 0 : vector<64x432xbf16>, vector<64x432xbf16>, vector<64x432xbf16> -> vector<192x432xbf16>
    %c1_103 = arith.constant 1 : index
    %c0_104 = arith.constant 0 : index
    %c0_105 = arith.constant 0 : index
    %219 = vector.load %arg16[%c1_103, %c0_104, %c0_105] : memref<3x6x192xbf16, #tpu.memory_space<vmem>>, vector<1x6x192xbf16>
    %220 = vector.shape_cast %219 : vector<1x6x192xbf16> to vector<6x192xbf16>
    %cst_106 = arith.constant dense<0.000000e+00> : vector<6x432xf32>
    %221 = tpu.matmul %220, %218, %cst_106 {dimension_numbers = #tpu.dot_dimension_numbers<[1], [0], [0], [1], [0, 0, 1, 1], [], []>} : vector<6x192xbf16>, vector<192x432xbf16>, vector<6x432xf32> -> vector<6x432xf32>
    %222 = arith.addf %214, %221 : vector<6x432xf32>
    %223 = vector.extract_strided_slice %207 {offsets = [0, 36], sizes = [64, 432], strides = [1, 1]} : vector<64x470xbf16> to vector<64x432xbf16>
    %224 = vector.extract_strided_slice %207 {offsets = [0, 37], sizes = [64, 432], strides = [1, 1]} : vector<64x470xbf16> to vector<64x432xbf16>
    %225 = vector.extract_strided_slice %207 {offsets = [0, 38], sizes = [64, 432], strides = [1, 1]} : vector<64x470xbf16> to vector<64x432xbf16>
    %226 = tpu.concatenate %223, %224, %225 in 0 : vector<64x432xbf16>, vector<64x432xbf16>, vector<64x432xbf16> -> vector<192x432xbf16>
    %c2_107 = arith.constant 2 : index
    %c0_108 = arith.constant 0 : index
    %c0_109 = arith.constant 0 : index
    %227 = vector.load %arg16[%c2_107, %c0_108, %c0_109] : memref<3x6x192xbf16, #tpu.memory_space<vmem>>, vector<1x6x192xbf16>
    %228 = vector.shape_cast %227 : vector<1x6x192xbf16> to vector<6x192xbf16>
    %cst_110 = arith.constant dense<0.000000e+00> : vector<6x432xf32>
    %229 = tpu.matmul %228, %226, %cst_110 {dimension_numbers = #tpu.dot_dimension_numbers<[1], [0], [0], [1], [0, 0, 1, 1], [], []>} : vector<6x192xbf16>, vector<192x432xbf16>, vector<6x432xf32> -> vector<6x432xf32>
    %230 = arith.addf %222, %229 : vector<6x432xf32>
    %c0_111 = arith.constant 0 : index
    %c0_112 = arith.constant 0 : index
    %231 = vector.load %arg17[%c0_111, %c0_112] : memref<6x1xf32, #tpu.memory_space<vmem>>, vector<6x1xf32>
    %232 = vector.broadcast %231 : vector<6x1xf32> to vector<6x432xf32>
    %233 = arith.addf %230, %232 : vector<6x432xf32>
    %234 = vector.extract_strided_slice %1 {offsets = [0, 19], sizes = [3, 432], strides = [1, 1]} : vector<3x470xf32> to vector<3x432xf32>
    %235 = vector.extract_strided_slice %233 {offsets = [0, 0], sizes = [3, 432], strides = [1, 1]} : vector<6x432xf32> to vector<3x432xf32>
    %236 = math.tanh %235 : vector<3x432xf32>
    %237 = vector.extract_strided_slice %233 {offsets = [3, 0], sizes = [3, 432], strides = [1, 1]} : vector<6x432xf32> to vector<3x432xf32>
    %cst_113 = arith.constant 0.000000e+00 : f32
    %238 = vector.broadcast %cst_113 : f32 to vector<3x432xf32>
    %239 = arith.maximumf %237, %238 : vector<3x432xf32>
    %240 = arith.addf %236, %239 : vector<3x432xf32>
    %cst_114 = arith.constant 0.000000e+00 : f32
    %241 = vector.broadcast %cst_114 : f32 to vector<3x432xf32>
    %242 = arith.subf %241, %240 : vector<3x432xf32>
    %243 = arith.mulf %234, %234 : vector<3x432xf32>
    %244 = arith.mulf %242, %243 : vector<3x432xf32>
    %cst_115 = arith.constant 1.000000e+00 : f32
    %245 = vector.broadcast %cst_115 : f32 to vector<3x432xf32>
    %246 = arith.addf %245, %236 : vector<3x432xf32>
    %247 = arith.mulf %246, %234 : vector<3x432xf32>
    %248 = arith.addf %244, %247 : vector<3x432xf32>
    %c0_116 = arith.constant 0 : index
    %c0_117 = arith.constant 0 : index
    %c0_118 = arith.constant 0 : index
    %c0_119 = arith.constant 0 : index
    %249 = vector.load %arg18[%c0_116, %c0_117, %c0_118, %c0_119] : memref<1x1x3x432xf32, #tpu.memory_space<vmem>>, vector<1x1x3x432xf32>
    %250 = vector.shape_cast %249 : vector<1x1x3x432xf32> to vector<3x432xf32>
    %251 = vector.shape_cast %248 : vector<3x432xf32> to vector<1x1x3x432xf32>
    tpu.vector_store %arg18[%c0_116, %c0_117, %c0_118, %c0_119], %251 {strides = array<i32>} : memref<1x1x3x432xf32, #tpu.memory_space<vmem>>, vector<1x1x3x432xf32>,
    %c0_120 = arith.constant 0 : index
    %c0_121 = arith.constant 0 : index
    %c0_122 = arith.constant 0 : index
    %c0_123 = arith.constant 0 : index
    %252 = vector.load %arg19[%c0_120, %c0_121, %c0_122, %c0_123] : memref<1x1x3x432xf32, #tpu.memory_space<vmem>>, vector<1x1x3x432xf32>
    %253 = vector.shape_cast %252 : vector<1x1x3x432xf32> to vector<3x432xf32>
    %254 = vector.shape_cast %236 : vector<3x432xf32> to vector<1x1x3x432xf32>
    tpu.vector_store %arg19[%c0_120, %c0_121, %c0_122, %c0_123], %254 {strides = array<i32>} : memref<1x1x3x432xf32, #tpu.memory_space<vmem>>, vector<1x1x3x432xf32>,
    %c0_124 = arith.constant 0 : index
    %c0_125 = arith.constant 0 : index
    %c0_126 = arith.constant 0 : index
    %c0_127 = arith.constant 0 : index
    %255 = vector.load %arg20[%c0_124, %c0_125, %c0_126, %c0_127] : memref<1x1x3x432xf32, #tpu.memory_space<vmem>>, vector<1x1x3x432xf32>
    %256 = vector.shape_cast %255 : vector<1x1x3x432xf32> to vector<3x432xf32>
    %257 = vector.shape_cast %239 : vector<3x432xf32> to vector<1x1x3x432xf32>
    tpu.vector_store %arg20[%c0_124, %c0_125, %c0_126, %c0_127], %257 {strides = array<i32>} : memref<1x1x3x432xf32, #tpu.memory_space<vmem>>, vector<1x1x3x432xf32>,
    return
  }
  func.func @transform_0(%arg0: i32, %arg1: i32) -> (i32, i32, i32, i32) {
    %c0_i32 = arith.constant 0 : i32
    %c0_i32_0 = arith.constant 0 : i32
    %c0_i32_1 = arith.constant 0 : i32
    return %arg0, %arg1, %c0_i32, %c0_i32_0 : i32, i32, i32, i32
  }
  func.func @transform_1(%arg0: i32, %arg1: i32) -> (i32, i32, i32) {
    %c0_i32 = arith.constant 0 : i32
    %c0_i32_0 = arith.constant 0 : i32
    %c0_i32_1 = arith.constant 0 : i32
    return %arg1, %c0_i32, %c0_i32_0 : i32, i32, i32
  }
  func.func @transform_2(%arg0: i32, %arg1: i32) -> (i32, i32, i32) {
    %c0_i32 = arith.constant 0 : i32
    %c0_i32_0 = arith.constant 0 : i32
    %c0_i32_1 = arith.constant 0 : i32
    %c0_i32_2 = arith.constant 0 : i32
    return %c0_i32, %c0_i32_0, %c0_i32_1 : i32, i32, i32
  }
  func.func @transform_3(%arg0: i32, %arg1: i32) -> (i32, i32) {
    %c0_i32 = arith.constant 0 : i32
    %c0_i32_0 = arith.constant 0 : i32
    %c0_i32_1 = arith.constant 0 : i32
    return %c0_i32, %c0_i32_0 : i32, i32
  }
  func.func @transform_4(%arg0: i32, %arg1: i32) -> (i32, i32, i32) {
    %c0_i32 = arith.constant 0 : i32
    %c0_i32_0 = arith.constant 0 : i32
    %c0_i32_1 = arith.constant 0 : i32
    %c0_i32_2 = arith.constant 0 : i32
    return %c0_i32, %c0_i32_0, %c0_i32_1 : i32, i32, i32
  }
  func.func @transform_5(%arg0: i32, %arg1: i32) -> (i32, i32) {
    %c0_i32 = arith.constant 0 : i32
    %c0_i32_0 = arith.constant 0 : i32
    %c0_i32_1 = arith.constant 0 : i32
    return %c0_i32, %c0_i32_0 : i32, i32
  }
  func.func @transform_6(%arg0: i32, %arg1: i32) -> (i32, i32, i32) {
    %c0_i32 = arith.constant 0 : i32
    %c0_i32_0 = arith.constant 0 : i32
    %c0_i32_1 = arith.constant 0 : i32
    %c0_i32_2 = arith.constant 0 : i32
    return %c0_i32, %c0_i32_0, %c0_i32_1 : i32, i32, i32
  }
  func.func @transform_7(%arg0: i32, %arg1: i32) -> (i32, i32) {
    %c0_i32 = arith.constant 0 : i32
    %c0_i32_0 = arith.constant 0 : i32
    %c0_i32_1 = arith.constant 0 : i32
    return %c0_i32, %c0_i32_0 : i32, i32
  }
  func.func @transform_8(%arg0: i32, %arg1: i32) -> (i32, i32, i32) {
    %c0_i32 = arith.constant 0 : i32
    %c0_i32_0 = arith.constant 0 : i32
    %c0_i32_1 = arith.constant 0 : i32
    %c0_i32_2 = arith.constant 0 : i32
    return %c0_i32, %c0_i32_0, %c0_i32_1 : i32, i32, i32
  }
  func.func @transform_9(%arg0: i32, %arg1: i32) -> (i32, i32) {
    %c0_i32 = arith.constant 0 : i32
    %c0_i32_0 = arith.constant 0 : i32
    %c0_i32_1 = arith.constant 0 : i32
    return %c0_i32, %c0_i32_0 : i32, i32
  }
  func.func @transform_10(%arg0: i32, %arg1: i32) -> (i32, i32, i32) {
    %c0_i32 = arith.constant 0 : i32
    %c0_i32_0 = arith.constant 0 : i32
    %c0_i32_1 = arith.constant 0 : i32
    %c0_i32_2 = arith.constant 0 : i32
    return %c0_i32, %c0_i32_0, %c0_i32_1 : i32, i32, i32
  }
  func.func @transform_11(%arg0: i32, %arg1: i32) -> (i32, i32) {
    %c0_i32 = arith.constant 0 : i32
    %c0_i32_0 = arith.constant 0 : i32
    %c0_i32_1 = arith.constant 0 : i32
    return %c0_i32, %c0_i32_0 : i32, i32
  }
  func.func @transform_12(%arg0: i32, %arg1: i32) -> (i32, i32, i32) {
    %c0_i32 = arith.constant 0 : i32
    %c0_i32_0 = arith.constant 0 : i32
    %c0_i32_1 = arith.constant 0 : i32
    %c0_i32_2 = arith.constant 0 : i32
    return %c0_i32, %c0_i32_0, %c0_i32_1 : i32, i32, i32
  }
  func.func @transform_13(%arg0: i32, %arg1: i32) -> (i32, i32) {
    %c0_i32 = arith.constant 0 : i32
    %c0_i32_0 = arith.constant 0 : i32
    %c0_i32_1 = arith.constant 0 : i32
    return %c0_i32, %c0_i32_0 : i32, i32
  }
  func.func @transform_14(%arg0: i32, %arg1: i32) -> (i32, i32, i32) {
    %c0_i32 = arith.constant 0 : i32
    %c0_i32_0 = arith.constant 0 : i32
    %c0_i32_1 = arith.constant 0 : i32
    %c0_i32_2 = arith.constant 0 : i32
    return %c0_i32, %c0_i32_0, %c0_i32_1 : i32, i32, i32
  }
  func.func @transform_15(%arg0: i32, %arg1: i32) -> (i32, i32) {
    %c0_i32 = arith.constant 0 : i32
    %c0_i32_0 = arith.constant 0 : i32
    %c0_i32_1 = arith.constant 0 : i32
    return %c0_i32, %c0_i32_0 : i32, i32
  }
  func.func @transform_16(%arg0: i32, %arg1: i32) -> (i32, i32, i32, i32) {
    %c0_i32 = arith.constant 0 : i32
    %c0_i32_0 = arith.constant 0 : i32
    %c0_i32_1 = arith.constant 0 : i32
    return %arg0, %arg1, %c0_i32, %c0_i32_0 : i32, i32, i32, i32
  }
  func.func @transform_17(%arg0: i32, %arg1: i32) -> (i32, i32, i32, i32) {
    %c0_i32 = arith.constant 0 : i32
    %c0_i32_0 = arith.constant 0 : i32
    %c0_i32_1 = arith.constant 0 : i32
    return %arg0, %arg1, %c0_i32, %c0_i32_0 : i32, i32, i32, i32
  }
  func.func @transform_18(%arg0: i32, %arg1: i32) -> (i32, i32, i32, i32) {
    %c0_i32 = arith.constant 0 : i32
    %c0_i32_0 = arith.constant 0 : i32
    %c0_i32_1 = arith.constant 0 : i32
    return %arg0, %arg1, %c0_i32, %c0_i32_0 : i32, i32, i32, i32
  }
}

</mosaic_0001>

<llo_original>
// kernel: enhance_net_forward.1
$region0: #{enhance_net_forward.1}
  #allocation0 [shape = 'u32[]', space=smem, size = 0x4, offset = 0x4, fixed_abs, tag = 'smem constant byte address 0x4 - core index']
  #allocation1 [shape = 'u32[72,128]{1,0:T(1,128)}', space=vmem, size = 0x9000, scoped, tag = 'internal scratch']
  %s0 = inlined_call_operand.vmem [shape: f32[2,2,3,470], index: 0, kind: input, shape index: {}]
  %s1 = inlined_call_operand.vmem [shape: f32[2,1,432], index: 1, kind: input, shape index: {}]
  %s2 = inlined_call_operand.vmem [shape: bf16[3,32,9], index: 2, kind: input, shape index: {}]
  %s3 = inlined_call_operand.vmem [shape: f32[32,1], index: 3, kind: input, shape index: {}]
  %s4 = inlined_call_operand.vmem [shape: bf16[3,32,96], index: 4, kind: input, shape index: {}]
  %s5 = inlined_call_operand.vmem [shape: f32[32,1], index: 5, kind: input, shape index: {}]
  %s6 = inlined_call_operand.vmem [shape: bf16[3,32,96], index: 6, kind: input, shape index: {}]
  %s7 = inlined_call_operand.vmem [shape: f32[32,1], index: 7, kind: input, shape index: {}]
  %s8 = inlined_call_operand.vmem [shape: bf16[3,32,96], index: 8, kind: input, shape index: {}]
  %s9 = inlined_call_operand.vmem [shape: f32[32,1], index: 9, kind: input, shape index: {}]
  %s10 = inlined_call_operand.vmem [shape: bf16[3,32,192], index: 10, kind: input, shape index: {}]
  %s11 = inlined_call_operand.vmem [shape: f32[32,1], index: 11, kind: input, shape index: {}]
  %s12 = inlined_call_operand.vmem [shape: bf16[3,32,192], index: 12, kind: input, shape index: {}]
  %s13 = inlined_call_operand.vmem [shape: f32[32,1], index: 13, kind: input, shape index: {}]
  %s14 = inlined_call_operand.vmem [shape: bf16[3,6,192], index: 14, kind: input, shape index: {}]
  %s15 = inlined_call_operand.vmem [shape: f32[6,1], index: 15, kind: input, shape index: {}]
  %s16 = inlined_call_operand.vmem [shape: f32[2,2,3,432], index: 16, kind: output, shape index: {0}]
  %s17 = inlined_call_operand.vmem [shape: f32[2,2,3,432], index: 17, kind: output, shape index: {1}]
  %s18 = inlined_call_operand.vmem [shape: f32[2,2,3,432], index: 18, kind: output, shape index: {2}]
  %19 = xla_tuple %s16, %s17, %s18
  %s20 = sld [smem:[#allocation0]]
  $region113: #{enhance_net_forward.1} parent=0
    _
  %s22 = ssub.s32 1, %s20
  %s23 = scalar_select 0, %s22, %s20
  loop: start=0, step=1, limit=6
  $region2: #{enhance_net_forward.1} parent=0 // loop_pre_header
    _
  $region3: #{enhance_net_forward.1} parent=0 // loop_header
    %s25 = sphi 0, %s29
    %p26 = scmp.ge.s32.totalorder %s25, 6
    %s32 = sphi 0, %s44
    %s33 = sphi 0, %s40
    %s34 = sphi 0, %s32
    %s35 = sphi 0, %s33
    %s36 = sphi 0, %s34
    %s37 = sphi 0, %s35
    %s49 = sphi 0, %s51
    %s52 = sphi 0, %s49
    %s53 = sphi 0, %s52
    %s69 = sphi 0, %s53
    %s75 = sphi 0, %s77
    %s78 = sphi 0, %s75
    %s79 = sphi 0, %s78
    %s95 = sphi 0, %s79
    %s99 = sphi 0, %s99
    %s101 = sphi 0, %s99
    %s102 = sphi 0, %s101
    %s116 = sphi 0, %s102
    %s120 = sphi 0, %s120
    %s122 = sphi 0, %s120
    %s123 = sphi 0, %s122
    %s137 = sphi 0, %s123
    %s141 = sphi 0, %s141
    %s143 = sphi 0, %s141
    %s144 = sphi 0, %s143
    %s158 = sphi 0, %s144
    %s162 = sphi 0, %s162
    %s164 = sphi 0, %s162
    %s165 = sphi 0, %s164
    %s179 = sphi 0, %s165
    %s183 = sphi 0, %s183
    %s185 = sphi 0, %s183
    %s186 = sphi 0, %s185
    %s200 = sphi 0, %s186
    %s204 = sphi 0, %s204
    %s206 = sphi 0, %s204
    %s207 = sphi 0, %s206
    %s221 = sphi 0, %s207
    %s225 = sphi 0, %s225
    %s227 = sphi 0, %s225
    %s228 = sphi 0, %s227
    %s242 = sphi 0, %s228
    %s246 = sphi 0, %s246
    %s248 = sphi 0, %s246
    %s249 = sphi 0, %s248
    %s263 = sphi 0, %s249
    %s267 = sphi 0, %s267
    %s269 = sphi 0, %s267
    %s270 = sphi 0, %s269
    %s284 = sphi 0, %s270
    %s288 = sphi 0, %s288
    %s290 = sphi 0, %s288
    %s291 = sphi 0, %s290
    %s305 = sphi 0, %s291
    %s309 = sphi 0, %s309
    %s311 = sphi 0, %s309
    %s312 = sphi 0, %s311
    %s326 = sphi 0, %s312
    %s330 = sphi 0, %s330
    %s332 = sphi 0, %s330
    %s333 = sphi 0, %s332
    %s347 = sphi 0, %s333
    %s351 = sphi 0, %s351
    %s353 = sphi 0, %s351
    %s354 = sphi 0, %s353
    %s368 = sphi 0, %s354
    %s372 = sphi 0, %s372
    %s374 = sphi 0, %s372
    %s375 = sphi 0, %s374
    %s389 = sphi 0, %s375
    %s397 = sphi 0, %s399
    %s400 = sphi 0, %s397
    %s401 = sphi 0, %s400
    %s417 = sphi 0, %s401
    %s425 = sphi 0, %s427
    %s428 = sphi 0, %s425
    %s429 = sphi 0, %s428
    %s445 = sphi 0, %s429
    %s453 = sphi 0, %s455
    %s456 = sphi 0, %s453
    %s457 = sphi 0, %s456
    %s473 = sphi 0, %s457
  $region4: #{enhance_net_forward.1} parent=0 // loop_header_branch
    %28 = sbr.rel (%p26) target = $region8
  $region5: #{enhance_net_forward.1} parent=0 // loop_body
    %s30 = ssub.s32 %s25, 1
    %s31 = ssub.s32 %s25, 2
    %s38 = sadd.s32 1, %s33
    %p39 = scmp.ge.s32.totalorder %s38, 2
    %s40 = scalar_select %p39, 0, %s38
    %s41 = sadd.s32 1, %s32
    %s42 = scalar_select %p39, %s41, %s32
    %p43 = scmp.ge.s32.totalorder %s42, 2
    %s44 = scalar_select %p43, 0, %s42
    %s45 = ssub.s32 %s32, %s44
    %s46 = ssub.s32 %s33, %s40
    %s47 = sor.u32 %s45, %s46
    %p48 = scmp.eq.s32.totalorder %s47, 0
    %s50 = sadd.s32 %s49, 1
    %s51 = scalar_select %p48, %s49, %s50
    %p54 = pneg %p48
    %p55 = scmp.eq.s32.totalorder %s25, 3
    %p56 = por %p54, %p55
    %p57 = scmp.ne.s32.totalorder %s49, %s52
    %p58 = scmp.eq.s32.totalorder %s25, 0
    %p59 = por %p57, %p58
    %p60 = scmp.ne.s32.totalorder %s49, %s52
    %p61 = scmp.eq.s32.totalorder %s30, 3
    %p62 = por %p60, %p61
    %p63 = scmp.ne.s32.totalorder %s52, %s53
    %p64 = scmp.eq.s32.totalorder %s30, 0
    %p65 = por %p63, %p64
    %p66 = scmp.ne.s32.totalorder %s52, %s53
    %p67 = scmp.eq.s32.totalorder %s31, 3
    %p68 = por %p66, %p67
    %p70 = scmp.ne.s32.totalorder %s53, %s69
    %p71 = scmp.eq.s32.totalorder %s31, 0
    %p72 = por %p70, %p71
    %s73 = ssub.s32 %s33, %s40
    %p74 = scmp.eq.s32.totalorder %s73, 0
    %s76 = sadd.s32 %s75, 1
    %s77 = scalar_select %p74, %s75, %s76
    %p80 = pneg %p74
    %p81 = scmp.eq.s32.totalorder %s25, 3
    %p82 = por %p80, %p81
    %p83 = scmp.ne.s32.totalorder %s75, %s78
    %p84 = scmp.eq.s32.totalorder %s25, 0
    %p85 = por %p83, %p84
    %p86 = scmp.ne.s32.totalorder %s75, %s78
    %p87 = scmp.eq.s32.totalorder %s30, 3
    %p88 = por %p86, %p87
    %p89 = scmp.ne.s32.totalorder %s78, %s79
    %p90 = scmp.eq.s32.totalorder %s30, 0
    %p91 = por %p89, %p90
    %p92 = scmp.ne.s32.totalorder %s78, %s79
    %p93 = scmp.eq.s32.totalorder %s31, 3
    %p94 = por %p92, %p93
    %p96 = scmp.ne.s32.totalorder %s79, %s95
    %p97 = scmp.eq.s32.totalorder %s31, 0
    %p98 = por %p96, %p97
    %s100 = sadd.s32 %s99, 1
    %p103 = scmp.eq.s32.totalorder %s25, 3
    %p104 = scmp.ne.s32.totalorder %s99, %s101
    %p105 = scmp.eq.s32.totalorder %s25, 0
    %p106 = por %p104, %p105
    %p107 = scmp.ne.s32.totalorder %s99, %s101
    %p108 = scmp.eq.s32.totalorder %s30, 3
    %p109 = por %p107, %p108
    %p110 = scmp.ne.s32.totalorder %s101, %s102
    %p111 = scmp.eq.s32.totalorder %s30, 0
    %p112 = por %p110, %p111
    %p113 = scmp.ne.s32.totalorder %s101, %s102
    %p114 = scmp.eq.s32.totalorder %s31, 3
    %p115 = por %p113, %p114
    %p117 = scmp.ne.s32.totalorder %s102, %s116
    %p118 = scmp.eq.s32.totalorder %s31, 0
    %p119 = por %p117, %p118
    %s121 = sadd.s32 %s120, 1
    %p124 = scmp.eq.s32.totalorder %s25, 3
    %p125 = scmp.ne.s32.totalorder %s120, %s122
    %p126 = scmp.eq.s32.totalorder %s25, 0
    %p127 = por %p125, %p126
    %p128 = scmp.ne.s32.totalorder %s120, %s122
    %p129 = scmp.eq.s32.totalorder %s30, 3
    %p130 = por %p128, %p129
    %p131 = scmp.ne.s32.totalorder %s122, %s123
    %p132 = scmp.eq.s32.totalorder %s30, 0
    %p133 = por %p131, %p132
    %p134 = scmp.ne.s32.totalorder %s122, %s123
    %p135 = scmp.eq.s32.totalorder %s31, 3
    %p136 = por %p134, %p135
    %p138 = scmp.ne.s32.totalorder %s123, %s137
    %p139 = scmp.eq.s32.totalorder %s31, 0
    %p140 = por %p138, %p139
    %s142 = sadd.s32 %s141, 1
    %p145 = scmp.eq.s32.totalorder %s25, 3
    %p146 = scmp.ne.s32.totalorder %s141, %s143
    %p147 = scmp.eq.s32.totalorder %s25, 0
    %p148 = por %p146, %p147
    %p149 = scmp.ne.s32.totalorder %s141, %s143
    %p150 = scmp.eq.s32.totalorder %s30, 3
    %p151 = por %p149, %p150
    %p152 = scmp.ne.s32.totalorder %s143, %s144
    %p153 = scmp.eq.s32.totalorder %s30, 0
    %p154 = por %p152, %p153
    %p155 = scmp.ne.s32.totalorder %s143, %s144
    %p156 = scmp.eq.s32.totalorder %s31, 3
    %p157 = por %p155, %p156
    %p159 = scmp.ne.s32.totalorder %s144, %s158
    %p160 = scmp.eq.s32.totalorder %s31, 0
    %p161 = por %p159, %p160
    %s163 = sadd.s32 %s162, 1
    %p166 = scmp.eq.s32.totalorder %s25, 3
    %p167 = scmp.ne.s32.totalorder %s162, %s164
    %p168 = scmp.eq.s32.totalorder %s25, 0
    %p169 = por %p167, %p168
    %p170 = scmp.ne.s32.totalorder %s162, %s164
    %p171 = scmp.eq.s32.totalorder %s30, 3
    %p172 = por %p170, %p171
    %p173 = scmp.ne.s32.totalorder %s164, %s165
    %p174 = scmp.eq.s32.totalorder %s30, 0
    %p175 = por %p173, %p174
    %p176 = scmp.ne.s32.totalorder %s164, %s165
    %p177 = scmp.eq.s32.totalorder %s31, 3
    %p178 = por %p176, %p177
    %p180 = scmp.ne.s32.totalorder %s165, %s179
    %p181 = scmp.eq.s32.totalorder %s31, 0
    %p182 = por %p180, %p181
    %s184 = sadd.s32 %s183, 1
    %p187 = scmp.eq.s32.totalorder %s25, 3
    %p188 = scmp.ne.s32.totalorder %s183, %s185
    %p189 = scmp.eq.s32.totalorder %s25, 0
    %p190 = por %p188, %p189
    %p191 = scmp.ne.s32.totalorder %s183, %s185
    %p192 = scmp.eq.s32.totalorder %s30, 3
    %p193 = por %p191, %p192
    %p194 = scmp.ne.s32.totalorder %s185, %s186
    %p195 = scmp.eq.s32.totalorder %s30, 0
    %p196 = por %p194, %p195
    %p197 = scmp.ne.s32.totalorder %s185, %s186
    %p198 = scmp.eq.s32.totalorder %s31, 3
    %p199 = por %p197, %p198
    %p201 = scmp.ne.s32.totalorder %s186, %s200
    %p202 = scmp.eq.s32.totalorder %s31, 0
    %p203 = por %p201, %p202
    %s205 = sadd.s32 %s204, 1
    %p208 = scmp.eq.s32.totalorder %s25, 3
    %p209 = scmp.ne.s32.totalorder %s204, %s206
    %p210 = scmp.eq.s32.totalorder %s25, 0
    %p211 = por %p209, %p210
    %p212 = scmp.ne.s32.totalorder %s204, %s206
    %p213 = scmp.eq.s32.totalorder %s30, 3
    %p214 = por %p212, %p213
    %p215 = scmp.ne.s32.totalorder %s206, %s207
    %p216 = scmp.eq.s32.totalorder %s30, 0
    %p217 = por %p215, %p216
    %p218 = scmp.ne.s32.totalorder %s206, %s207
    %p219 = scmp.eq.s32.totalorder %s31, 3
    %p220 = por %p218, %p219
    %p222 = scmp.ne.s32.totalorder %s207, %s221
    %p223 = scmp.eq.s32.totalorder %s31, 0
    %p224 = por %p222, %p223
    %s226 = sadd.s32 %s225, 1
    %p229 = scmp.eq.s32.totalorder %s25, 3
    %p230 = scmp.ne.s32.totalorder %s225, %s227
    %p231 = scmp.eq.s32.totalorder %s25, 0
    %p232 = por %p230, %p231
    %p233 = scmp.ne.s32.totalorder %s225, %s227
    %p234 = scmp.eq.s32.totalorder %s30, 3
    %p235 = por %p233, %p234
    %p236 = scmp.ne.s32.totalorder %s227, %s228
    %p237 = scmp.eq.s32.totalorder %s30, 0
    %p238 = por %p236, %p237
    %p239 = scmp.ne.s32.totalorder %s227, %s228
    %p240 = scmp.eq.s32.totalorder %s31, 3
    %p241 = por %p239, %p240
    %p243 = scmp.ne.s32.totalorder %s228, %s242
    %p244 = scmp.eq.s32.totalorder %s31, 0
    %p245 = por %p243, %p244
    %s247 = sadd.s32 %s246, 1
    %p250 = scmp.eq.s32.totalorder %s25, 3
    %p251 = scmp.ne.s32.totalorder %s246, %s248
    %p252 = scmp.eq.s32.totalorder %s25, 0
    %p253 = por %p251, %p252
    %p254 = scmp.ne.s32.totalorder %s246, %s248
    %p255 = scmp.eq.s32.totalorder %s30, 3
    %p256 = por %p254, %p255
    %p257 = scmp.ne.s32.totalorder %s248, %s249
    %p258 = scmp.eq.s32.totalorder %s30, 0
    %p259 = por %p257, %p258
    %p260 = scmp.ne.s32.totalorder %s248, %s249
    %p261 = scmp.eq.s32.totalorder %s31, 3
    %p262 = por %p260, %p261
    %p264 = scmp.ne.s32.totalorder %s249, %s263
    %p265 = scmp.eq.s32.totalorder %s31, 0
    %p266 = por %p264, %p265
    %s268 = sadd.s32 %s267, 1
    %p271 = scmp.eq.s32.totalorder %s25, 3
    %p272 = scmp.ne.s32.totalorder %s267, %s269
    %p273 = scmp.eq.s32.totalorder %s25, 0
    %p274 = por %p272, %p273
    %p275 = scmp.ne.s32.totalorder %s267, %s269
    %p276 = scmp.eq.s32.totalorder %s30, 3
    %p277 = por %p275, %p276
    %p278 = scmp.ne.s32.totalorder %s269, %s270
    %p279 = scmp.eq.s32.totalorder %s30, 0
    %p280 = por %p278, %p279
    %p281 = scmp.ne.s32.totalorder %s269, %s270
    %p282 = scmp.eq.s32.totalorder %s31, 3
    %p283 = por %p281, %p282
    %p285 = scmp.ne.s32.totalorder %s270, %s284
    %p286 = scmp.eq.s32.totalorder %s31, 0
    %p287 = por %p285, %p286
    %s289 = sadd.s32 %s288, 1
    %p292 = scmp.eq.s32.totalorder %s25, 3
    %p293 = scmp.ne.s32.totalorder %s288, %s290
    %p294 = scmp.eq.s32.totalorder %s25, 0
    %p295 = por %p293, %p294
    %p296 = scmp.ne.s32.totalorder %s288, %s290
    %p297 = scmp.eq.s32.totalorder %s30, 3
    %p298 = por %p296, %p297
    %p299 = scmp.ne.s32.totalorder %s290, %s291
    %p300 = scmp.eq.s32.totalorder %s30, 0
    %p301 = por %p299, %p300
    %p302 = scmp.ne.s32.totalorder %s290, %s291
    %p303 = scmp.eq.s32.totalorder %s31, 3
    %p304 = por %p302, %p303
    %p306 = scmp.ne.s32.totalorder %s291, %s305
    %p307 = scmp.eq.s32.totalorder %s31, 0
    %p308 = por %p306, %p307
    %s310 = sadd.s32 %s309, 1
    %p313 = scmp.eq.s32.totalorder %s25, 3
    %p314 = scmp.ne.s32.totalorder %s309, %s311
    %p315 = scmp.eq.s32.totalorder %s25, 0
    %p316 = por %p314, %p315
    %p317 = scmp.ne.s32.totalorder %s309, %s311
    %p318 = scmp.eq.s32.totalorder %s30, 3
    %p319 = por %p317, %p318
    %p320 = scmp.ne.s32.totalorder %s311, %s312
    %p321 = scmp.eq.s32.totalorder %s30, 0
    %p322 = por %p320, %p321
    %p323 = scmp.ne.s32.totalorder %s311, %s312
    %p324 = scmp.eq.s32.totalorder %s31, 3
    %p325 = por %p323, %p324
    %p327 = scmp.ne.s32.totalorder %s312, %s326
    %p328 = scmp.eq.s32.totalorder %s31, 0
    %p329 = por %p327, %p328
    %s331 = sadd.s32 %s330, 1
    %p334 = scmp.eq.s32.totalorder %s25, 3
    %p335 = scmp.ne.s32.totalorder %s330, %s332
    %p336 = scmp.eq.s32.totalorder %s25, 0
    %p337 = por %p335, %p336
    %p338 = scmp.ne.s32.totalorder %s330, %s332
    %p339 = scmp.eq.s32.totalorder %s30, 3
    %p340 = por %p338, %p339
    %p341 = scmp.ne.s32.totalorder %s332, %s333
    %p342 = scmp.eq.s32.totalorder %s30, 0
    %p343 = por %p341, %p342
    %p344 = scmp.ne.s32.totalorder %s332, %s333
    %p345 = scmp.eq.s32.totalorder %s31, 3
    %p346 = por %p344, %p345
    %p348 = scmp.ne.s32.totalorder %s333, %s347
    %p349 = scmp.eq.s32.totalorder %s31, 0
    %p350 = por %p348, %p349
    %s352 = sadd.s32 %s351, 1
    %p355 = scmp.eq.s32.totalorder %s25, 3
    %p356 = scmp.ne.s32.totalorder %s351, %s353
    %p357 = scmp.eq.s32.totalorder %s25, 0
    %p358 = por %p356, %p357
    %p359 = scmp.ne.s32.totalorder %s351, %s353
    %p360 = scmp.eq.s32.totalorder %s30, 3
    %p361 = por %p359, %p360
    %p362 = scmp.ne.s32.totalorder %s353, %s354
    %p363 = scmp.eq.s32.totalorder %s30, 0
    %p364 = por %p362, %p363
    %p365 = scmp.ne.s32.totalorder %s353, %s354
    %p366 = scmp.eq.s32.totalorder %s31, 3
    %p367 = por %p365, %p366
    %p369 = scmp.ne.s32.totalorder %s354, %s368
    %p370 = scmp.eq.s32.totalorder %s31, 0
    %p371 = por %p369, %p370
    %s373 = sadd.s32 %s372, 1
    %p376 = scmp.eq.s32.totalorder %s25, 3
    %p377 = scmp.ne.s32.totalorder %s372, %s374
    %p378 = scmp.eq.s32.totalorder %s25, 0
    %p379 = por %p377, %p378
    %p380 = scmp.ne.s32.totalorder %s372, %s374
    %p381 = scmp.eq.s32.totalorder %s30, 3
    %p382 = por %p380, %p381
    %p383 = scmp.ne.s32.totalorder %s374, %s375
    %p384 = scmp.eq.s32.totalorder %s30, 0
    %p385 = por %p383, %p384
    %p386 = scmp.ne.s32.totalorder %s374, %s375
    %p387 = scmp.eq.s32.totalorder %s31, 3
    %p388 = por %p386, %p387
    %p390 = scmp.ne.s32.totalorder %s375, %s389
    %p391 = scmp.eq.s32.totalorder %s31, 0
    %p392 = por %p390, %p391
    %s393 = ssub.s32 %s32, %s44
    %s394 = ssub.s32 %s33, %s40
    %s395 = sor.u32 %s393, %s394
    %p396 = scmp.eq.s32.totalorder %s395, 0
    %s398 = sadd.s32 %s397, 1
    %s399 = scalar_select %p396, %s397, %s398
    %p402 = pneg %p396
    %p403 = scmp.eq.s32.totalorder %s25, 3
    %p404 = por %p402, %p403
    %p405 = scmp.ne.s32.totalorder %s397, %s400
    %p406 = scmp.eq.s32.totalorder %s25, 0
    %p407 = por %p405, %p406
    %p408 = scmp.ne.s32.totalorder %s397, %s400
    %p409 = scmp.eq.s32.totalorder %s30, 3
    %p410 = por %p408, %p409
    %p411 = scmp.ne.s32.totalorder %s400, %s401
    %p412 = scmp.eq.s32.totalorder %s30, 0
    %p413 = por %p411, %p412
    %p414 = scmp.ne.s32.totalorder %s400, %s401
    %p415 = scmp.eq.s32.totalorder %s31, 3
    %p416 = por %p414, %p415
    %p418 = scmp.ne.s32.totalorder %s401, %s417
    %p419 = scmp.eq.s32.totalorder %s31, 0
    %p420 = por %p418, %p419
    %s421 = ssub.s32 %s32, %s44
    %s422 = ssub.s32 %s33, %s40
    %s423 = sor.u32 %s421, %s422
    %p424 = scmp.eq.s32.totalorder %s423, 0
    %s426 = sadd.s32 %s425, 1
    %s427 = scalar_select %p424, %s425, %s426
    %p430 = pneg %p424
    %p431 = scmp.eq.s32.totalorder %s25, 3
    %p432 = por %p430, %p431
    %p433 = scmp.ne.s32.totalorder %s425, %s428
    %p434 = scmp.eq.s32.totalorder %s25, 0
    %p435 = por %p433, %p434
    %p436 = scmp.ne.s32.totalorder %s425, %s428
    %p437 = scmp.eq.s32.totalorder %s30, 3
    %p438 = por %p436, %p437
    %p439 = scmp.ne.s32.totalorder %s428, %s429
    %p440 = scmp.eq.s32.totalorder %s30, 0
    %p441 = por %p439, %p440
    %p442 = scmp.ne.s32.totalorder %s428, %s429
    %p443 = scmp.eq.s32.totalorder %s31, 3
    %p444 = por %p442, %p443
    %p446 = scmp.ne.s32.totalorder %s429, %s445
    %p447 = scmp.eq.s32.totalorder %s31, 0
    %p448 = por %p446, %p447
    %s449 = ssub.s32 %s32, %s44
    %s450 = ssub.s32 %s33, %s40
    %s451 = sor.u32 %s449, %s450
    %p452 = scmp.eq.s32.totalorder %s451, 0
    %s454 = sadd.s32 %s453, 1
    %s455 = scalar_select %p452, %s453, %s454
    %p458 = pneg %p452
    %p459 = scmp.eq.s32.totalorder %s25, 3
    %p460 = por %p458, %p459
    %p461 = scmp.ne.s32.totalorder %s453, %s456
    %p462 = scmp.eq.s32.totalorder %s25, 0
    %p463 = por %p461, %p462
    %p464 = scmp.ne.s32.totalorder %s453, %s456
    %p465 = scmp.eq.s32.totalorder %s30, 3
    %p466 = por %p464, %p465
    %p467 = scmp.ne.s32.totalorder %s456, %s457
    %p468 = scmp.eq.s32.totalorder %s30, 0
    %p469 = por %p467, %p468
    %p470 = scmp.ne.s32.totalorder %s456, %s457
    %p471 = scmp.eq.s32.totalorder %s31, 3
    %p472 = por %p470, %p471
    %p474 = scmp.ne.s32.totalorder %s457, %s473
    %p475 = scmp.eq.s32.totalorder %s31, 0
    %p476 = por %p474, %p475
    %p477 = scmp.le.s32.totalorder 1, %s25
    %p478 = scmp.lt.s32.totalorder %s25, 5
    %p479 = pnand %p477, %p478
    %p480 = pneg %p479
    // Predicated region
    $region9: #{enhance_net_forward.1} parent=5 // pred_check
      _
    $region10: #{enhance_net_forward.1} parent=5 // pred_check_branch
      %482 = sbr.rel (%p479) target = $region12
    $region11: #{enhance_net_forward.1} parent=5 // pred_region
      %s483 = ssub.s32 %s25, 1
      // Predicated region
      $region13: #{enhance_net_forward.1} parent=11 // pred_check
        %p484 = pneg %p112
      $region14: #{enhance_net_forward.1} parent=11 // pred_check_branch
        %486 = sbr.rel (%p484) target = $region16
      $region15: #{enhance_net_forward.1} parent=11 // pred_region
        _
      $region16: #{enhance_net_forward.1} parent=11 // pred_fallthru
        _
      // Predicated region
      $region17: #{enhance_net_forward.1} parent=11 // pred_check
        %p487 = pneg %p133
      $region18: #{enhance_net_forward.1} parent=11 // pred_check_branch
        %489 = sbr.rel (%p487) target = $region20
      $region19: #{enhance_net_forward.1} parent=11 // pred_region
        _
      $region20: #{enhance_net_forward.1} parent=11 // pred_fallthru
        _
      // Predicated region
      $region21: #{enhance_net_forward.1} parent=11 // pred_check
        %p490 = pneg %p154
      $region22: #{enhance_net_forward.1} parent=11 // pred_check_branch
        %492 = sbr.rel (%p490) target = $region24
      $region23: #{enhance_net_forward.1} parent=11 // pred_region
        _
      $region24: #{enhance_net_forward.1} parent=11 // pred_fallthru
        _
      // Predicated region
      $region25: #{enhance_net_forward.1} parent=11 // pred_check
        %p493 = pneg %p175
      $region26: #{enhance_net_forward.1} parent=11 // pred_check_branch
        %495 = sbr.rel (%p493) target = $region28
      $region27: #{enhance_net_forward.1} parent=11 // pred_region
        _
      $region28: #{enhance_net_forward.1} parent=11 // pred_fallthru
        _
      // Predicated region
      $region29: #{enhance_net_forward.1} parent=11 // pred_check
        %p496 = pneg %p196
      $region30: #{enhance_net_forward.1} parent=11 // pred_check_branch
        %498 = sbr.rel (%p496) target = $region32
      $region31: #{enhance_net_forward.1} parent=11 // pred_region
        _
      $region32: #{enhance_net_forward.1} parent=11 // pred_fallthru
        _
      // Predicated region
      $region33: #{enhance_net_forward.1} parent=11 // pred_check
        %p499 = pneg %p217
      $region34: #{enhance_net_forward.1} parent=11 // pred_check_branch
        %501 = sbr.rel (%p499) target = $region36
      $region35: #{enhance_net_forward.1} parent=11 // pred_region
        _
      $region36: #{enhance_net_forward.1} parent=11 // pred_fallthru
        _
      // Predicated region
      $region37: #{enhance_net_forward.1} parent=11 // pred_check
        %p502 = pneg %p238
      $region38: #{enhance_net_forward.1} parent=11 // pred_check_branch
        %504 = sbr.rel (%p502) target = $region40
      $region39: #{enhance_net_forward.1} parent=11 // pred_region
        _
      $region40: #{enhance_net_forward.1} parent=11 // pred_fallthru
        _
      // Predicated region
      $region41: #{enhance_net_forward.1} parent=11 // pred_check
        %p505 = pneg %p259
      $region42: #{enhance_net_forward.1} parent=11 // pred_check_branch
        %507 = sbr.rel (%p505) target = $region44
      $region43: #{enhance_net_forward.1} parent=11 // pred_region
        _
      $region44: #{enhance_net_forward.1} parent=11 // pred_fallthru
        _
      // Predicated region
      $region45: #{enhance_net_forward.1} parent=11 // pred_check
        %p508 = pneg %p280
      $region46: #{enhance_net_forward.1} parent=11 // pred_check_branch
        %510 = sbr.rel (%p508) target = $region48
      $region47: #{enhance_net_forward.1} parent=11 // pred_region
        _
      $region48: #{enhance_net_forward.1} parent=11 // pred_fallthru
        _
      // Predicated region
      $region49: #{enhance_net_forward.1} parent=11 // pred_check
        %p511 = pneg %p301
      $region50: #{enhance_net_forward.1} parent=11 // pred_check_branch
        %513 = sbr.rel (%p511) target = $region52
      $region51: #{enhance_net_forward.1} parent=11 // pred_region
        _
      $region52: #{enhance_net_forward.1} parent=11 // pred_fallthru
        _
      // Predicated region
      $region53: #{enhance_net_forward.1} parent=11 // pred_check
        %p514 = pneg %p322
      $region54: #{enhance_net_forward.1} parent=11 // pred_check_branch
        %516 = sbr.rel (%p514) target = $region56
      $region55: #{enhance_net_forward.1} parent=11 // pred_region
        _
      $region56: #{enhance_net_forward.1} parent=11 // pred_fallthru
        _
      // Predicated region
      $region57: #{enhance_net_forward.1} parent=11 // pred_check
        %p517 = pneg %p343
      $region58: #{enhance_net_forward.1} parent=11 // pred_check_branch
        %519 = sbr.rel (%p517) target = $region60
      $region59: #{enhance_net_forward.1} parent=11 // pred_region
        _
      $region60: #{enhance_net_forward.1} parent=11 // pred_fallthru
        _
      // Predicated region
      $region61: #{enhance_net_forward.1} parent=11 // pred_check
        %p520 = pneg %p364
      $region62: #{enhance_net_forward.1} parent=11 // pred_check_branch
        %522 = sbr.rel (%p520) target = $region64
      $region63: #{enhance_net_forward.1} parent=11 // pred_region
        _
      $region64: #{enhance_net_forward.1} parent=11 // pred_fallthru
        _
      // Predicated region
      $region65: #{enhance_net_forward.1} parent=11 // pred_check
        %p523 = pneg %p385
      $region66: #{enhance_net_forward.1} parent=11 // pred_check_branch
        %525 = sbr.rel (%p523) target = $region68
      $region67: #{enhance_net_forward.1} parent=11 // pred_region
        _
      $region68: #{enhance_net_forward.1} parent=11 // pred_fallthru
        _
    $region12: #{enhance_net_forward.1} parent=5 // pred_fallthru
      _
    %p526 = scmp.lt.s32.totalorder %s25, 4
    // Predicated region
    $region69: #{enhance_net_forward.1} parent=5 // pred_check
      %p527 = pneg %p526
    $region70: #{enhance_net_forward.1} parent=5 // pred_check_branch
      %529 = sbr.rel (%p527) target = $region72
    $region71: #{enhance_net_forward.1} parent=5 // pred_region
      // Predicated region
      $region73: #{enhance_net_forward.1} parent=71 // pred_check
        %p530 = pneg %p59
      $region74: #{enhance_net_forward.1} parent=71 // pred_check_branch
        %532 = sbr.rel (%p530) target = $region76
      $region75: #{enhance_net_forward.1} parent=71 // pred_region
        %p533 = scmp.lt.s32.totalorder %s32, 1
        %s534 = scalar_select %p533, %s32, 1
        %p535 = scmp.lt.s32.totalorder %s33, 1
        %s536 = scalar_select %p535, %s33, 1
        %s537 = smul.addr %s536, 4
        %s538 = smul.addr %s534, 8
        %s539 = sadd.s32 %s537, %s538
        %s540 = smul.addr %s539, 4
        %s541 = scalar_lea.vmem %s0, %s540
      $region76: #{enhance_net_forward.1} parent=71 // pred_fallthru
        _
      // Predicated region
      $region77: #{enhance_net_forward.1} parent=71 // pred_check
        %p542 = pneg %p85
      $region78: #{enhance_net_forward.1} parent=71 // pred_check_branch
        %544 = sbr.rel (%p542) target = $region80
      $region79: #{enhance_net_forward.1} parent=71 // pred_region
        %p545 = scmp.lt.s32.totalorder %s33, 1
        %s546 = scalar_select %p545, %s33, 1
        %s547 = smul.addr %s546, 4
        %s548 = scalar_lea.vmem %s1, %s547
      $region80: #{enhance_net_forward.1} parent=71 // pred_fallthru
        _
    $region72: #{enhance_net_forward.1} parent=5 // pred_fallthru
      _
    %p549 = scmp.le.s32.totalorder 1, %s25
    %p550 = scmp.lt.s32.totalorder %s25, 5
    %p551 = pnand %p549, %p550
    %p552 = pneg %p551
    // Predicated region
    $region81: #{enhance_net_forward.1} parent=5 // pred_check
      _
    $region82: #{enhance_net_forward.1} parent=5 // pred_check_branch
      %554 = sbr.rel (%p551) target = $region84
    $region83: #{enhance_net_forward.1} parent=5 // pred_region
      %s555 = ssub.s32 %s25, 1
      %p556 = scmp.lt.s32.totalorder %s34, 1
      %s557 = scalar_select %p556, %s34, 1
      %p558 = scmp.lt.s32.totalorder %s35, 1
      %s559 = scalar_select %p558, %s35, 1
      %s560 = smul.addr %s559, 4
      %s561 = smul.addr %s557, 8
      %s562 = sadd.s32 %s560, %s561
      %s563 = smul.addr %s562, 4
      %s564 = scalar_lea.vmem %s0, %s563
      %p565 = pneg %p65
      %p566 = pneg %p62
      %p567 = scmp.lt.s32.totalorder %s35, 1
      %s568 = scalar_select %p567, %s35, 1
      %s569 = smul.addr %s568, 4
      %s570 = scalar_lea.vmem %s1, %s569
      %p571 = pneg %p91
      %p572 = pneg %p88
      %p573 = pneg %p112
      %p574 = pneg %p109
      %p575 = pneg %p133
      %p576 = pneg %p130
      %p577 = pneg %p154
      %p578 = pneg %p151
      %p579 = pneg %p175
      %p580 = pneg %p172
      %p581 = pneg %p196
      %p582 = pneg %p193
      %p583 = pneg %p217
      %p584 = pneg %p214
      %p585 = pneg %p238
      %p586 = pneg %p235
      %p587 = pneg %p259
      %p588 = pneg %p256
      %p589 = pneg %p280
      %p590 = pneg %p277
      %p591 = pneg %p301
      %p592 = pneg %p298
      %p593 = pneg %p322
      %p594 = pneg %p319
      %p595 = pneg %p343
      %p596 = pneg %p340
      %p597 = pneg %p364
      %p598 = pneg %p361
      %p599 = pneg %p385
      %p600 = pneg %p382
      %p601 = pneg %p413
      %p602 = pneg %p410
      %p603 = scmp.lt.s32.totalorder %s34, 1
      %s604 = scalar_select %p603, %s34, 1
      %p605 = scmp.lt.s32.totalorder %s35, 1
      %s606 = scalar_select %p605, %s35, 1
      %s607 = smul.addr %s606, 4
      %s608 = smul.addr %s604, 8
      %s609 = sadd.s32 %s607, %s608
      %s610 = smul.addr %s609, 4
      %s611 = scalar_lea.vmem %s16, %s610
      %p612 = pneg %p441
      %p613 = pneg %p438
      %p614 = scmp.lt.s32.totalorder %s34, 1
      %s615 = scalar_select %p614, %s34, 1
      %p616 = scmp.lt.s32.totalorder %s35, 1
      %s617 = scalar_select %p616, %s35, 1
      %s618 = smul.addr %s617, 4
      %s619 = smul.addr %s615, 8
      %s620 = sadd.s32 %s618, %s619
      %s621 = smul.addr %s620, 4
      %s622 = scalar_lea.vmem %s17, %s621
      %p623 = pneg %p469
      %p624 = pneg %p466
      %p625 = scmp.lt.s32.totalorder %s34, 1
      %s626 = scalar_select %p625, %s34, 1
      %p627 = scmp.lt.s32.totalorder %s35, 1
      %s628 = scalar_select %p627, %s35, 1
      %s629 = smul.addr %s628, 4
      %s630 = smul.addr %s626, 8
      %s631 = sadd.s32 %s629, %s630
      %s632 = smul.addr %s631, 4
      %s633 = scalar_lea.vmem %s18, %s632
      %p634 = scmp.lt.s32.totalorder %s34, 1
      %s635 = scalar_select %p634, %s34, 1
      %p636 = scmp.lt.s32.totalorder %s35, 1
      %s637 = scalar_select %p636, %s35, 1
      %s638 = smul.addr %s637, 4
      %s639 = smul.addr %s635, 8
      %s640 = sadd.s32 %s638, %s639
      %s641 = smul.addr %s640, 4
      %s642 = scalar_lea.vmem %s0, %s641
      %p643 = scmp.lt.s32.totalorder %s35, 1
      %s644 = scalar_select %p643, %s35, 1
      %s645 = smul.addr %s644, 4
      %s646 = scalar_lea.vmem %s1, %s645
      %p647 = scmp.lt.s32.totalorder %s34, 1
      %s648 = scalar_select %p647, %s34, 1
      %p649 = scmp.lt.s32.totalorder %s35, 1
      %s650 = scalar_select %p649, %s35, 1
      %s651 = smul.addr %s650, 4
      %s652 = smul.addr %s648, 8
      %s653 = sadd.s32 %s651, %s652
      %s654 = smul.addr %s653, 4
      %s655 = scalar_lea.vmem %s16, %s654
      %p656 = scmp.lt.s32.totalorder %s34, 1
      %s657 = scalar_select %p656, %s34, 1
      %p658 = scmp.lt.s32.totalorder %s35, 1
      %s659 = scalar_select %p658, %s35, 1
      %s660 = smul.addr %s659, 4
      %s661 = smul.addr %s657, 8
      %s662 = sadd.s32 %s660, %s661
      %s663 = smul.addr %s662, 4
      %s664 = scalar_lea.vmem %s17, %s663
      %p665 = scmp.lt.s32.totalorder %s34, 1
      %s666 = scalar_select %p665, %s34, 1
      %p667 = scmp.lt.s32.totalorder %s35, 1
      %s668 = scalar_select %p667, %s35, 1
      %s669 = smul.addr %s668, 4
      %s670 = smul.addr %s666, 8
      %s671 = sadd.s32 %s669, %s670
      %s672 = smul.addr %s671, 4
      %s673 = scalar_lea.vmem %s18, %s672
      %v675 = vld [vmem:[%s642] sm:$0x77]
      %v676 = vld [vmem:[%s642 + $0x8] sm:$0x77]
      %v677 = vld [vmem:[%s646] sm:$0xf]
      %680 = vst [vmem:[#allocation1] ss:$2 sm:$0xff] %v675
      %s681 = scalar_lea.vmem [#allocation1], 16
      %682 = vst [vmem:[%s681] ss:$2 sm:$0xff] %v676
      %v683 = vld.sshfl [vmem:[#allocation1] sm:$0xff pattern:$0x75316420]
      %v684 = vld.sshfl [vmem:[#allocation1 + $0x8] sm:$0xff pattern:$0x75316420]
      %v685 = vld.sshfl [vmem:[#allocation1 + $0x10] sm:$0xff pattern:$0x75316420]
      %v686 = vld.sshfl [vmem:[#allocation1 + $0x18] sm:$0xff pattern:$0x75316420]
      %691 = vst [vmem:[#allocation1] ss:$2 sm:$0xff] %v675
      %s692 = scalar_lea.vmem [#allocation1], 16
      %693 = vst [vmem:[%s692] ss:$2 sm:$0xff] %v676
      %v694 = vld.sshfl [vmem:[#allocation1] sm:$0xff pattern:$0x75316420]
      %v695 = vld.sshfl [vmem:[#allocation1 + $0x8] sm:$0xff pattern:$0x75316420]
      %v696 = vld.sshfl [vmem:[#allocation1 + $0x10] sm:$0xff pattern:$0x75316420]
      %v697 = vld.sshfl [vmem:[#allocation1 + $0x18] sm:$0xff pattern:$0x75316420]
      %v698 = vrot.slane %v694, 5
      %v699 = vrot.slane %v695, 5
      %v700 = vrot.slane %v696, 5
      %v701 = vrot.slane %v697, 5
      %702 = vrot.lane.b32.xlu0 %v698, 127
      %v703 = vpop.permute.xlu0 %702
      %704 = vrot.lane.b32.xlu0 %v699, 127
      %v705 = vpop.permute.xlu0 %704
      %706 = vrot.lane.b32.xlu0 %v700, 127
      %v707 = vpop.permute.xlu0 %706
      %708 = vrot.lane.b32.xlu0 %v701, 127
      %v709 = vpop.permute.xlu0 %708
      %vm710 = vcmask 1039360
      %v711 = vsel %vm710, %v703, %v705
      %v712 = vsel %vm710, %v705, %v707
      %v713 = vsel %vm710, %v707, %v709
      %718 = vst [vmem:[#allocation1] ss:$2 sm:$0xff] %v675
      %s719 = scalar_lea.vmem [#allocation1], 16
      %720 = vst [vmem:[%s719] ss:$2 sm:$0xff] %v676
      %v721 = vld.sshfl [vmem:[#allocation1] sm:$0xff pattern:$0x75316420]
      %v722 = vld.sshfl [vmem:[#allocation1 + $0x8] sm:$0xff pattern:$0x75316420]
      %v723 = vld.sshfl [vmem:[#allocation1 + $0x10] sm:$0xff pattern:$0x75316420]
      %v724 = vld.sshfl [vmem:[#allocation1 + $0x18] sm:$0xff pattern:$0x75316420]
      %v725 = vrot.slane %v721, 2
      %v726 = vrot.slane %v722, 2
      %v727 = vrot.slane %v723, 2
      %v728 = vrot.slane %v724, 2
      %729 = vrot.lane.b32.xlu0 %v725, 126
      %v730 = vpop.permute.xlu0 %729
      %731 = vrot.lane.b32.xlu0 %v726, 126
      %v732 = vpop.permute.xlu0 %731
      %733 = vrot.lane.b32.xlu0 %v727, 126
      %v734 = vpop.permute.xlu0 %733
      %735 = vrot.lane.b32.xlu0 %v728, 126
      %v736 = vpop.permute.xlu0 %735
      %vm737 = vcmask 1031168
      %v738 = vsel %vm737, %v730, %v732
      %v739 = vsel %vm737, %v732, %v734
      %v740 = vsel %vm737, %v734, %v736
      %vm745 = vcmask 1042432
      %v746 = vsel %vm745, %v683, %v711
      %v747 = vsel %vm745, %v684, %v712
      %v748 = vsel %vm745, %v685, %v713
      %v749 = vsel %vm745, %v686, %v709
      %vm750 = vcmask 1045504
      %v751 = vsel %vm750, %v746, %v738
      %v752 = vsel %vm750, %v747, %v739
      %v753 = vsel %vm750, %v748, %v740
      %v754 = vsel %vm750, %v749, %v736
      %v755 = vpack.c.bf16 %v738, %v751
      %v756 = vpack.c.bf16 %v739, %v752
      %v757 = vpack.c.bf16 %v740, %v753
      %v758 = vpack.c.bf16 %v736, %v754
      %v759 = vld [vmem:[%s2] sm:$0xf]
      %v760 = vld [vmem:[%s2 + $0x4] sm:$0xf]
      %v761 = vld [vmem:[%s2 + $0x8] sm:$0xf]
      %v762 = vld [vmem:[%s2 + $0xc] sm:$0xf]
      %763 = vst [vmem:[#allocation1] ss:$2 sm:$0xff] %v675
      %s764 = scalar_lea.vmem [#allocation1], 16
      %765 = vst [vmem:[%s764] ss:$2 sm:$0xff] %v676
      %v766 = vld.sshfl [vmem:[#allocation1] sm:$0xff pattern:$0x75316420]
      %v767 = vld.sshfl [vmem:[#allocation1 + $0x8] sm:$0xff pattern:$0x75316420]
      %v768 = vld.sshfl [vmem:[#allocation1 + $0x10] sm:$0xff pattern:$0x75316420]
      %v769 = vld.sshfl [vmem:[#allocation1 + $0x18] sm:$0xff pattern:$0x75316420]
      %774 = vst [vmem:[#allocation1] ss:$2 sm:$0xff] %v675
      %s775 = scalar_lea.vmem [#allocation1], 16
      %776 = vst [vmem:[%s775] ss:$2 sm:$0xff] %v676
      %v777 = vld.sshfl [vmem:[#allocation1] sm:$0xff pattern:$0x75316420]
      %v778 = vld.sshfl [vmem:[#allocation1 + $0x8] sm:$0xff pattern:$0x75316420]
      %v779 = vld.sshfl [vmem:[#allocation1 + $0x10] sm:$0xff pattern:$0x75316420]
      %v780 = vld.sshfl [vmem:[#allocation1 + $0x18] sm:$0xff pattern:$0x75316420]
      %v781 = vrot.slane %v777, 5
      %v782 = vrot.slane %v778, 5
      %v783 = vrot.slane %v779, 5
      %v784 = vrot.slane %v780, 5
      %785 = vrot.lane.b32.xlu0 %v781, 127
      %v786 = vpop.permute.xlu0 %785
      %787 = vrot.lane.b32.xlu0 %v782, 127
      %v788 = vpop.permute.xlu0 %787
      %789 = vrot.lane.b32.xlu0 %v783, 127
      %v790 = vpop.permute.xlu0 %789
      %791 = vrot.lane.b32.xlu0 %v784, 127
      %v792 = vpop.permute.xlu0 %791
      %v793 = vsel %vm710, %v786, %v788
      %v794 = vsel %vm710, %v788, %v790
      %v795 = vsel %vm710, %v790, %v792
      %800 = vst [vmem:[#allocation1] ss:$2 sm:$0xff] %v675
      %s801 = scalar_lea.vmem [#allocation1], 16
      %802 = vst [vmem:[%s801] ss:$2 sm:$0xff] %v676
      %v803 = vld.sshfl [vmem:[#allocation1] sm:$0xff pattern:$0x75316420]
      %v804 = vld.sshfl [vmem:[#allocation1 + $0x8] sm:$0xff pattern:$0x75316420]
      %v805 = vld.sshfl [vmem:[#allocation1 + $0x10] sm:$0xff pattern:$0x75316420]
      %v806 = vld.sshfl [vmem:[#allocation1 + $0x18] sm:$0xff pattern:$0x75316420]
      %v807 = vrot.slane %v803, 2
      %v808 = vrot.slane %v804, 2
      %v809 = vrot.slane %v805, 2
      %v810 = vrot.slane %v806, 2
      %811 = vrot.lane.b32.xlu0 %v807, 126
      %v812 = vpop.permute.xlu0 %811
      %813 = vrot.lane.b32.xlu0 %v808, 126
      %v814 = vpop.permute.xlu0 %813
      %815 = vrot.lane.b32.xlu0 %v809, 126
      %v816 = vpop.permute.xlu0 %815
      %817 = vrot.lane.b32.xlu0 %v810, 126
      %v818 = vpop.permute.xlu0 %817
      %v819 = vsel %vm737, %v812, %v814
      %v820 = vsel %vm737, %v814, %v816
      %v821 = vsel %vm737, %v816, %v818
      %v826 = vsel %vm745, %v766, %v793
      %v827 = vsel %vm745, %v767, %v794
      %v828 = vsel %vm745, %v768, %v795
      %v829 = vsel %vm745, %v769, %v792
      %v830 = vsel %vm750, %v826, %v819
      %v831 = vsel %vm750, %v827, %v820
      %v832 = vsel %vm750, %v828, %v821
      %v833 = vsel %vm750, %v829, %v818
      %v834 = vpack.c.bf16 %v819, %v830
      %v835 = vpack.c.bf16 %v820, %v831
      %v836 = vpack.c.bf16 %v821, %v832
      %v837 = vpack.c.bf16 %v818, %v833
      %s838 = scalar_lea.vmem %s2, 16
      %v839 = vld [vmem:[%s838] sm:$0xf]
      %v840 = vld [vmem:[%s838 + $0x4] sm:$0xf]
      %v841 = vld [vmem:[%s838 + $0x8] sm:$0xf]
      %v842 = vld [vmem:[%s838 + $0xc] sm:$0xf]
      %v847 = vunpack.c.l.b16 %v839
      %v848 = vunpack.c.l.b16 %v840
      %v849 = vunpack.c.l.b16 %v841
      %v850 = vunpack.c.l.b16 %v842
      %v851 = vpack.c.b16 %v848, %v847
      %v852 = vpack.c.b16 %v850, %v849
      %857 = vrot.lane.b32.xlu0 %v834, 110
      %v858 = vpop.permute.xlu0 %857
      %859 = vrot.lane.b32.xlu0 %v835, 110
      %v860 = vpop.permute.xlu0 %859
      %861 = vrot.lane.b32.xlu0 %v836, 110
      %v862 = vpop.permute.xlu0 %861
      %863 = vrot.lane.b32.xlu0 %v837, 110
      %v864 = vpop.permute.xlu0 %863
      %vm865 = vcmask 900096
      %v866 = vsel %vm865, %v858, %v860
      %v867 = vsel %vm865, %v860, %v862
      %v868 = vsel %vm865, %v862, %v864
      %vm869 = vcmask 72704
      %v871 = vsel %vm869, %v851, 0
      %v874 = vsel %vm869, %v852, 0
      %vm876 = vcmask 1043456
      %vm877 = vcmask 1044480
      %v878 = vsel %vm876, 4294967295, 65535
      %v879 = vsel %vm877, %v878, 0
      %v881 = vand.u32 %v866, %v879
      %v884 = vand.u32 %v867, %v879
      %v887 = vand.u32 %v868, %v879
      %v890 = vand.u32 %v864, %v879
      %892 = vmatpush.bf16.msra.mxu0 0
      %893 = vmatpush.bf16.msra.mxu0 0
      %894 = vmatpush.bf16.msra.mxu0 0
      %895 = vmatpush.bf16.msra.mxu0 0
      %896 = vmatpush.bf16.msra.mxu0 0
      %897 = vmatpush.bf16.msra.mxu0 0
      %898 = vmatpush.bf16.msra.mxu0 0
      %899 = vmatpush.bf16.msra.mxu0 %v881
      %900 = vmatmul.bf16.gmra.mxu0 %v871
      %v901 = vpop.f32.mrf.mxu0
      %v902 = vadd.f32 0.0, %v901
      %v903 = vpop.f32.mrf.mxu0
      %v904 = vadd.f32 0.0, %v903
      %905 = vmatmul.bf16.gmra.mxu0 %v874
      %v906 = vpop.f32.mrf.mxu0
      %v907 = vadd.f32 0.0, %v906
      %v908 = vpop.f32.mrf.mxu0
      %v909 = vadd.f32 0.0, %v908
      %910 = vdwg.mxu0
      %911 = vmatpush.bf16.msra.mxu0 0
      %912 = vmatpush.bf16.msra.mxu0 0
      %913 = vmatpush.bf16.msra.mxu0 0
      %914 = vmatpush.bf16.msra.mxu0 0
      %915 = vmatpush.bf16.msra.mxu0 0
      %916 = vmatpush.bf16.msra.mxu0 0
      %917 = vmatpush.bf16.msra.mxu0 0
      %918 = vmatpush.bf16.msra.mxu0 %v884
      %919 = vmatmul.bf16.gmra.mxu0 %v871
      %v920 = vpop.f32.mrf.mxu0
      %v921 = vadd.f32 0.0, %v920
      %v922 = vpop.f32.mrf.mxu0
      %v923 = vadd.f32 0.0, %v922
      %924 = vmatmul.bf16.gmra.mxu0 %v874
      %v925 = vpop.f32.mrf.mxu0
      %v926 = vadd.f32 0.0, %v925
      %v927 = vpop.f32.mrf.mxu0
      %v928 = vadd.f32 0.0, %v927
      %929 = vdwg.mxu0
      %930 = vmatpush.bf16.msra.mxu0 0
      %931 = vmatpush.bf16.msra.mxu0 0
      %932 = vmatpush.bf16.msra.mxu0 0
      %933 = vmatpush.bf16.msra.mxu0 0
      %934 = vmatpush.bf16.msra.mxu0 0
      %935 = vmatpush.bf16.msra.mxu0 0
      %936 = vmatpush.bf16.msra.mxu0 0
      %937 = vmatpush.bf16.msra.mxu0 %v887
      %938 = vmatmul.bf16.gmra.mxu0 %v871
      %v939 = vpop.f32.mrf.mxu0
      %v940 = vadd.f32 0.0, %v939
      %v941 = vpop.f32.mrf.mxu0
      %v942 = vadd.f32 0.0, %v941
      %943 = vmatmul.bf16.gmra.mxu0 %v874
      %v944 = vpop.f32.mrf.mxu0
      %v945 = vadd.f32 0.0, %v944
      %v946 = vpop.f32.mrf.mxu0
      %v947 = vadd.f32 0.0, %v946
      %948 = vdwg.mxu0
      %949 = vmatpush.bf16.msra.mxu0 0
      %950 = vmatpush.bf16.msra.mxu0 0
      %951 = vmatpush.bf16.msra.mxu0 0
      %952 = vmatpush.bf16.msra.mxu0 0
      %953 = vmatpush.bf16.msra.mxu0 0
      %954 = vmatpush.bf16.msra.mxu0 0
      %955 = vmatpush.bf16.msra.mxu0 0
      %956 = vmatpush.bf16.msra.mxu0 %v890
      %957 = vmatmul.bf16.gmra.mxu0 %v871
      %v958 = vpop.f32.mrf.mxu0
      %v959 = vadd.f32 0.0, %v958
      %v960 = vpop.f32.mrf.mxu0
      %v961 = vadd.f32 0.0, %v960
      %962 = vmatmul.bf16.gmra.mxu0 %v874
      %v963 = vpop.f32.mrf.mxu0
      %v964 = vadd.f32 0.0, %v963
      %v965 = vpop.f32.mrf.mxu0
      %v966 = vadd.f32 0.0, %v965
      %967 = vdwg.mxu0
      %v972 = vunpack.c.l.b16 %v759
      %v973 = vunpack.c.l.b16 %v760
      %v974 = vunpack.c.l.b16 %v761
      %v975 = vunpack.c.l.b16 %v762
      %v976 = vpack.c.b16 %v973, %v972
      %v977 = vpack.c.b16 %v975, %v974
      %v979 = vsel %vm869, %v976, 0
      %v982 = vsel %vm869, %v977, 0
      %v985 = vand.u32 %v755, %v879
      %v988 = vand.u32 %v756, %v879
      %v991 = vand.u32 %v757, %v879
      %v994 = vand.u32 %v758, %v879
      %996 = vmatpush.bf16.msra.mxu0 0
      %997 = vmatpush.bf16.msra.mxu0 0
      %998 = vmatpush.bf16.msra.mxu0 0
      %999 = vmatpush.bf16.msra.mxu0 0
      %1000 = vmatpush.bf16.msra.mxu0 0
      %1001 = vmatpush.bf16.msra.mxu0 0
      %1002 = vmatpush.bf16.msra.mxu0 0
      %1003 = vmatpush.bf16.msra.mxu0 %v985
      %1004 = vmatmul.bf16.gmra.mxu0 %v979
      %v1005 = vpop.f32.mrf.mxu0
      %v1006 = vadd.f32 %v902, %v1005
      %v1007 = vpop.f32.mrf.mxu0
      %v1008 = vadd.f32 %v904, %v1007
      %1009 = vmatmul.bf16.gmra.mxu0 %v982
      %v1010 = vpop.f32.mrf.mxu0
      %v1011 = vadd.f32 %v907, %v1010
      %v1012 = vpop.f32.mrf.mxu0
      %v1013 = vadd.f32 %v909, %v1012
      %1014 = vdwg.mxu0
      %1015 = vmatpush.bf16.msra.mxu0 0
      %1016 = vmatpush.bf16.msra.mxu0 0
      %1017 = vmatpush.bf16.msra.mxu0 0
      %1018 = vmatpush.bf16.msra.mxu0 0
      %1019 = vmatpush.bf16.msra.mxu0 0
      %1020 = vmatpush.bf16.msra.mxu0 0
      %1021 = vmatpush.bf16.msra.mxu0 0
      %1022 = vmatpush.bf16.msra.mxu0 %v988
      %1023 = vmatmul.bf16.gmra.mxu0 %v979
      %v1024 = vpop.f32.mrf.mxu0
      %v1025 = vadd.f32 %v921, %v1024
      %v1026 = vpop.f32.mrf.mxu0
      %v1027 = vadd.f32 %v923, %v1026
      %1028 = vmatmul.bf16.gmra.mxu0 %v982
      %v1029 = vpop.f32.mrf.mxu0
      %v1030 = vadd.f32 %v926, %v1029
      %v1031 = vpop.f32.mrf.mxu0
      %v1032 = vadd.f32 %v928, %v1031
      %1033 = vdwg.mxu0
      %1034 = vmatpush.bf16.msra.mxu0 0
      %1035 = vmatpush.bf16.msra.mxu0 0
      %1036 = vmatpush.bf16.msra.mxu0 0
      %1037 = vmatpush.bf16.msra.mxu0 0
      %1038 = vmatpush.bf16.msra.mxu0 0
      %1039 = vmatpush.bf16.msra.mxu0 0
      %1040 = vmatpush.bf16.msra.mxu0 0
      %1041 = vmatpush.bf16.msra.mxu0 %v991
      %1042 = vmatmul.bf16.gmra.mxu0 %v979
      %v1043 = vpop.f32.mrf.mxu0
      %v1044 = vadd.f32 %v940, %v1043
      %v1045 = vpop.f32.mrf.mxu0
      %v1046 = vadd.f32 %v942, %v1045
      %1047 = vmatmul.bf16.gmra.mxu0 %v982
      %v1048 = vpop.f32.mrf.mxu0
      %v1049 = vadd.f32 %v945, %v1048
      %v1050 = vpop.f32.mrf.mxu0
      %v1051 = vadd.f32 %v947, %v1050
      %1052 = vdwg.mxu0
      %1053 = vmatpush.bf16.msra.mxu0 0
      %1054 = vmatpush.bf16.msra.mxu0 0
      %1055 = vmatpush.bf16.msra.mxu0 0
      %1056 = vmatpush.bf16.msra.mxu0 0
      %1057 = vmatpush.bf16.msra.mxu0 0
      %1058 = vmatpush.bf16.msra.mxu0 0
      %1059 = vmatpush.bf16.msra.mxu0 0
      %1060 = vmatpush.bf16.msra.mxu0 %v994
      %1061 = vmatmul.bf16.gmra.mxu0 %v979
      %v1062 = vpop.f32.mrf.mxu0
      %v1063 = vadd.f32 %v959, %v1062
      %v1064 = vpop.f32.mrf.mxu0
      %v1065 = vadd.f32 %v961, %v1064
      %1066 = vmatmul.bf16.gmra.mxu0 %v982
      %v1067 = vpop.f32.mrf.mxu0
      %v1068 = vadd.f32 %v964, %v1067
      %v1069 = vpop.f32.mrf.mxu0
      %v1070 = vadd.f32 %v966, %v1069
      %1071 = vdwg.mxu0
      %1072 = vst [vmem:[#allocation1] ss:$2 sm:$0xff] %v675
      %s1073 = scalar_lea.vmem [#allocation1], 16
      %1074 = vst [vmem:[%s1073] ss:$2 sm:$0xff] %v676
      %v1075 = vld.sshfl [vmem:[#allocation1] sm:$0xff pattern:$0x75316420]
      %v1076 = vld.sshfl [vmem:[#allocation1 + $0x8] sm:$0xff pattern:$0x75316420]
      %v1077 = vld.sshfl [vmem:[#allocation1 + $0x10] sm:$0xff pattern:$0x75316420]
      %v1078 = vld.sshfl [vmem:[#allocation1 + $0x18] sm:$0xff pattern:$0x75316420]
      %1083 = vst [vmem:[#allocation1] ss:$2 sm:$0xff] %v675
      %s1084 = scalar_lea.vmem [#allocation1], 16
      %1085 = vst [vmem:[%s1084] ss:$2 sm:$0xff] %v676
      %v1086 = vld.sshfl [vmem:[#allocation1] sm:$0xff pattern:$0x75316420]
      %v1087 = vld.sshfl [vmem:[#allocation1 + $0x8] sm:$0xff pattern:$0x75316420]
      %v1088 = vld.sshfl [vmem:[#allocation1 + $0x10] sm:$0xff pattern:$0x75316420]
      %v1089 = vld.sshfl [vmem:[#allocation1 + $0x18] sm:$0xff pattern:$0x75316420]
      %v1090 = vrot.slane %v1086, 5
      %v1091 = vrot.slane %v1087, 5
      %v1092 = vrot.slane %v1088, 5
      %v1093 = vrot.slane %v1089, 5
      %1094 = vrot.lane.b32.xlu0 %v1090, 127
      %v1095 = vpop.permute.xlu0 %1094
      %1096 = vrot.lane.b32.xlu0 %v1091, 127
      %v1097 = vpop.permute.xlu0 %1096
      %1098 = vrot.lane.b32.xlu0 %v1092, 127
      %v1099 = vpop.permute.xlu0 %1098
      %1100 = vrot.lane.b32.xlu0 %v1093, 127
      %v1101 = vpop.permute.xlu0 %1100
      %v1102 = vsel %vm710, %v1095, %v1097
      %v1103 = vsel %vm710, %v1097, %v1099
      %v1104 = vsel %vm710, %v1099, %v1101
      %1109 = vst [vmem:[#allocation1] ss:$2 sm:$0xff] %v675
      %s1110 = scalar_lea.vmem [#allocation1], 16
      %1111 = vst [vmem:[%s1110] ss:$2 sm:$0xff] %v676
      %v1112 = vld.sshfl [vmem:[#allocation1] sm:$0xff pattern:$0x75316420]
      %v1113 = vld.sshfl [vmem:[#allocation1 + $0x8] sm:$0xff pattern:$0x75316420]
      %v1114 = vld.sshfl [vmem:[#allocation1 + $0x10] sm:$0xff pattern:$0x75316420]
      %v1115 = vld.sshfl [vmem:[#allocation1 + $0x18] sm:$0xff pattern:$0x75316420]
      %v1116 = vrot.slane %v1112, 2
      %v1117 = vrot.slane %v1113, 2
      %v1118 = vrot.slane %v1114, 2
      %v1119 = vrot.slane %v1115, 2
      %1120 = vrot.lane.b32.xlu0 %v1116, 126
      %v1121 = vpop.permute.xlu0 %1120
      %1122 = vrot.lane.b32.xlu0 %v1117, 126
      %v1123 = vpop.permute.xlu0 %1122
      %1124 = vrot.lane.b32.xlu0 %v1118, 126
      %v1125 = vpop.permute.xlu0 %1124
      %1126 = vrot.lane.b32.xlu0 %v1119, 126
      %v1127 = vpop.permute.xlu0 %1126
      %v1128 = vsel %vm737, %v1121, %v1123
      %v1129 = vsel %vm737, %v1123, %v1125
      %v1130 = vsel %vm737, %v1125, %v1127
      %v1135 = vsel %vm745, %v1075, %v1102
      %v1136 = vsel %vm745, %v1076, %v1103
      %v1137 = vsel %vm745, %v1077, %v1104
      %v1138 = vsel %vm745, %v1078, %v1101
      %v1139 = vsel %vm750, %v1135, %v1128
      %v1140 = vsel %vm750, %v1136, %v1129
      %v1141 = vsel %vm750, %v1137, %v1130
      %v1142 = vsel %vm750, %v1138, %v1127
      %v1143 = vpack.c.bf16 %v1128, %v1139
      %v1144 = vpack.c.bf16 %v1129, %v1140
      %v1145 = vpack.c.bf16 %v1130, %v1141
      %v1146 = vpack.c.bf16 %v1127, %v1142
      %s1147 = scalar_lea.vmem %s2, 32
      %v1148 = vld [vmem:[%s1147] sm:$0xf]
      %v1149 = vld [vmem:[%s1147 + $0x4] sm:$0xf]
      %v1150 = vld [vmem:[%s1147 + $0x8] sm:$0xf]
      %v1151 = vld [vmem:[%s1147 + $0xc] sm:$0xf]
      %v1156 = vunpack.c.l.b16 %v1148
      %v1157 = vunpack.c.l.b16 %v1149
      %v1158 = vunpack.c.l.b16 %v1150
      %v1159 = vunpack.c.l.b16 %v1151
      %v1160 = vpack.c.b16 %v1157, %v1156
      %v1161 = vpack.c.b16 %v1159, %v1158
      %1166 = vrot.lane.b32.xlu0 %v1143, 92
      %v1167 = vpop.permute.xlu0 %1166
      %1168 = vrot.lane.b32.xlu0 %v1144, 92
      %v1169 = vpop.permute.xlu0 %1168
      %1170 = vrot.lane.b32.xlu0 %v1145, 92
      %v1171 = vpop.permute.xlu0 %1170
      %1172 = vrot.lane.b32.xlu0 %v1146, 92
      %v1173 = vpop.permute.xlu0 %1172
      %vm1174 = vcmask 752640
      %v1175 = vsel %vm1174, %v1167, %v1169
      %v1176 = vsel %vm1174, %v1169, %v1171
      %v1177 = vsel %vm1174, %v1171, %v1173
      %v1179 = vsel %vm869, %v1160, 0
      %v1182 = vsel %vm869, %v1161, 0
      %v1185 = vand.u32 %v1175, %v879
      %v1188 = vand.u32 %v1176, %v879
      %v1191 = vand.u32 %v1177, %v879
      %v1194 = vand.u32 %v1173, %v879
      %1196 = vmatpush.bf16.msra.mxu0 0
      %1197 = vmatpush.bf16.msra.mxu0 0
      %1198 = vmatpush.bf16.msra.mxu0 0
      %1199 = vmatpush.bf16.msra.mxu0 0
      %1200 = vmatpush.bf16.msra.mxu0 0
      %1201 = vmatpush.bf16.msra.mxu0 0
      %1202 = vmatpush.bf16.msra.mxu0 0
      %1203 = vmatpush.bf16.msra.mxu0 %v1185
      %1204 = vmatmul.bf16.gmra.mxu0 %v1179
      %v1205 = vpop.f32.mrf.mxu0
      %v1206 = vadd.f32 0.0, %v1205
      %v1207 = vpop.f32.mrf.mxu0
      %v1208 = vadd.f32 0.0, %v1207
      %1209 = vmatmul.bf16.gmra.mxu0 %v1182
      %v1210 = vpop.f32.mrf.mxu0
      %v1211 = vadd.f32 0.0, %v1210
      %v1212 = vpop.f32.mrf.mxu0
      %v1213 = vadd.f32 0.0, %v1212
      %1214 = vdwg.mxu0
      %1215 = vmatpush.bf16.msra.mxu0 0
      %1216 = vmatpush.bf16.msra.mxu0 0
      %1217 = vmatpush.bf16.msra.mxu0 0
      %1218 = vmatpush.bf16.msra.mxu0 0
      %1219 = vmatpush.bf16.msra.mxu0 0
      %1220 = vmatpush.bf16.msra.mxu0 0
      %1221 = vmatpush.bf16.msra.mxu0 0
      %1222 = vmatpush.bf16.msra.mxu0 %v1188
      %1223 = vmatmul.bf16.gmra.mxu0 %v1179
      %v1224 = vpop.f32.mrf.mxu0
      %v1225 = vadd.f32 0.0, %v1224
      %v1226 = vpop.f32.mrf.mxu0
      %v1227 = vadd.f32 0.0, %v1226
      %1228 = vmatmul.bf16.gmra.mxu0 %v1182
      %v1229 = vpop.f32.mrf.mxu0
      %v1230 = vadd.f32 0.0, %v1229
      %v1231 = vpop.f32.mrf.mxu0
      %v1232 = vadd.f32 0.0, %v1231
      %1233 = vdwg.mxu0
      %1234 = vmatpush.bf16.msra.mxu0 0
      %1235 = vmatpush.bf16.msra.mxu0 0
      %1236 = vmatpush.bf16.msra.mxu0 0
      %1237 = vmatpush.bf16.msra.mxu0 0
      %1238 = vmatpush.bf16.msra.mxu0 0
      %1239 = vmatpush.bf16.msra.mxu0 0
      %1240 = vmatpush.bf16.msra.mxu0 0
      %1241 = vmatpush.bf16.msra.mxu0 %v1191
      %1242 = vmatmul.bf16.gmra.mxu0 %v1179
      %v1243 = vpop.f32.mrf.mxu0
      %v1244 = vadd.f32 0.0, %v1243
      %v1245 = vpop.f32.mrf.mxu0
      %v1246 = vadd.f32 0.0, %v1245
      %1247 = vmatmul.bf16.gmra.mxu0 %v1182
      %v1248 = vpop.f32.mrf.mxu0
      %v1249 = vadd.f32 0.0, %v1248
      %v1250 = vpop.f32.mrf.mxu0
      %v1251 = vadd.f32 0.0, %v1250
      %1252 = vdwg.mxu0
      %1253 = vmatpush.bf16.msra.mxu0 0
      %1254 = vmatpush.bf16.msra.mxu0 0
      %1255 = vmatpush.bf16.msra.mxu0 0
      %1256 = vmatpush.bf16.msra.mxu0 0
      %1257 = vmatpush.bf16.msra.mxu0 0
      %1258 = vmatpush.bf16.msra.mxu0 0
      %1259 = vmatpush.bf16.msra.mxu0 0
      %1260 = vmatpush.bf16.msra.mxu0 %v1194
      %1261 = vmatmul.bf16.gmra.mxu0 %v1179
      %v1262 = vpop.f32.mrf.mxu0
      %v1263 = vadd.f32 0.0, %v1262
      %v1264 = vpop.f32.mrf.mxu0
      %v1265 = vadd.f32 0.0, %v1264
      %1266 = vmatmul.bf16.gmra.mxu0 %v1182
      %v1267 = vpop.f32.mrf.mxu0
      %v1268 = vadd.f32 0.0, %v1267
      %v1269 = vpop.f32.mrf.mxu0
      %v1270 = vadd.f32 0.0, %v1269
      %1271 = vdwg.mxu0
      %v1272 = vadd.f32 %v1006, %v1206
      %v1273 = vadd.f32 %v1025, %v1225
      %v1274 = vadd.f32 %v1044, %v1244
      %v1275 = vadd.f32 %v1063, %v1263
      %v1276 = vadd.f32 %v1008, %v1208
      %v1277 = vadd.f32 %v1027, %v1227
      %v1278 = vadd.f32 %v1046, %v1246
      %v1279 = vadd.f32 %v1065, %v1265
      %v1280 = vadd.f32 %v1011, %v1211
      %v1281 = vadd.f32 %v1030, %v1230
      %v1282 = vadd.f32 %v1049, %v1249
      %v1283 = vadd.f32 %v1068, %v1268
      %v1284 = vadd.f32 %v1013, %v1213
      %v1285 = vadd.f32 %v1032, %v1232
      %v1286 = vadd.f32 %v1051, %v1251
      %v1287 = vadd.f32 %v1070, %v1270
      %v1288 = vld [vmem:[%s3] sm:$0xff]
      %v1289 = vld [vmem:[%s3 + $0x8] sm:$0xff]
      %v1290 = vld [vmem:[%s3 + $0x10] sm:$0xff]
      %v1291 = vld [vmem:[%s3 + $0x18] sm:$0xff]
      %1293 = vset.pattern.permute.xlu0 0
      %1294 = vperm.xlu0 %1293, %v1288
      %v1295 = vpop.permute.xlu0 %1294
      %1298 = vset.pattern.permute.xlu0 0
      %1299 = vperm.xlu0 %1298, %v1289
      %v1300 = vpop.permute.xlu0 %1299
      %1303 = vset.pattern.permute.xlu0 0
      %1304 = vperm.xlu0 %1303, %v1290
      %v1305 = vpop.permute.xlu0 %1304
      %1308 = vset.pattern.permute.xlu0 0
      %1309 = vperm.xlu0 %1308, %v1291
      %v1310 = vpop.permute.xlu0 %1309
      %v1312 = vadd.f32 %v1272, %v1295
      %v1313 = vadd.f32 %v1273, %v1295
      %v1314 = vadd.f32 %v1274, %v1295
      %v1315 = vadd.f32 %v1275, %v1295
      %v1316 = vadd.f32 %v1276, %v1300
      %v1317 = vadd.f32 %v1277, %v1300
      %v1318 = vadd.f32 %v1278, %v1300
      %v1319 = vadd.f32 %v1279, %v1300
      %v1320 = vadd.f32 %v1280, %v1305
      %v1321 = vadd.f32 %v1281, %v1305
      %v1322 = vadd.f32 %v1282, %v1305
      %v1323 = vadd.f32 %v1283, %v1305
      %v1324 = vadd.f32 %v1284, %v1310
      %v1325 = vadd.f32 %v1285, %v1310
      %v1326 = vadd.f32 %v1286, %v1310
      %v1327 = vadd.f32 %v1287, %v1310
      %v1328 = vmax.f32 %v1312, 0.0
      %v1329 = vmax.f32 %v1313, 0.0
      %v1330 = vmax.f32 %v1314, 0.0
      %v1331 = vmax.f32 %v1315, 0.0
      %v1332 = vmax.f32 %v1316, 0.0
      %v1333 = vmax.f32 %v1317, 0.0
      %v1334 = vmax.f32 %v1318, 0.0
      %v1335 = vmax.f32 %v1319, 0.0
      %v1336 = vmax.f32 %v1320, 0.0
      %v1337 = vmax.f32 %v1321, 0.0
      %v1338 = vmax.f32 %v1322, 0.0
      %v1339 = vmax.f32 %v1323, 0.0
      %v1340 = vmax.f32 %v1324, 0.0
      %v1341 = vmax.f32 %v1325, 0.0
      %v1342 = vmax.f32 %v1326, 0.0
      %v1343 = vmax.f32 %v1327, 0.0
      %v1345 = vperm.slane %v677, 0
      %v1346 = vperm.slane %v677, 1
      %v1347 = vperm.slane %v677, 2
      %v1348 = vperm.slane %v677, 3
      %v1353 = vmul.f32 %v1328, %v1345
      %v1354 = vmul.f32 %v1329, %v1346
      %v1355 = vmul.f32 %v1330, %v1347
      %v1356 = vmul.f32 %v1331, %v1348
      %v1357 = vmul.f32 %v1332, %v1345
      %v1358 = vmul.f32 %v1333, %v1346
      %v1359 = vmul.f32 %v1334, %v1347
      %v1360 = vmul.f32 %v1335, %v1348
      %v1361 = vmul.f32 %v1336, %v1345
      %v1362 = vmul.f32 %v1337, %v1346
      %v1363 = vmul.f32 %v1338, %v1347
      %v1364 = vmul.f32 %v1339, %v1348
      %v1365 = vmul.f32 %v1340, %v1345
      %v1366 = vmul.f32 %v1341, %v1346
      %v1367 = vmul.f32 %v1342, %v1347
      %v1368 = vmul.f32 %v1343, %v1348
      %v1369 = vpack.c.bf16 %v1354, %v1353
      %v1370 = vpack.c.bf16 %v1356, %v1355
      %v1371 = vpack.c.bf16 %v1358, %v1357
      %v1372 = vpack.c.bf16 %v1360, %v1359
      %v1373 = vpack.c.bf16 %v1362, %v1361
      %v1374 = vpack.c.bf16 %v1364, %v1363
      %v1375 = vpack.c.bf16 %v1366, %v1365
      %v1376 = vpack.c.bf16 %v1368, %v1367
      %v1385 = vunpack.c.l.b16 %v1369
      %v1386 = vunpack.c.h.b16 %v1369
      %v1387 = vunpack.c.l.b16 %v1370
      %v1388 = vunpack.c.h.b16 %v1370
      %v1389 = vunpack.c.l.b16 %v1371
      %v1390 = vunpack.c.h.b16 %v1371
      %v1391 = vunpack.c.l.b16 %v1372
      %v1392 = vunpack.c.h.b16 %v1372
      %v1393 = vunpack.c.l.b16 %v1373
      %v1394 = vunpack.c.h.b16 %v1373
      %v1395 = vunpack.c.l.b16 %v1374
      %v1396 = vunpack.c.h.b16 %v1374
      %v1397 = vunpack.c.l.b16 %v1375
      %v1398 = vunpack.c.h.b16 %v1375
      %v1399 = vunpack.c.l.b16 %v1376
      %v1400 = vunpack.c.h.b16 %v1376
      %v1401 = vpack.c.b16 %v1389, %v1385
      %v1402 = vpack.c.b16 %v1390, %v1386
      %v1403 = vpack.c.b16 %v1391, %v1387
      %v1404 = vpack.c.b16 %v1392, %v1388
      %v1405 = vpack.c.b16 %v1397, %v1393
      %v1406 = vpack.c.b16 %v1398, %v1394
      %v1407 = vpack.c.b16 %v1399, %v1395
      %v1408 = vpack.c.b16 %v1400, %v1396
      %1409 = vrot.lane.b32.xlu0 %v1401, 19
      %v1410 = vpop.permute.xlu0 %1409
      %1411 = vrot.lane.b32.xlu0 %v1402, 19
      %v1412 = vpop.permute.xlu0 %1411
      %1413 = vrot.lane.b32.xlu0 %v1403, 19
      %v1414 = vpop.permute.xlu0 %1413
      %1415 = vrot.lane.b32.xlu0 %v1404, 19
      %v1416 = vpop.permute.xlu0 %1415
      %1417 = vrot.lane.b32.xlu0 %v1405, 19
      %v1418 = vpop.permute.xlu0 %1417
      %1419 = vrot.lane.b32.xlu0 %v1406, 19
      %v1420 = vpop.permute.xlu0 %1419
      %1421 = vrot.lane.b32.xlu0 %v1407, 19
      %v1422 = vpop.permute.xlu0 %1421
      %1423 = vrot.lane.b32.xlu0 %v1408, 19
      %v1424 = vpop.permute.xlu0 %1423
      %vm1425 = vcmask 154624
      %v1426 = vsel %vm1425, %v1410, %v1412
      %v1427 = vsel %vm1425, %v1412, %v1414
      %v1428 = vsel %vm1425, %v1414, %v1416
      %v1429 = vsel %vm1425, %v1418, %v1420
      %v1430 = vsel %vm1425, %v1420, %v1422
      %v1431 = vsel %vm1425, %v1422, %v1424
      %vm1436 = vcmask 154624
      %v1439 = vsel %vm1436, 0, %v1410
      %v1442 = vsel %vm1436, 0, %v1418
      %vm1444 = vcmask 547840
      %v1446 = vsel %vm1444, %v1428, 0
      %v1449 = vsel %vm1444, %v1431, 0
      %1455 = vrot.lane.b32.xlu0 %v1439, 127
      %v1456 = vpop.permute.xlu0 %1455
      %1457 = vrot.lane.b32.xlu0 %v1426, 127
      %v1458 = vpop.permute.xlu0 %1457
      %1459 = vrot.lane.b32.xlu0 %v1427, 127
      %v1460 = vpop.permute.xlu0 %1459
      %1461 = vrot.lane.b32.xlu0 %v1446, 127
      %v1462 = vpop.permute.xlu0 %1461
      %1463 = vrot.lane.b32.xlu0 %v1442, 127
      %v1464 = vpop.permute.xlu0 %1463
      %1465 = vrot.lane.b32.xlu0 %v1429, 127
      %v1466 = vpop.permute.xlu0 %1465
      %1467 = vrot.lane.b32.xlu0 %v1430, 127
      %v1468 = vpop.permute.xlu0 %1467
      %1469 = vrot.lane.b32.xlu0 %v1449, 127
      %v1470 = vpop.permute.xlu0 %1469
      %vm1471 = vcmask 1039360
      %v1472 = vsel %vm1471, %v1456, %v1458
      %v1473 = vsel %vm1471, %v1458, %v1460
      %v1474 = vsel %vm1471, %v1460, %v1462
      %v1475 = vsel %vm1471, %v1464, %v1466
      %v1476 = vsel %vm1471, %v1466, %v1468
      %v1477 = vsel %vm1471, %v1468, %v1470
      %1486 = vrot.lane.b32.xlu0 %v1439, 126
      %v1487 = vpop.permute.xlu0 %1486
      %1488 = vrot.lane.b32.xlu0 %v1426, 126
      %v1489 = vpop.permute.xlu0 %1488
      %1490 = vrot.lane.b32.xlu0 %v1427, 126
      %v1491 = vpop.permute.xlu0 %1490
      %1492 = vrot.lane.b32.xlu0 %v1446, 126
      %v1493 = vpop.permute.xlu0 %1492
      %1494 = vrot.lane.b32.xlu0 %v1442, 126
      %v1495 = vpop.permute.xlu0 %1494
      %1496 = vrot.lane.b32.xlu0 %v1429, 126
      %v1497 = vpop.permute.xlu0 %1496
      %1498 = vrot.lane.b32.xlu0 %v1430, 126
      %v1499 = vpop.permute.xlu0 %1498
      %1500 = vrot.lane.b32.xlu0 %v1449, 126
      %v1501 = vpop.permute.xlu0 %1500
      %vm1502 = vcmask 1031168
      %v1503 = vsel %vm1502, %v1487, %v1489
      %v1504 = vsel %vm1502, %v1489, %v1491
      %v1505 = vsel %vm1502, %v1491, %v1493
      %v1506 = vsel %vm1502, %v1495, %v1497
      %v1507 = vsel %vm1502, %v1497, %v1499
      %v1508 = vsel %vm1502, %v1499, %v1501
      %v1517 = vld [vmem:[%s4] sm:$0xf]
      %v1518 = vld [vmem:[%s4 + $0x4] sm:$0xf]
      %v1519 = vld [vmem:[%s4 + $0x8] sm:$0xf]
      %v1520 = vld [vmem:[%s4 + $0xc] sm:$0xf]
      %s1521 = scalar_lea.vmem %s4, 16
      %v1522 = vld [vmem:[%s1521] sm:$0xf]
      %v1523 = vld [vmem:[%s1521 + $0x4] sm:$0xf]
      %v1524 = vld [vmem:[%s1521 + $0x8] sm:$0xf]
      %v1525 = vld [vmem:[%s1521 + $0xc] sm:$0xf]
      %v1530 = vunpack.c.l.b16 %v1522
      %v1531 = vunpack.c.l.b16 %v1523
      %v1532 = vunpack.c.l.b16 %v1524
      %v1533 = vunpack.c.l.b16 %v1525
      %v1534 = vpack.c.b16 %v1531, %v1530
      %v1535 = vpack.c.b16 %v1533, %v1532
      %1536 = vrot.lane.b32.xlu0 %v1439, 110
      %v1537 = vpop.permute.xlu0 %1536
      %1538 = vrot.lane.b32.xlu0 %v1426, 110
      %v1539 = vpop.permute.xlu0 %1538
      %1540 = vrot.lane.b32.xlu0 %v1427, 110
      %v1541 = vpop.permute.xlu0 %1540
      %1542 = vrot.lane.b32.xlu0 %v1446, 110
      %v1543 = vpop.permute.xlu0 %1542
      %1544 = vrot.lane.b32.xlu0 %v1442, 110
      %v1545 = vpop.permute.xlu0 %1544
      %1546 = vrot.lane.b32.xlu0 %v1429, 110
      %v1547 = vpop.permute.xlu0 %1546
      %1548 = vrot.lane.b32.xlu0 %v1430, 110
      %v1549 = vpop.permute.xlu0 %1548
      %1550 = vrot.lane.b32.xlu0 %v1449, 110
      %v1551 = vpop.permute.xlu0 %1550
      %1552 = vrot.lane.b32.xlu0 %v1472, 110
      %v1553 = vpop.permute.xlu0 %1552
      %1554 = vrot.lane.b32.xlu0 %v1473, 110
      %v1555 = vpop.permute.xlu0 %1554
      %1556 = vrot.lane.b32.xlu0 %v1474, 110
      %v1557 = vpop.permute.xlu0 %1556
      %1558 = vrot.lane.b32.xlu0 %v1462, 110
      %v1559 = vpop.permute.xlu0 %1558
      %1560 = vrot.lane.b32.xlu0 %v1475, 110
      %v1561 = vpop.permute.xlu0 %1560
      %1562 = vrot.lane.b32.xlu0 %v1476, 110
      %v1563 = vpop.permute.xlu0 %1562
      %1564 = vrot.lane.b32.xlu0 %v1477, 110
      %v1565 = vpop.permute.xlu0 %1564
      %1566 = vrot.lane.b32.xlu0 %v1470, 110
      %v1567 = vpop.permute.xlu0 %1566
      %1568 = vrot.lane.b32.xlu0 %v1503, 110
      %v1569 = vpop.permute.xlu0 %1568
      %1570 = vrot.lane.b32.xlu0 %v1504, 110
      %v1571 = vpop.permute.xlu0 %1570
      %1572 = vrot.lane.b32.xlu0 %v1505, 110
      %v1573 = vpop.permute.xlu0 %1572
      %1574 = vrot.lane.b32.xlu0 %v1493, 110
      %v1575 = vpop.permute.xlu0 %1574
      %1576 = vrot.lane.b32.xlu0 %v1506, 110
      %v1577 = vpop.permute.xlu0 %1576
      %1578 = vrot.lane.b32.xlu0 %v1507, 110
      %v1579 = vpop.permute.xlu0 %1578
      %1580 = vrot.lane.b32.xlu0 %v1508, 110
      %v1581 = vpop.permute.xlu0 %1580
      %1582 = vrot.lane.b32.xlu0 %v1501, 110
      %v1583 = vpop.permute.xlu0 %1582
      %v1584 = vsel %vm865, %v1537, %v1539
      %v1585 = vsel %vm865, %v1539, %v1541
      %v1586 = vsel %vm865, %v1541, %v1543
      %v1587 = vsel %vm865, %v1545, %v1547
      %v1588 = vsel %vm865, %v1547, %v1549
      %v1589 = vsel %vm865, %v1549, %v1551
      %v1590 = vsel %vm865, %v1553, %v1555
      %v1591 = vsel %vm865, %v1555, %v1557
      %v1592 = vsel %vm865, %v1557, %v1559
      %v1593 = vsel %vm865, %v1561, %v1563
      %v1594 = vsel %vm865, %v1563, %v1565
      %v1595 = vsel %vm865, %v1565, %v1567
      %v1596 = vsel %vm865, %v1569, %v1571
      %v1597 = vsel %vm865, %v1571, %v1573
      %v1598 = vsel %vm865, %v1573, %v1575
      %v1599 = vsel %vm865, %v1577, %v1579
      %v1600 = vsel %vm865, %v1579, %v1581
      %v1601 = vsel %vm865, %v1581, %v1583
      %vm1626 = vcmask 785408
      %v1628 = vsel %vm1626, %v1534, 0
      %v1631 = vsel %vm1626, %v1535, 0
      %1633 = vmatpush.bf16.msra.mxu0 0
      %1634 = vmatpush.bf16.msra.mxu0 0
      %1635 = vmatpush.bf16.msra.mxu0 %v1599
      %1636 = vmatpush.bf16.msra.mxu0 %v1596
      %1637 = vmatpush.bf16.msra.mxu0 %v1593
      %1638 = vmatpush.bf16.msra.mxu0 %v1590
      %1639 = vmatpush.bf16.msra.mxu0 %v1587
      %1640 = vmatpush.bf16.msra.mxu0 %v1584
      %1641 = vmatmul.bf16.gmra.mxu0 %v1628
      %v1642 = vpop.f32.mrf.mxu0
      %v1643 = vadd.f32 0.0, %v1642
      %v1644 = vpop.f32.mrf.mxu0
      %v1645 = vadd.f32 0.0, %v1644
      %1646 = vmatmul.bf16.gmra.mxu0 %v1631
      %v1647 = vpop.f32.mrf.mxu0
      %v1648 = vadd.f32 0.0, %v1647
      %v1649 = vpop.f32.mrf.mxu0
      %v1650 = vadd.f32 0.0, %v1649
      %1651 = vdwg.mxu0
      %1652 = vmatpush.bf16.msra.mxu0 0
      %1653 = vmatpush.bf16.msra.mxu0 0
      %1654 = vmatpush.bf16.msra.mxu0 %v1600
      %1655 = vmatpush.bf16.msra.mxu0 %v1597
      %1656 = vmatpush.bf16.msra.mxu0 %v1594
      %1657 = vmatpush.bf16.msra.mxu0 %v1591
      %1658 = vmatpush.bf16.msra.mxu0 %v1588
      %1659 = vmatpush.bf16.msra.mxu0 %v1585
      %1660 = vmatmul.bf16.gmra.mxu0 %v1628
      %v1661 = vpop.f32.mrf.mxu0
      %v1662 = vadd.f32 0.0, %v1661
      %v1663 = vpop.f32.mrf.mxu0
      %v1664 = vadd.f32 0.0, %v1663
      %1665 = vmatmul.bf16.gmra.mxu0 %v1631
      %v1666 = vpop.f32.mrf.mxu0
      %v1667 = vadd.f32 0.0, %v1666
      %v1668 = vpop.f32.mrf.mxu0
      %v1669 = vadd.f32 0.0, %v1668
      %1670 = vdwg.mxu0
      %1671 = vmatpush.bf16.msra.mxu0 0
      %1672 = vmatpush.bf16.msra.mxu0 0
      %1673 = vmatpush.bf16.msra.mxu0 %v1601
      %1674 = vmatpush.bf16.msra.mxu0 %v1598
      %1675 = vmatpush.bf16.msra.mxu0 %v1595
      %1676 = vmatpush.bf16.msra.mxu0 %v1592
      %1677 = vmatpush.bf16.msra.mxu0 %v1589
      %1678 = vmatpush.bf16.msra.mxu0 %v1586
      %1679 = vmatmul.bf16.gmra.mxu0 %v1628
      %v1680 = vpop.f32.mrf.mxu0
      %v1681 = vadd.f32 0.0, %v1680
      %v1682 = vpop.f32.mrf.mxu0
      %v1683 = vadd.f32 0.0, %v1682
      %1684 = vmatmul.bf16.gmra.mxu0 %v1631
      %v1685 = vpop.f32.mrf.mxu0
      %v1686 = vadd.f32 0.0, %v1685
      %v1687 = vpop.f32.mrf.mxu0
      %v1688 = vadd.f32 0.0, %v1687
      %1689 = vdwg.mxu0
      %1690 = vmatpush.bf16.msra.mxu0 0
      %1691 = vmatpush.bf16.msra.mxu0 0
      %1692 = vmatpush.bf16.msra.mxu0 %v1583
      %1693 = vmatpush.bf16.msra.mxu0 %v1575
      %1694 = vmatpush.bf16.msra.mxu0 %v1567
      %1695 = vmatpush.bf16.msra.mxu0 %v1559
      %1696 = vmatpush.bf16.msra.mxu0 %v1551
      %1697 = vmatpush.bf16.msra.mxu0 %v1543
      %1698 = vmatmul.bf16.gmra.mxu0 %v1628
      %v1699 = vpop.f32.mrf.mxu0
      %v1700 = vadd.f32 0.0, %v1699
      %v1701 = vpop.f32.mrf.mxu0
      %v1702 = vadd.f32 0.0, %v1701
      %1703 = vmatmul.bf16.gmra.mxu0 %v1631
      %v1704 = vpop.f32.mrf.mxu0
      %v1705 = vadd.f32 0.0, %v1704
      %v1706 = vpop.f32.mrf.mxu0
      %v1707 = vadd.f32 0.0, %v1706
      %1708 = vdwg.mxu0
      %v1713 = vunpack.c.l.b16 %v1517
      %v1714 = vunpack.c.l.b16 %v1518
      %v1715 = vunpack.c.l.b16 %v1519
      %v1716 = vunpack.c.l.b16 %v1520
      %v1717 = vpack.c.b16 %v1714, %v1713
      %v1718 = vpack.c.b16 %v1716, %v1715
      %v1720 = vsel %vm1626, %v1717, 0
      %v1723 = vsel %vm1626, %v1718, 0
      %1725 = vmatpush.bf16.msra.mxu0 0
      %1726 = vmatpush.bf16.msra.mxu0 0
      %1727 = vmatpush.bf16.msra.mxu0 %v1506
      %1728 = vmatpush.bf16.msra.mxu0 %v1503
      %1729 = vmatpush.bf16.msra.mxu0 %v1475
      %1730 = vmatpush.bf16.msra.mxu0 %v1472
      %1731 = vmatpush.bf16.msra.mxu0 %v1442
      %1732 = vmatpush.bf16.msra.mxu0 %v1439
      %1733 = vmatmul.bf16.gmra.mxu0 %v1720
      %v1734 = vpop.f32.mrf.mxu0
      %v1735 = vadd.f32 %v1643, %v1734
      %v1736 = vpop.f32.mrf.mxu0
      %v1737 = vadd.f32 %v1645, %v1736
      %1738 = vmatmul.bf16.gmra.mxu0 %v1723
      %v1739 = vpop.f32.mrf.mxu0
      %v1740 = vadd.f32 %v1648, %v1739
      %v1741 = vpop.f32.mrf.mxu0
      %v1742 = vadd.f32 %v1650, %v1741
      %1743 = vdwg.mxu0
      %1744 = vmatpush.bf16.msra.mxu0 0
      %1745 = vmatpush.bf16.msra.mxu0 0
      %1746 = vmatpush.bf16.msra.mxu0 %v1507
      %1747 = vmatpush.bf16.msra.mxu0 %v1504
      %1748 = vmatpush.bf16.msra.mxu0 %v1476
      %1749 = vmatpush.bf16.msra.mxu0 %v1473
      %1750 = vmatpush.bf16.msra.mxu0 %v1429
      %1751 = vmatpush.bf16.msra.mxu0 %v1426
      %1752 = vmatmul.bf16.gmra.mxu0 %v1720
      %v1753 = vpop.f32.mrf.mxu0
      %v1754 = vadd.f32 %v1662, %v1753
      %v1755 = vpop.f32.mrf.mxu0
      %v1756 = vadd.f32 %v1664, %v1755
      %1757 = vmatmul.bf16.gmra.mxu0 %v1723
      %v1758 = vpop.f32.mrf.mxu0
      %v1759 = vadd.f32 %v1667, %v1758
      %v1760 = vpop.f32.mrf.mxu0
      %v1761 = vadd.f32 %v1669, %v1760
      %1762 = vdwg.mxu0
      %1763 = vmatpush.bf16.msra.mxu0 0
      %1764 = vmatpush.bf16.msra.mxu0 0
      %1765 = vmatpush.bf16.msra.mxu0 %v1508
      %1766 = vmatpush.bf16.msra.mxu0 %v1505
      %1767 = vmatpush.bf16.msra.mxu0 %v1477
      %1768 = vmatpush.bf16.msra.mxu0 %v1474
      %1769 = vmatpush.bf16.msra.mxu0 %v1430
      %1770 = vmatpush.bf16.msra.mxu0 %v1427
      %1771 = vmatmul.bf16.gmra.mxu0 %v1720
      %v1772 = vpop.f32.mrf.mxu0
      %v1773 = vadd.f32 %v1681, %v1772
      %v1774 = vpop.f32.mrf.mxu0
      %v1775 = vadd.f32 %v1683, %v1774
      %1776 = vmatmul.bf16.gmra.mxu0 %v1723
      %v1777 = vpop.f32.mrf.mxu0
      %v1778 = vadd.f32 %v1686, %v1777
      %v1779 = vpop.f32.mrf.mxu0
      %v1780 = vadd.f32 %v1688, %v1779
      %1781 = vdwg.mxu0
      %1782 = vmatpush.bf16.msra.mxu0 0
      %1783 = vmatpush.bf16.msra.mxu0 0
      %1784 = vmatpush.bf16.msra.mxu0 %v1501
      %1785 = vmatpush.bf16.msra.mxu0 %v1493
      %1786 = vmatpush.bf16.msra.mxu0 %v1470
      %1787 = vmatpush.bf16.msra.mxu0 %v1462
      %1788 = vmatpush.bf16.msra.mxu0 %v1449
      %1789 = vmatpush.bf16.msra.mxu0 %v1446
      %1790 = vmatmul.bf16.gmra.mxu0 %v1720
      %v1791 = vpop.f32.mrf.mxu0
      %v1792 = vadd.f32 %v1700, %v1791
      %v1793 = vpop.f32.mrf.mxu0
      %v1794 = vadd.f32 %v1702, %v1793
      %1795 = vmatmul.bf16.gmra.mxu0 %v1723
      %v1796 = vpop.f32.mrf.mxu0
      %v1797 = vadd.f32 %v1705, %v1796
      %v1798 = vpop.f32.mrf.mxu0
      %v1799 = vadd.f32 %v1707, %v1798
      %1800 = vdwg.mxu0
      %s1801 = scalar_lea.vmem %s4, 32
      %v1802 = vld [vmem:[%s1801] sm:$0xf]
      %v1803 = vld [vmem:[%s1801 + $0x4] sm:$0xf]
      %v1804 = vld [vmem:[%s1801 + $0x8] sm:$0xf]
      %v1805 = vld [vmem:[%s1801 + $0xc] sm:$0xf]
      %v1810 = vunpack.c.l.b16 %v1802
      %v1811 = vunpack.c.l.b16 %v1803
      %v1812 = vunpack.c.l.b16 %v1804
      %v1813 = vunpack.c.l.b16 %v1805
      %v1814 = vpack.c.b16 %v1811, %v1810
      %v1815 = vpack.c.b16 %v1813, %v1812
      %1816 = vrot.lane.b32.xlu0 %v1439, 92
      %v1817 = vpop.permute.xlu0 %1816
      %1818 = vrot.lane.b32.xlu0 %v1426, 92
      %v1819 = vpop.permute.xlu0 %1818
      %1820 = vrot.lane.b32.xlu0 %v1427, 92
      %v1821 = vpop.permute.xlu0 %1820
      %1822 = vrot.lane.b32.xlu0 %v1446, 92
      %v1823 = vpop.permute.xlu0 %1822
      %1824 = vrot.lane.b32.xlu0 %v1442, 92
      %v1825 = vpop.permute.xlu0 %1824
      %1826 = vrot.lane.b32.xlu0 %v1429, 92
      %v1827 = vpop.permute.xlu0 %1826
      %1828 = vrot.lane.b32.xlu0 %v1430, 92
      %v1829 = vpop.permute.xlu0 %1828
      %1830 = vrot.lane.b32.xlu0 %v1449, 92
      %v1831 = vpop.permute.xlu0 %1830
      %1832 = vrot.lane.b32.xlu0 %v1472, 92
      %v1833 = vpop.permute.xlu0 %1832
      %1834 = vrot.lane.b32.xlu0 %v1473, 92
      %v1835 = vpop.permute.xlu0 %1834
      %1836 = vrot.lane.b32.xlu0 %v1474, 92
      %v1837 = vpop.permute.xlu0 %1836
      %1838 = vrot.lane.b32.xlu0 %v1462, 92
      %v1839 = vpop.permute.xlu0 %1838
      %1840 = vrot.lane.b32.xlu0 %v1475, 92
      %v1841 = vpop.permute.xlu0 %1840
      %1842 = vrot.lane.b32.xlu0 %v1476, 92
      %v1843 = vpop.permute.xlu0 %1842
      %1844 = vrot.lane.b32.xlu0 %v1477, 92
      %v1845 = vpop.permute.xlu0 %1844
      %1846 = vrot.lane.b32.xlu0 %v1470, 92
      %v1847 = vpop.permute.xlu0 %1846
      %1848 = vrot.lane.b32.xlu0 %v1503, 92
      %v1849 = vpop.permute.xlu0 %1848
      %1850 = vrot.lane.b32.xlu0 %v1504, 92
      %v1851 = vpop.permute.xlu0 %1850
      %1852 = vrot.lane.b32.xlu0 %v1505, 92
      %v1853 = vpop.permute.xlu0 %1852
      %1854 = vrot.lane.b32.xlu0 %v1493, 92
      %v1855 = vpop.permute.xlu0 %1854
      %1856 = vrot.lane.b32.xlu0 %v1506, 92
      %v1857 = vpop.permute.xlu0 %1856
      %1858 = vrot.lane.b32.xlu0 %v1507, 92
      %v1859 = vpop.permute.xlu0 %1858
      %1860 = vrot.lane.b32.xlu0 %v1508, 92
      %v1861 = vpop.permute.xlu0 %1860
      %1862 = vrot.lane.b32.xlu0 %v1501, 92
      %v1863 = vpop.permute.xlu0 %1862
      %v1864 = vsel %vm1174, %v1817, %v1819
      %v1865 = vsel %vm1174, %v1819, %v1821
      %v1866 = vsel %vm1174, %v1821, %v1823
      %v1867 = vsel %vm1174, %v1825, %v1827
      %v1868 = vsel %vm1174, %v1827, %v1829
      %v1869 = vsel %vm1174, %v1829, %v1831
      %v1870 = vsel %vm1174, %v1833, %v1835
      %v1871 = vsel %vm1174, %v1835, %v1837
      %v1872 = vsel %vm1174, %v1837, %v1839
      %v1873 = vsel %vm1174, %v1841, %v1843
      %v1874 = vsel %vm1174, %v1843, %v1845
      %v1875 = vsel %vm1174, %v1845, %v1847
      %v1876 = vsel %vm1174, %v1849, %v1851
      %v1877 = vsel %vm1174, %v1851, %v1853
      %v1878 = vsel %vm1174, %v1853, %v1855
      %v1879 = vsel %vm1174, %v1857, %v1859
      %v1880 = vsel %vm1174, %v1859, %v1861
      %v1881 = vsel %vm1174, %v1861, %v1863
      %v1907 = vsel %vm1626, %v1814, 0
      %v1910 = vsel %vm1626, %v1815, 0
      %1912 = vmatpush.bf16.msra.mxu0 0
      %1913 = vmatpush.bf16.msra.mxu0 0
      %1914 = vmatpush.bf16.msra.mxu0 %v1879
      %1915 = vmatpush.bf16.msra.mxu0 %v1876
      %1916 = vmatpush.bf16.msra.mxu0 %v1873
      %1917 = vmatpush.bf16.msra.mxu0 %v1870
      %1918 = vmatpush.bf16.msra.mxu0 %v1867
      %1919 = vmatpush.bf16.msra.mxu0 %v1864
      %1920 = vmatmul.bf16.gmra.mxu0 %v1907
      %v1921 = vpop.f32.mrf.mxu0
      %v1922 = vadd.f32 0.0, %v1921
      %v1923 = vpop.f32.mrf.mxu0
      %v1924 = vadd.f32 0.0, %v1923
      %1925 = vmatmul.bf16.gmra.mxu0 %v1910
      %v1926 = vpop.f32.mrf.mxu0
      %v1927 = vadd.f32 0.0, %v1926
      %v1928 = vpop.f32.mrf.mxu0
      %v1929 = vadd.f32 0.0, %v1928
      %1930 = vdwg.mxu0
      %1931 = vmatpush.bf16.msra.mxu0 0
      %1932 = vmatpush.bf16.msra.mxu0 0
      %1933 = vmatpush.bf16.msra.mxu0 %v1880
      %1934 = vmatpush.bf16.msra.mxu0 %v1877
      %1935 = vmatpush.bf16.msra.mxu0 %v1874
      %1936 = vmatpush.bf16.msra.mxu0 %v1871
      %1937 = vmatpush.bf16.msra.mxu0 %v1868
      %1938 = vmatpush.bf16.msra.mxu0 %v1865
      %1939 = vmatmul.bf16.gmra.mxu0 %v1907
      %v1940 = vpop.f32.mrf.mxu0
      %v1941 = vadd.f32 0.0, %v1940
      %v1942 = vpop.f32.mrf.mxu0
      %v1943 = vadd.f32 0.0, %v1942
      %1944 = vmatmul.bf16.gmra.mxu0 %v1910
      %v1945 = vpop.f32.mrf.mxu0
      %v1946 = vadd.f32 0.0, %v1945
      %v1947 = vpop.f32.mrf.mxu0
      %v1948 = vadd.f32 0.0, %v1947
      %1949 = vdwg.mxu0
      %1950 = vmatpush.bf16.msra.mxu0 0
      %1951 = vmatpush.bf16.msra.mxu0 0
      %1952 = vmatpush.bf16.msra.mxu0 %v1881
      %1953 = vmatpush.bf16.msra.mxu0 %v1878
      %1954 = vmatpush.bf16.msra.mxu0 %v1875
      %1955 = vmatpush.bf16.msra.mxu0 %v1872
      %1956 = vmatpush.bf16.msra.mxu0 %v1869
      %1957 = vmatpush.bf16.msra.mxu0 %v1866
      %1958 = vmatmul.bf16.gmra.mxu0 %v1907
      %v1959 = vpop.f32.mrf.mxu0
      %v1960 = vadd.f32 0.0, %v1959
      %v1961 = vpop.f32.mrf.mxu0
      %v1962 = vadd.f32 0.0, %v1961
      %1963 = vmatmul.bf16.gmra.mxu0 %v1910
      %v1964 = vpop.f32.mrf.mxu0
      %v1965 = vadd.f32 0.0, %v1964
      %v1966 = vpop.f32.mrf.mxu0
      %v1967 = vadd.f32 0.0, %v1966
      %1968 = vdwg.mxu0
      %1969 = vmatpush.bf16.msra.mxu0 0
      %1970 = vmatpush.bf16.msra.mxu0 0
      %1971 = vmatpush.bf16.msra.mxu0 %v1863
      %1972 = vmatpush.bf16.msra.mxu0 %v1855
      %1973 = vmatpush.bf16.msra.mxu0 %v1847
      %1974 = vmatpush.bf16.msra.mxu0 %v1839
      %1975 = vmatpush.bf16.msra.mxu0 %v1831
      %1976 = vmatpush.bf16.msra.mxu0 %v1823
      %1977 = vmatmul.bf16.gmra.mxu0 %v1907
      %v1978 = vpop.f32.mrf.mxu0
      %v1979 = vadd.f32 0.0, %v1978
      %v1980 = vpop.f32.mrf.mxu0
      %v1981 = vadd.f32 0.0, %v1980
      %1982 = vmatmul.bf16.gmra.mxu0 %v1910
      %v1983 = vpop.f32.mrf.mxu0
      %v1984 = vadd.f32 0.0, %v1983
      %v1985 = vpop.f32.mrf.mxu0
      %v1986 = vadd.f32 0.0, %v1985
      %1987 = vdwg.mxu0
      %v1988 = vadd.f32 %v1735, %v1922
      %v1989 = vadd.f32 %v1754, %v1941
      %v1990 = vadd.f32 %v1773, %v1960
      %v1991 = vadd.f32 %v1792, %v1979
      %v1992 = vadd.f32 %v1737, %v1924
      %v1993 = vadd.f32 %v1756, %v1943
      %v1994 = vadd.f32 %v1775, %v1962
      %v1995 = vadd.f32 %v1794, %v1981
      %v1996 = vadd.f32 %v1740, %v1927
      %v1997 = vadd.f32 %v1759, %v1946
      %v1998 = vadd.f32 %v1778, %v1965
      %v1999 = vadd.f32 %v1797, %v1984
      %v2000 = vadd.f32 %v1742, %v1929
      %v2001 = vadd.f32 %v1761, %v1948
      %v2002 = vadd.f32 %v1780, %v1967
      %v2003 = vadd.f32 %v1799, %v1986
      %v2004 = vld [vmem:[%s5] sm:$0xff]
      %v2005 = vld [vmem:[%s5 + $0x8] sm:$0xff]
      %v2006 = vld [vmem:[%s5 + $0x10] sm:$0xff]
      %v2007 = vld [vmem:[%s5 + $0x18] sm:$0xff]
      %2009 = vset.pattern.permute.xlu0 0
      %2010 = vperm.xlu0 %2009, %v2004
      %v2011 = vpop.permute.xlu0 %2010
      %2014 = vset.pattern.permute.xlu0 0
      %2015 = vperm.xlu0 %2014, %v2005
      %v2016 = vpop.permute.xlu0 %2015
      %2019 = vset.pattern.permute.xlu0 0
      %2020 = vperm.xlu0 %2019, %v2006
      %v2021 = vpop.permute.xlu0 %2020
      %2024 = vset.pattern.permute.xlu0 0
      %2025 = vperm.xlu0 %2024, %v2007
      %v2026 = vpop.permute.xlu0 %2025
      %v2028 = vadd.f32 %v1988, %v2011
      %v2029 = vadd.f32 %v1989, %v2011
      %v2030 = vadd.f32 %v1990, %v2011
      %v2031 = vadd.f32 %v1991, %v2011
      %v2032 = vadd.f32 %v1992, %v2016
      %v2033 = vadd.f32 %v1993, %v2016
      %v2034 = vadd.f32 %v1994, %v2016
      %v2035 = vadd.f32 %v1995, %v2016
      %v2036 = vadd.f32 %v1996, %v2021
      %v2037 = vadd.f32 %v1997, %v2021
      %v2038 = vadd.f32 %v1998, %v2021
      %v2039 = vadd.f32 %v1999, %v2021
      %v2040 = vadd.f32 %v2000, %v2026
      %v2041 = vadd.f32 %v2001, %v2026
      %v2042 = vadd.f32 %v2002, %v2026
      %v2043 = vadd.f32 %v2003, %v2026
      %v2044 = vmax.f32 %v2028, 0.0
      %v2045 = vmax.f32 %v2029, 0.0
      %v2046 = vmax.f32 %v2030, 0.0
      %v2047 = vmax.f32 %v2031, 0.0
      %v2048 = vmax.f32 %v2032, 0.0
      %v2049 = vmax.f32 %v2033, 0.0
      %v2050 = vmax.f32 %v2034, 0.0
      %v2051 = vmax.f32 %v2035, 0.0
      %v2052 = vmax.f32 %v2036, 0.0
      %v2053 = vmax.f32 %v2037, 0.0
      %v2054 = vmax.f32 %v2038, 0.0
      %v2055 = vmax.f32 %v2039, 0.0
      %v2056 = vmax.f32 %v2040, 0.0
      %v2057 = vmax.f32 %v2041, 0.0
      %v2058 = vmax.f32 %v2042, 0.0
      %v2059 = vmax.f32 %v2043, 0.0
      %v2060 = vmul.f32 %v2044, %v1345
      %v2061 = vmul.f32 %v2045, %v1346
      %v2062 = vmul.f32 %v2046, %v1347
      %v2063 = vmul.f32 %v2047, %v1348
      %v2064 = vmul.f32 %v2048, %v1345
      %v2065 = vmul.f32 %v2049, %v1346
      %v2066 = vmul.f32 %v2050, %v1347
      %v2067 = vmul.f32 %v2051, %v1348
      %v2068 = vmul.f32 %v2052, %v1345
      %v2069 = vmul.f32 %v2053, %v1346
      %v2070 = vmul.f32 %v2054, %v1347
      %v2071 = vmul.f32 %v2055, %v1348
      %v2072 = vmul.f32 %v2056, %v1345
      %v2073 = vmul.f32 %v2057, %v1346
      %v2074 = vmul.f32 %v2058, %v1347
      %v2075 = vmul.f32 %v2059, %v1348
      %v2076 = vpack.c.bf16 %v2061, %v2060
      %v2077 = vpack.c.bf16 %v2063, %v2062
      %v2078 = vpack.c.bf16 %v2065, %v2064
      %v2079 = vpack.c.bf16 %v2067, %v2066
      %v2080 = vpack.c.bf16 %v2069, %v2068
      %v2081 = vpack.c.bf16 %v2071, %v2070
      %v2082 = vpack.c.bf16 %v2073, %v2072
      %v2083 = vpack.c.bf16 %v2075, %v2074
      %v2092 = vunpack.c.l.b16 %v2076
      %v2093 = vunpack.c.h.b16 %v2076
      %v2094 = vunpack.c.l.b16 %v2077
      %v2095 = vunpack.c.h.b16 %v2077
      %v2096 = vunpack.c.l.b16 %v2078
      %v2097 = vunpack.c.h.b16 %v2078
      %v2098 = vunpack.c.l.b16 %v2079
      %v2099 = vunpack.c.h.b16 %v2079
      %v2100 = vunpack.c.l.b16 %v2080
      %v2101 = vunpack.c.h.b16 %v2080
      %v2102 = vunpack.c.l.b16 %v2081
      %v2103 = vunpack.c.h.b16 %v2081
      %v2104 = vunpack.c.l.b16 %v2082
      %v2105 = vunpack.c.h.b16 %v2082
      %v2106 = vunpack.c.l.b16 %v2083
      %v2107 = vunpack.c.h.b16 %v2083
      %v2108 = vpack.c.b16 %v2096, %v2092
      %v2109 = vpack.c.b16 %v2097, %v2093
      %v2110 = vpack.c.b16 %v2098, %v2094
      %v2111 = vpack.c.b16 %v2099, %v2095
      %v2112 = vpack.c.b16 %v2104, %v2100
      %v2113 = vpack.c.b16 %v2105, %v2101
      %v2114 = vpack.c.b16 %v2106, %v2102
      %v2115 = vpack.c.b16 %v2107, %v2103
      %2116 = vrot.lane.b32.xlu0 %v2108, 19
      %v2117 = vpop.permute.xlu0 %2116
      %2118 = vrot.lane.b32.xlu0 %v2109, 19
      %v2119 = vpop.permute.xlu0 %2118
      %2120 = vrot.lane.b32.xlu0 %v2110, 19
      %v2121 = vpop.permute.xlu0 %2120
      %2122 = vrot.lane.b32.xlu0 %v2111, 19
      %v2123 = vpop.permute.xlu0 %2122
      %2124 = vrot.lane.b32.xlu0 %v2112, 19
      %v2125 = vpop.permute.xlu0 %2124
      %2126 = vrot.lane.b32.xlu0 %v2113, 19
      %v2127 = vpop.permute.xlu0 %2126
      %2128 = vrot.lane.b32.xlu0 %v2114, 19
      %v2129 = vpop.permute.xlu0 %2128
      %2130 = vrot.lane.b32.xlu0 %v2115, 19
      %v2131 = vpop.permute.xlu0 %2130
      %v2132 = vsel %vm1425, %v2117, %v2119
      %v2133 = vsel %vm1425, %v2119, %v2121
      %v2134 = vsel %vm1425, %v2121, %v2123
      %v2135 = vsel %vm1425, %v2125, %v2127
      %v2136 = vsel %vm1425, %v2127, %v2129
      %v2137 = vsel %vm1425, %v2129, %v2131
      %v2143 = vsel %vm1436, 0, %v2117
      %v2146 = vsel %vm1436, 0, %v2125
      %v2149 = vsel %vm1444, %v2134, 0
      %v2152 = vsel %vm1444, %v2137, 0
      %2158 = vrot.lane.b32.xlu0 %v2143, 127
      %v2159 = vpop.permute.xlu0 %2158
      %2160 = vrot.lane.b32.xlu0 %v2132, 127
      %v2161 = vpop.permute.xlu0 %2160
      %2162 = vrot.lane.b32.xlu0 %v2133, 127
      %v2163 = vpop.permute.xlu0 %2162
      %2164 = vrot.lane.b32.xlu0 %v2149, 127
      %v2165 = vpop.permute.xlu0 %2164
      %2166 = vrot.lane.b32.xlu0 %v2146, 127
      %v2167 = vpop.permute.xlu0 %2166
      %2168 = vrot.lane.b32.xlu0 %v2135, 127
      %v2169 = vpop.permute.xlu0 %2168
      %2170 = vrot.lane.b32.xlu0 %v2136, 127
      %v2171 = vpop.permute.xlu0 %2170
      %2172 = vrot.lane.b32.xlu0 %v2152, 127
      %v2173 = vpop.permute.xlu0 %2172
      %v2174 = vsel %vm1471, %v2159, %v2161
      %v2175 = vsel %vm1471, %v2161, %v2163
      %v2176 = vsel %vm1471, %v2163, %v2165
      %v2177 = vsel %vm1471, %v2167, %v2169
      %v2178 = vsel %vm1471, %v2169, %v2171
      %v2179 = vsel %vm1471, %v2171, %v2173
      %2188 = vrot.lane.b32.xlu0 %v2143, 126
      %v2189 = vpop.permute.xlu0 %2188
      %2190 = vrot.lane.b32.xlu0 %v2132, 126
      %v2191 = vpop.permute.xlu0 %2190
      %2192 = vrot.lane.b32.xlu0 %v2133, 126
      %v2193 = vpop.permute.xlu0 %2192
      %2194 = vrot.lane.b32.xlu0 %v2149, 126
      %v2195 = vpop.permute.xlu0 %2194
      %2196 = vrot.lane.b32.xlu0 %v2146, 126
      %v2197 = vpop.permute.xlu0 %2196
      %2198 = vrot.lane.b32.xlu0 %v2135, 126
      %v2199 = vpop.permute.xlu0 %2198
      %2200 = vrot.lane.b32.xlu0 %v2136, 126
      %v2201 = vpop.permute.xlu0 %2200
      %2202 = vrot.lane.b32.xlu0 %v2152, 126
      %v2203 = vpop.permute.xlu0 %2202
      %v2204 = vsel %vm1502, %v2189, %v2191
      %v2205 = vsel %vm1502, %v2191, %v2193
      %v2206 = vsel %vm1502, %v2193, %v2195
      %v2207 = vsel %vm1502, %v2197, %v2199
      %v2208 = vsel %vm1502, %v2199, %v2201
      %v2209 = vsel %vm1502, %v2201, %v2203
      %v2218 = vld [vmem:[%s6] sm:$0xf]
      %v2219 = vld [vmem:[%s6 + $0x4] sm:$0xf]
      %v2220 = vld [vmem:[%s6 + $0x8] sm:$0xf]
      %v2221 = vld [vmem:[%s6 + $0xc] sm:$0xf]
      %s2222 = scalar_lea.vmem %s6, 16
      %v2223 = vld [vmem:[%s2222] sm:$0xf]
      %v2224 = vld [vmem:[%s2222 + $0x4] sm:$0xf]
      %v2225 = vld [vmem:[%s2222 + $0x8] sm:$0xf]
      %v2226 = vld [vmem:[%s2222 + $0xc] sm:$0xf]
      %v2231 = vunpack.c.l.b16 %v2223
      %v2232 = vunpack.c.l.b16 %v2224
      %v2233 = vunpack.c.l.b16 %v2225
      %v2234 = vunpack.c.l.b16 %v2226
      %v2235 = vpack.c.b16 %v2232, %v2231
      %v2236 = vpack.c.b16 %v2234, %v2233
      %2237 = vrot.lane.b32.xlu0 %v2143, 110
      %v2238 = vpop.permute.xlu0 %2237
      %2239 = vrot.lane.b32.xlu0 %v2132, 110
      %v2240 = vpop.permute.xlu0 %2239
      %2241 = vrot.lane.b32.xlu0 %v2133, 110
      %v2242 = vpop.permute.xlu0 %2241
      %2243 = vrot.lane.b32.xlu0 %v2149, 110
      %v2244 = vpop.permute.xlu0 %2243
      %2245 = vrot.lane.b32.xlu0 %v2146, 110
      %v2246 = vpop.permute.xlu0 %2245
      %2247 = vrot.lane.b32.xlu0 %v2135, 110
      %v2248 = vpop.permute.xlu0 %2247
      %2249 = vrot.lane.b32.xlu0 %v2136, 110
      %v2250 = vpop.permute.xlu0 %2249
      %2251 = vrot.lane.b32.xlu0 %v2152, 110
      %v2252 = vpop.permute.xlu0 %2251
      %2253 = vrot.lane.b32.xlu0 %v2174, 110
      %v2254 = vpop.permute.xlu0 %2253
      %2255 = vrot.lane.b32.xlu0 %v2175, 110
      %v2256 = vpop.permute.xlu0 %2255
      %2257 = vrot.lane.b32.xlu0 %v2176, 110
      %v2258 = vpop.permute.xlu0 %2257
      %2259 = vrot.lane.b32.xlu0 %v2165, 110
      %v2260 = vpop.permute.xlu0 %2259
      %2261 = vrot.lane.b32.xlu0 %v2177, 110
      %v2262 = vpop.permute.xlu0 %2261
      %2263 = vrot.lane.b32.xlu0 %v2178, 110
      %v2264 = vpop.permute.xlu0 %2263
      %2265 = vrot.lane.b32.xlu0 %v2179, 110
      %v2266 = vpop.permute.xlu0 %2265
      %2267 = vrot.lane.b32.xlu0 %v2173, 110
      %v2268 = vpop.permute.xlu0 %2267
      %2269 = vrot.lane.b32.xlu0 %v2204, 110
      %v2270 = vpop.permute.xlu0 %2269
      %2271 = vrot.lane.b32.xlu0 %v2205, 110
      %v2272 = vpop.permute.xlu0 %2271
      %2273 = vrot.lane.b32.xlu0 %v2206, 110
      %v2274 = vpop.permute.xlu0 %2273
      %2275 = vrot.lane.b32.xlu0 %v2195, 110
      %v2276 = vpop.permute.xlu0 %2275
      %2277 = vrot.lane.b32.xlu0 %v2207, 110
      %v2278 = vpop.permute.xlu0 %2277
      %2279 = vrot.lane.b32.xlu0 %v2208, 110
      %v2280 = vpop.permute.xlu0 %2279
      %2281 = vrot.lane.b32.xlu0 %v2209, 110
      %v2282 = vpop.permute.xlu0 %2281
      %2283 = vrot.lane.b32.xlu0 %v2203, 110
      %v2284 = vpop.permute.xlu0 %2283
      %v2285 = vsel %vm865, %v2238, %v2240
      %v2286 = vsel %vm865, %v2240, %v2242
      %v2287 = vsel %vm865, %v2242, %v2244
      %v2288 = vsel %vm865, %v2246, %v2248
      %v2289 = vsel %vm865, %v2248, %v2250
      %v2290 = vsel %vm865, %v2250, %v2252
      %v2291 = vsel %vm865, %v2254, %v2256
      %v2292 = vsel %vm865, %v2256, %v2258
      %v2293 = vsel %vm865, %v2258, %v2260
      %v2294 = vsel %vm865, %v2262, %v2264
      %v2295 = vsel %vm865, %v2264, %v2266
      %v2296 = vsel %vm865, %v2266, %v2268
      %v2297 = vsel %vm865, %v2270, %v2272
      %v2298 = vsel %vm865, %v2272, %v2274
      %v2299 = vsel %vm865, %v2274, %v2276
      %v2300 = vsel %vm865, %v2278, %v2280
      %v2301 = vsel %vm865, %v2280, %v2282
      %v2302 = vsel %vm865, %v2282, %v2284
      %v2328 = vsel %vm1626, %v2235, 0
      %v2331 = vsel %vm1626, %v2236, 0
      %2333 = vmatpush.bf16.msra.mxu0 0
      %2334 = vmatpush.bf16.msra.mxu0 0
      %2335 = vmatpush.bf16.msra.mxu0 %v2300
      %2336 = vmatpush.bf16.msra.mxu0 %v2297
      %2337 = vmatpush.bf16.msra.mxu0 %v2294
      %2338 = vmatpush.bf16.msra.mxu0 %v2291
      %2339 = vmatpush.bf16.msra.mxu0 %v2288
      %2340 = vmatpush.bf16.msra.mxu0 %v2285
      %2341 = vmatmul.bf16.gmra.mxu0 %v2328
      %v2342 = vpop.f32.mrf.mxu0
      %v2343 = vadd.f32 0.0, %v2342
      %v2344 = vpop.f32.mrf.mxu0
      %v2345 = vadd.f32 0.0, %v2344
      %2346 = vmatmul.bf16.gmra.mxu0 %v2331
      %v2347 = vpop.f32.mrf.mxu0
      %v2348 = vadd.f32 0.0, %v2347
      %v2349 = vpop.f32.mrf.mxu0
      %v2350 = vadd.f32 0.0, %v2349
      %2351 = vdwg.mxu0
      %2352 = vmatpush.bf16.msra.mxu0 0
      %2353 = vmatpush.bf16.msra.mxu0 0
      %2354 = vmatpush.bf16.msra.mxu0 %v2301
      %2355 = vmatpush.bf16.msra.mxu0 %v2298
      %2356 = vmatpush.bf16.msra.mxu0 %v2295
      %2357 = vmatpush.bf16.msra.mxu0 %v2292
      %2358 = vmatpush.bf16.msra.mxu0 %v2289
      %2359 = vmatpush.bf16.msra.mxu0 %v2286
      %2360 = vmatmul.bf16.gmra.mxu0 %v2328
      %v2361 = vpop.f32.mrf.mxu0
      %v2362 = vadd.f32 0.0, %v2361
      %v2363 = vpop.f32.mrf.mxu0
      %v2364 = vadd.f32 0.0, %v2363
      %2365 = vmatmul.bf16.gmra.mxu0 %v2331
      %v2366 = vpop.f32.mrf.mxu0
      %v2367 = vadd.f32 0.0, %v2366
      %v2368 = vpop.f32.mrf.mxu0
      %v2369 = vadd.f32 0.0, %v2368
      %2370 = vdwg.mxu0
      %2371 = vmatpush.bf16.msra.mxu0 0
      %2372 = vmatpush.bf16.msra.mxu0 0
      %2373 = vmatpush.bf16.msra.mxu0 %v2302
      %2374 = vmatpush.bf16.msra.mxu0 %v2299
      %2375 = vmatpush.bf16.msra.mxu0 %v2296
      %2376 = vmatpush.bf16.msra.mxu0 %v2293
      %2377 = vmatpush.bf16.msra.mxu0 %v2290
      %2378 = vmatpush.bf16.msra.mxu0 %v2287
      %2379 = vmatmul.bf16.gmra.mxu0 %v2328
      %v2380 = vpop.f32.mrf.mxu0
      %v2381 = vadd.f32 0.0, %v2380
      %v2382 = vpop.f32.mrf.mxu0
      %v2383 = vadd.f32 0.0, %v2382
      %2384 = vmatmul.bf16.gmra.mxu0 %v2331
      %v2385 = vpop.f32.mrf.mxu0
      %v2386 = vadd.f32 0.0, %v2385
      %v2387 = vpop.f32.mrf.mxu0
      %v2388 = vadd.f32 0.0, %v2387
      %2389 = vdwg.mxu0
      %2390 = vmatpush.bf16.msra.mxu0 0
      %2391 = vmatpush.bf16.msra.mxu0 0
      %2392 = vmatpush.bf16.msra.mxu0 %v2284
      %2393 = vmatpush.bf16.msra.mxu0 %v2276
      %2394 = vmatpush.bf16.msra.mxu0 %v2268
      %2395 = vmatpush.bf16.msra.mxu0 %v2260
      %2396 = vmatpush.bf16.msra.mxu0 %v2252
      %2397 = vmatpush.bf16.msra.mxu0 %v2244
      %2398 = vmatmul.bf16.gmra.mxu0 %v2328
      %v2399 = vpop.f32.mrf.mxu0
      %v2400 = vadd.f32 0.0, %v2399
      %v2401 = vpop.f32.mrf.mxu0
      %v2402 = vadd.f32 0.0, %v2401
      %2403 = vmatmul.bf16.gmra.mxu0 %v2331
      %v2404 = vpop.f32.mrf.mxu0
      %v2405 = vadd.f32 0.0, %v2404
      %v2406 = vpop.f32.mrf.mxu0
      %v2407 = vadd.f32 0.0, %v2406
      %2408 = vdwg.mxu0
      %v2413 = vunpack.c.l.b16 %v2218
      %v2414 = vunpack.c.l.b16 %v2219
      %v2415 = vunpack.c.l.b16 %v2220
      %v2416 = vunpack.c.l.b16 %v2221
      %v2417 = vpack.c.b16 %v2414, %v2413
      %v2418 = vpack.c.b16 %v2416, %v2415
      %v2420 = vsel %vm1626, %v2417, 0
      %v2423 = vsel %vm1626, %v2418, 0
      %2425 = vmatpush.bf16.msra.mxu0 0
      %2426 = vmatpush.bf16.msra.mxu0 0
      %2427 = vmatpush.bf16.msra.mxu0 %v2207
      %2428 = vmatpush.bf16.msra.mxu0 %v2204
      %2429 = vmatpush.bf16.msra.mxu0 %v2177
      %2430 = vmatpush.bf16.msra.mxu0 %v2174
      %2431 = vmatpush.bf16.msra.mxu0 %v2146
      %2432 = vmatpush.bf16.msra.mxu0 %v2143
      %2433 = vmatmul.bf16.gmra.mxu0 %v2420
      %v2434 = vpop.f32.mrf.mxu0
      %v2435 = vadd.f32 %v2343, %v2434
      %v2436 = vpop.f32.mrf.mxu0
      %v2437 = vadd.f32 %v2345, %v2436
      %2438 = vmatmul.bf16.gmra.mxu0 %v2423
      %v2439 = vpop.f32.mrf.mxu0
      %v2440 = vadd.f32 %v2348, %v2439
      %v2441 = vpop.f32.mrf.mxu0
      %v2442 = vadd.f32 %v2350, %v2441
      %2443 = vdwg.mxu0
      %2444 = vmatpush.bf16.msra.mxu0 0
      %2445 = vmatpush.bf16.msra.mxu0 0
      %2446 = vmatpush.bf16.msra.mxu0 %v2208
      %2447 = vmatpush.bf16.msra.mxu0 %v2205
      %2448 = vmatpush.bf16.msra.mxu0 %v2178
      %2449 = vmatpush.bf16.msra.mxu0 %v2175
      %2450 = vmatpush.bf16.msra.mxu0 %v2135
      %2451 = vmatpush.bf16.msra.mxu0 %v2132
      %2452 = vmatmul.bf16.gmra.mxu0 %v2420
      %v2453 = vpop.f32.mrf.mxu0
      %v2454 = vadd.f32 %v2362, %v2453
      %v2455 = vpop.f32.mrf.mxu0
      %v2456 = vadd.f32 %v2364, %v2455
      %2457 = vmatmul.bf16.gmra.mxu0 %v2423
      %v2458 = vpop.f32.mrf.mxu0
      %v2459 = vadd.f32 %v2367, %v2458
      %v2460 = vpop.f32.mrf.mxu0
      %v2461 = vadd.f32 %v2369, %v2460
      %2462 = vdwg.mxu0
      %2463 = vmatpush.bf16.msra.mxu0 0
      %2464 = vmatpush.bf16.msra.mxu0 0
      %2465 = vmatpush.bf16.msra.mxu0 %v2209
      %2466 = vmatpush.bf16.msra.mxu0 %v2206
      %2467 = vmatpush.bf16.msra.mxu0 %v2179
      %2468 = vmatpush.bf16.msra.mxu0 %v2176
      %2469 = vmatpush.bf16.msra.mxu0 %v2136
      %2470 = vmatpush.bf16.msra.mxu0 %v2133
      %2471 = vmatmul.bf16.gmra.mxu0 %v2420
      %v2472 = vpop.f32.mrf.mxu0
      %v2473 = vadd.f32 %v2381, %v2472
      %v2474 = vpop.f32.mrf.mxu0
      %v2475 = vadd.f32 %v2383, %v2474
      %2476 = vmatmul.bf16.gmra.mxu0 %v2423
      %v2477 = vpop.f32.mrf.mxu0
      %v2478 = vadd.f32 %v2386, %v2477
      %v2479 = vpop.f32.mrf.mxu0
      %v2480 = vadd.f32 %v2388, %v2479
      %2481 = vdwg.mxu0
      %2482 = vmatpush.bf16.msra.mxu0 0
      %2483 = vmatpush.bf16.msra.mxu0 0
      %2484 = vmatpush.bf16.msra.mxu0 %v2203
      %2485 = vmatpush.bf16.msra.mxu0 %v2195
      %2486 = vmatpush.bf16.msra.mxu0 %v2173
      %2487 = vmatpush.bf16.msra.mxu0 %v2165
      %2488 = vmatpush.bf16.msra.mxu0 %v2152
      %2489 = vmatpush.bf16.msra.mxu0 %v2149
      %2490 = vmatmul.bf16.gmra.mxu0 %v2420
      %v2491 = vpop.f32.mrf.mxu0
      %v2492 = vadd.f32 %v2400, %v2491
      %v2493 = vpop.f32.mrf.mxu0
      %v2494 = vadd.f32 %v2402, %v2493
      %2495 = vmatmul.bf16.gmra.mxu0 %v2423
      %v2496 = vpop.f32.mrf.mxu0
      %v2497 = vadd.f32 %v2405, %v2496
      %v2498 = vpop.f32.mrf.mxu0
      %v2499 = vadd.f32 %v2407, %v2498
      %2500 = vdwg.mxu0
      %s2501 = scalar_lea.vmem %s6, 32
      %v2502 = vld [vmem:[%s2501] sm:$0xf]
      %v2503 = vld [vmem:[%s2501 + $0x4] sm:$0xf]
      %v2504 = vld [vmem:[%s2501 + $0x8] sm:$0xf]
      %v2505 = vld [vmem:[%s2501 + $0xc] sm:$0xf]
      %v2510 = vunpack.c.l.b16 %v2502
      %v2511 = vunpack.c.l.b16 %v2503
      %v2512 = vunpack.c.l.b16 %v2504
      %v2513 = vunpack.c.l.b16 %v2505
      %v2514 = vpack.c.b16 %v2511, %v2510
      %v2515 = vpack.c.b16 %v2513, %v2512
      %2516 = vrot.lane.b32.xlu0 %v2143, 92
      %v2517 = vpop.permute.xlu0 %2516
      %2518 = vrot.lane.b32.xlu0 %v2132, 92
      %v2519 = vpop.permute.xlu0 %2518
      %2520 = vrot.lane.b32.xlu0 %v2133, 92
      %v2521 = vpop.permute.xlu0 %2520
      %2522 = vrot.lane.b32.xlu0 %v2149, 92
      %v2523 = vpop.permute.xlu0 %2522
      %2524 = vrot.lane.b32.xlu0 %v2146, 92
      %v2525 = vpop.permute.xlu0 %2524
      %2526 = vrot.lane.b32.xlu0 %v2135, 92
      %v2527 = vpop.permute.xlu0 %2526
      %2528 = vrot.lane.b32.xlu0 %v2136, 92
      %v2529 = vpop.permute.xlu0 %2528
      %2530 = vrot.lane.b32.xlu0 %v2152, 92
      %v2531 = vpop.permute.xlu0 %2530
      %2532 = vrot.lane.b32.xlu0 %v2174, 92
      %v2533 = vpop.permute.xlu0 %2532
      %2534 = vrot.lane.b32.xlu0 %v2175, 92
      %v2535 = vpop.permute.xlu0 %2534
      %2536 = vrot.lane.b32.xlu0 %v2176, 92
      %v2537 = vpop.permute.xlu0 %2536
      %2538 = vrot.lane.b32.xlu0 %v2165, 92
      %v2539 = vpop.permute.xlu0 %2538
      %2540 = vrot.lane.b32.xlu0 %v2177, 92
      %v2541 = vpop.permute.xlu0 %2540
      %2542 = vrot.lane.b32.xlu0 %v2178, 92
      %v2543 = vpop.permute.xlu0 %2542
      %2544 = vrot.lane.b32.xlu0 %v2179, 92
      %v2545 = vpop.permute.xlu0 %2544
      %2546 = vrot.lane.b32.xlu0 %v2173, 92
      %v2547 = vpop.permute.xlu0 %2546
      %2548 = vrot.lane.b32.xlu0 %v2204, 92
      %v2549 = vpop.permute.xlu0 %2548
      %2550 = vrot.lane.b32.xlu0 %v2205, 92
      %v2551 = vpop.permute.xlu0 %2550
      %2552 = vrot.lane.b32.xlu0 %v2206, 92
      %v2553 = vpop.permute.xlu0 %2552
      %2554 = vrot.lane.b32.xlu0 %v2195, 92
      %v2555 = vpop.permute.xlu0 %2554
      %2556 = vrot.lane.b32.xlu0 %v2207, 92
      %v2557 = vpop.permute.xlu0 %2556
      %2558 = vrot.lane.b32.xlu0 %v2208, 92
      %v2559 = vpop.permute.xlu0 %2558
      %2560 = vrot.lane.b32.xlu0 %v2209, 92
      %v2561 = vpop.permute.xlu0 %2560
      %2562 = vrot.lane.b32.xlu0 %v2203, 92
      %v2563 = vpop.permute.xlu0 %2562
      %v2564 = vsel %vm1174, %v2517, %v2519
      %v2565 = vsel %vm1174, %v2519, %v2521
      %v2566 = vsel %vm1174, %v2521, %v2523
      %v2567 = vsel %vm1174, %v2525, %v2527
      %v2568 = vsel %vm1174, %v2527, %v2529
      %v2569 = vsel %vm1174, %v2529, %v2531
      %v2570 = vsel %vm1174, %v2533, %v2535
      %v2571 = vsel %vm1174, %v2535, %v2537
      %v2572 = vsel %vm1174, %v2537, %v2539
      %v2573 = vsel %vm1174, %v2541, %v2543
      %v2574 = vsel %vm1174, %v2543, %v2545
      %v2575 = vsel %vm1174, %v2545, %v2547
      %v2576 = vsel %vm1174, %v2549, %v2551
      %v2577 = vsel %vm1174, %v2551, %v2553
      %v2578 = vsel %vm1174, %v2553, %v2555
      %v2579 = vsel %vm1174, %v2557, %v2559
      %v2580 = vsel %vm1174, %v2559, %v2561
      %v2581 = vsel %vm1174, %v2561, %v2563
      %v2607 = vsel %vm1626, %v2514, 0
      %v2610 = vsel %vm1626, %v2515, 0
      %2612 = vmatpush.bf16.msra.mxu0 0
      %2613 = vmatpush.bf16.msra.mxu0 0
      %2614 = vmatpush.bf16.msra.mxu0 %v2579
      %2615 = vmatpush.bf16.msra.mxu0 %v2576
      %2616 = vmatpush.bf16.msra.mxu0 %v2573
      %2617 = vmatpush.bf16.msra.mxu0 %v2570
      %2618 = vmatpush.bf16.msra.mxu0 %v2567
      %2619 = vmatpush.bf16.msra.mxu0 %v2564
      %2620 = vmatmul.bf16.gmra.mxu0 %v2607
      %v2621 = vpop.f32.mrf.mxu0
      %v2622 = vadd.f32 0.0, %v2621
      %v2623 = vpop.f32.mrf.mxu0
      %v2624 = vadd.f32 0.0, %v2623
      %2625 = vmatmul.bf16.gmra.mxu0 %v2610
      %v2626 = vpop.f32.mrf.mxu0
      %v2627 = vadd.f32 0.0, %v2626
      %v2628 = vpop.f32.mrf.mxu0
      %v2629 = vadd.f32 0.0, %v2628
      %2630 = vdwg.mxu0
      %2631 = vmatpush.bf16.msra.mxu0 0
      %2632 = vmatpush.bf16.msra.mxu0 0
      %2633 = vmatpush.bf16.msra.mxu0 %v2580
      %2634 = vmatpush.bf16.msra.mxu0 %v2577
      %2635 = vmatpush.bf16.msra.mxu0 %v2574
      %2636 = vmatpush.bf16.msra.mxu0 %v2571
      %2637 = vmatpush.bf16.msra.mxu0 %v2568
      %2638 = vmatpush.bf16.msra.mxu0 %v2565
      %2639 = vmatmul.bf16.gmra.mxu0 %v2607
      %v2640 = vpop.f32.mrf.mxu0
      %v2641 = vadd.f32 0.0, %v2640
      %v2642 = vpop.f32.mrf.mxu0
      %v2643 = vadd.f32 0.0, %v2642
      %2644 = vmatmul.bf16.gmra.mxu0 %v2610
      %v2645 = vpop.f32.mrf.mxu0
      %v2646 = vadd.f32 0.0, %v2645
      %v2647 = vpop.f32.mrf.mxu0
      %v2648 = vadd.f32 0.0, %v2647
      %2649 = vdwg.mxu0
      %2650 = vmatpush.bf16.msra.mxu0 0
      %2651 = vmatpush.bf16.msra.mxu0 0
      %2652 = vmatpush.bf16.msra.mxu0 %v2581
      %2653 = vmatpush.bf16.msra.mxu0 %v2578
      %2654 = vmatpush.bf16.msra.mxu0 %v2575
      %2655 = vmatpush.bf16.msra.mxu0 %v2572
      %2656 = vmatpush.bf16.msra.mxu0 %v2569
      %2657 = vmatpush.bf16.msra.mxu0 %v2566
      %2658 = vmatmul.bf16.gmra.mxu0 %v2607
      %v2659 = vpop.f32.mrf.mxu0
      %v2660 = vadd.f32 0.0, %v2659
      %v2661 = vpop.f32.mrf.mxu0
      %v2662 = vadd.f32 0.0, %v2661
      %2663 = vmatmul.bf16.gmra.mxu0 %v2610
      %v2664 = vpop.f32.mrf.mxu0
      %v2665 = vadd.f32 0.0, %v2664
      %v2666 = vpop.f32.mrf.mxu0
      %v2667 = vadd.f32 0.0, %v2666
      %2668 = vdwg.mxu0
      %2669 = vmatpush.bf16.msra.mxu0 0
      %2670 = vmatpush.bf16.msra.mxu0 0
      %2671 = vmatpush.bf16.msra.mxu0 %v2563
      %2672 = vmatpush.bf16.msra.mxu0 %v2555
      %2673 = vmatpush.bf16.msra.mxu0 %v2547
      %2674 = vmatpush.bf16.msra.mxu0 %v2539
      %2675 = vmatpush.bf16.msra.mxu0 %v2531
      %2676 = vmatpush.bf16.msra.mxu0 %v2523
      %2677 = vmatmul.bf16.gmra.mxu0 %v2607
      %v2678 = vpop.f32.mrf.mxu0
      %v2679 = vadd.f32 0.0, %v2678
      %v2680 = vpop.f32.mrf.mxu0
      %v2681 = vadd.f32 0.0, %v2680
      %2682 = vmatmul.bf16.gmra.mxu0 %v2610
      %v2683 = vpop.f32.mrf.mxu0
      %v2684 = vadd.f32 0.0, %v2683
      %v2685 = vpop.f32.mrf.mxu0
      %v2686 = vadd.f32 0.0, %v2685
      %2687 = vdwg.mxu0
      %v2688 = vadd.f32 %v2435, %v2622
      %v2689 = vadd.f32 %v2454, %v2641
      %v2690 = vadd.f32 %v2473, %v2660
      %v2691 = vadd.f32 %v2492, %v2679
      %v2692 = vadd.f32 %v2437, %v2624
      %v2693 = vadd.f32 %v2456, %v2643
      %v2694 = vadd.f32 %v2475, %v2662
      %v2695 = vadd.f32 %v2494, %v2681
      %v2696 = vadd.f32 %v2440, %v2627
      %v2697 = vadd.f32 %v2459, %v2646
      %v2698 = vadd.f32 %v2478, %v2665
      %v2699 = vadd.f32 %v2497, %v2684
      %v2700 = vadd.f32 %v2442, %v2629
      %v2701 = vadd.f32 %v2461, %v2648
      %v2702 = vadd.f32 %v2480, %v2667
      %v2703 = vadd.f32 %v2499, %v2686
      %v2704 = vld [vmem:[%s7] sm:$0xff]
      %v2705 = vld [vmem:[%s7 + $0x8] sm:$0xff]
      %v2706 = vld [vmem:[%s7 + $0x10] sm:$0xff]
      %v2707 = vld [vmem:[%s7 + $0x18] sm:$0xff]
      %2709 = vset.pattern.permute.xlu0 0
      %2710 = vperm.xlu0 %2709, %v2704
      %v2711 = vpop.permute.xlu0 %2710
      %2714 = vset.pattern.permute.xlu0 0
      %2715 = vperm.xlu0 %2714, %v2705
      %v2716 = vpop.permute.xlu0 %2715
      %2719 = vset.pattern.permute.xlu0 0
      %2720 = vperm.xlu0 %2719, %v2706
      %v2721 = vpop.permute.xlu0 %2720
      %2724 = vset.pattern.permute.xlu0 0
      %2725 = vperm.xlu0 %2724, %v2707
      %v2726 = vpop.permute.xlu0 %2725
      %v2728 = vadd.f32 %v2688, %v2711
      %v2729 = vadd.f32 %v2689, %v2711
      %v2730 = vadd.f32 %v2690, %v2711
      %v2731 = vadd.f32 %v2691, %v2711
      %v2732 = vadd.f32 %v2692, %v2716
      %v2733 = vadd.f32 %v2693, %v2716
      %v2734 = vadd.f32 %v2694, %v2716
      %v2735 = vadd.f32 %v2695, %v2716
      %v2736 = vadd.f32 %v2696, %v2721
      %v2737 = vadd.f32 %v2697, %v2721
      %v2738 = vadd.f32 %v2698, %v2721
      %v2739 = vadd.f32 %v2699, %v2721
      %v2740 = vadd.f32 %v2700, %v2726
      %v2741 = vadd.f32 %v2701, %v2726
      %v2742 = vadd.f32 %v2702, %v2726
      %v2743 = vadd.f32 %v2703, %v2726
      %v2744 = vmax.f32 %v2728, 0.0
      %v2745 = vmax.f32 %v2729, 0.0
      %v2746 = vmax.f32 %v2730, 0.0
      %v2747 = vmax.f32 %v2731, 0.0
      %v2748 = vmax.f32 %v2732, 0.0
      %v2749 = vmax.f32 %v2733, 0.0
      %v2750 = vmax.f32 %v2734, 0.0
      %v2751 = vmax.f32 %v2735, 0.0
      %v2752 = vmax.f32 %v2736, 0.0
      %v2753 = vmax.f32 %v2737, 0.0
      %v2754 = vmax.f32 %v2738, 0.0
      %v2755 = vmax.f32 %v2739, 0.0
      %v2756 = vmax.f32 %v2740, 0.0
      %v2757 = vmax.f32 %v2741, 0.0
      %v2758 = vmax.f32 %v2742, 0.0
      %v2759 = vmax.f32 %v2743, 0.0
      %v2760 = vmul.f32 %v2744, %v1345
      %v2761 = vmul.f32 %v2745, %v1346
      %v2762 = vmul.f32 %v2746, %v1347
      %v2763 = vmul.f32 %v2747, %v1348
      %v2764 = vmul.f32 %v2748, %v1345
      %v2765 = vmul.f32 %v2749, %v1346
      %v2766 = vmul.f32 %v2750, %v1347
      %v2767 = vmul.f32 %v2751, %v1348
      %v2768 = vmul.f32 %v2752, %v1345
      %v2769 = vmul.f32 %v2753, %v1346
      %v2770 = vmul.f32 %v2754, %v1347
      %v2771 = vmul.f32 %v2755, %v1348
      %v2772 = vmul.f32 %v2756, %v1345
      %v2773 = vmul.f32 %v2757, %v1346
      %v2774 = vmul.f32 %v2758, %v1347
      %v2775 = vmul.f32 %v2759, %v1348
      %v2776 = vpack.c.bf16 %v2761, %v2760
      %v2777 = vpack.c.bf16 %v2763, %v2762
      %v2778 = vpack.c.bf16 %v2765, %v2764
      %v2779 = vpack.c.bf16 %v2767, %v2766
      %v2780 = vpack.c.bf16 %v2769, %v2768
      %v2781 = vpack.c.bf16 %v2771, %v2770
      %v2782 = vpack.c.bf16 %v2773, %v2772
      %v2783 = vpack.c.bf16 %v2775, %v2774
      %v2792 = vunpack.c.l.b16 %v2776
      %v2793 = vunpack.c.h.b16 %v2776
      %v2794 = vunpack.c.l.b16 %v2777
      %v2795 = vunpack.c.h.b16 %v2777
      %v2796 = vunpack.c.l.b16 %v2778
      %v2797 = vunpack.c.h.b16 %v2778
      %v2798 = vunpack.c.l.b16 %v2779
      %v2799 = vunpack.c.h.b16 %v2779
      %v2800 = vunpack.c.l.b16 %v2780
      %v2801 = vunpack.c.h.b16 %v2780
      %v2802 = vunpack.c.l.b16 %v2781
      %v2803 = vunpack.c.h.b16 %v2781
      %v2804 = vunpack.c.l.b16 %v2782
      %v2805 = vunpack.c.h.b16 %v2782
      %v2806 = vunpack.c.l.b16 %v2783
      %v2807 = vunpack.c.h.b16 %v2783
      %v2808 = vpack.c.b16 %v2796, %v2792
      %v2809 = vpack.c.b16 %v2797, %v2793
      %v2810 = vpack.c.b16 %v2798, %v2794
      %v2811 = vpack.c.b16 %v2799, %v2795
      %v2812 = vpack.c.b16 %v2804, %v2800
      %v2813 = vpack.c.b16 %v2805, %v2801
      %v2814 = vpack.c.b16 %v2806, %v2802
      %v2815 = vpack.c.b16 %v2807, %v2803
      %2816 = vrot.lane.b32.xlu0 %v2808, 19
      %v2817 = vpop.permute.xlu0 %2816
      %2818 = vrot.lane.b32.xlu0 %v2809, 19
      %v2819 = vpop.permute.xlu0 %2818
      %2820 = vrot.lane.b32.xlu0 %v2810, 19
      %v2821 = vpop.permute.xlu0 %2820
      %2822 = vrot.lane.b32.xlu0 %v2811, 19
      %v2823 = vpop.permute.xlu0 %2822
      %2824 = vrot.lane.b32.xlu0 %v2812, 19
      %v2825 = vpop.permute.xlu0 %2824
      %2826 = vrot.lane.b32.xlu0 %v2813, 19
      %v2827 = vpop.permute.xlu0 %2826
      %2828 = vrot.lane.b32.xlu0 %v2814, 19
      %v2829 = vpop.permute.xlu0 %2828
      %2830 = vrot.lane.b32.xlu0 %v2815, 19
      %v2831 = vpop.permute.xlu0 %2830
      %v2832 = vsel %vm1425, %v2817, %v2819
      %v2833 = vsel %vm1425, %v2819, %v2821
      %v2834 = vsel %vm1425, %v2821, %v2823
      %v2835 = vsel %vm1425, %v2825, %v2827
      %v2836 = vsel %vm1425, %v2827, %v2829
      %v2837 = vsel %vm1425, %v2829, %v2831
      %v2843 = vsel %vm1436, 0, %v2817
      %v2846 = vsel %vm1436, 0, %v2825
      %v2849 = vsel %vm1444, %v2834, 0
      %v2852 = vsel %vm1444, %v2837, 0
      %2858 = vrot.lane.b32.xlu0 %v2843, 127
      %v2859 = vpop.permute.xlu0 %2858
      %2860 = vrot.lane.b32.xlu0 %v2832, 127
      %v2861 = vpop.permute.xlu0 %2860
      %2862 = vrot.lane.b32.xlu0 %v2833, 127
      %v2863 = vpop.permute.xlu0 %2862
      %2864 = vrot.lane.b32.xlu0 %v2849, 127
      %v2865 = vpop.permute.xlu0 %2864
      %2866 = vrot.lane.b32.xlu0 %v2846, 127
      %v2867 = vpop.permute.xlu0 %2866
      %2868 = vrot.lane.b32.xlu0 %v2835, 127
      %v2869 = vpop.permute.xlu0 %2868
      %2870 = vrot.lane.b32.xlu0 %v2836, 127
      %v2871 = vpop.permute.xlu0 %2870
      %2872 = vrot.lane.b32.xlu0 %v2852, 127
      %v2873 = vpop.permute.xlu0 %2872
      %v2874 = vsel %vm1471, %v2859, %v2861
      %v2875 = vsel %vm1471, %v2861, %v2863
      %v2876 = vsel %vm1471, %v2863, %v2865
      %v2877 = vsel %vm1471, %v2867, %v2869
      %v2878 = vsel %vm1471, %v2869, %v2871
      %v2879 = vsel %vm1471, %v2871, %v2873
      %2888 = vrot.lane.b32.xlu0 %v2843, 126
      %v2889 = vpop.permute.xlu0 %2888
      %2890 = vrot.lane.b32.xlu0 %v2832, 126
      %v2891 = vpop.permute.xlu0 %2890
      %2892 = vrot.lane.b32.xlu0 %v2833, 126
      %v2893 = vpop.permute.xlu0 %2892
      %2894 = vrot.lane.b32.xlu0 %v2849, 126
      %v2895 = vpop.permute.xlu0 %2894
      %2896 = vrot.lane.b32.xlu0 %v2846, 126
      %v2897 = vpop.permute.xlu0 %2896
      %2898 = vrot.lane.b32.xlu0 %v2835, 126
      %v2899 = vpop.permute.xlu0 %2898
      %2900 = vrot.lane.b32.xlu0 %v2836, 126
      %v2901 = vpop.permute.xlu0 %2900
      %2902 = vrot.lane.b32.xlu0 %v2852, 126
      %v2903 = vpop.permute.xlu0 %2902
      %v2904 = vsel %vm1502, %v2889, %v2891
      %v2905 = vsel %vm1502, %v2891, %v2893
      %v2906 = vsel %vm1502, %v2893, %v2895
      %v2907 = vsel %vm1502, %v2897, %v2899
      %v2908 = vsel %vm1502, %v2899, %v2901
      %v2909 = vsel %vm1502, %v2901, %v2903
      %v2918 = vld [vmem:[%s8] sm:$0xf]
      %v2919 = vld [vmem:[%s8 + $0x4] sm:$0xf]
      %v2920 = vld [vmem:[%s8 + $0x8] sm:$0xf]
      %v2921 = vld [vmem:[%s8 + $0xc] sm:$0xf]
      %s2922 = scalar_lea.vmem %s8, 16
      %v2923 = vld [vmem:[%s2922] sm:$0xf]
      %v2924 = vld [vmem:[%s2922 + $0x4] sm:$0xf]
      %v2925 = vld [vmem:[%s2922 + $0x8] sm:$0xf]
      %v2926 = vld [vmem:[%s2922 + $0xc] sm:$0xf]
      %v2931 = vunpack.c.l.b16 %v2923
      %v2932 = vunpack.c.l.b16 %v2924
      %v2933 = vunpack.c.l.b16 %v2925
      %v2934 = vunpack.c.l.b16 %v2926
      %v2935 = vpack.c.b16 %v2932, %v2931
      %v2936 = vpack.c.b16 %v2934, %v2933
      %2937 = vrot.lane.b32.xlu0 %v2843, 110
      %v2938 = vpop.permute.xlu0 %2937
      %2939 = vrot.lane.b32.xlu0 %v2832, 110
      %v2940 = vpop.permute.xlu0 %2939
      %2941 = vrot.lane.b32.xlu0 %v2833, 110
      %v2942 = vpop.permute.xlu0 %2941
      %2943 = vrot.lane.b32.xlu0 %v2849, 110
      %v2944 = vpop.permute.xlu0 %2943
      %2945 = vrot.lane.b32.xlu0 %v2846, 110
      %v2946 = vpop.permute.xlu0 %2945
      %2947 = vrot.lane.b32.xlu0 %v2835, 110
      %v2948 = vpop.permute.xlu0 %2947
      %2949 = vrot.lane.b32.xlu0 %v2836, 110
      %v2950 = vpop.permute.xlu0 %2949
      %2951 = vrot.lane.b32.xlu0 %v2852, 110
      %v2952 = vpop.permute.xlu0 %2951
      %2953 = vrot.lane.b32.xlu0 %v2874, 110
      %v2954 = vpop.permute.xlu0 %2953
      %2955 = vrot.lane.b32.xlu0 %v2875, 110
      %v2956 = vpop.permute.xlu0 %2955
      %2957 = vrot.lane.b32.xlu0 %v2876, 110
      %v2958 = vpop.permute.xlu0 %2957
      %2959 = vrot.lane.b32.xlu0 %v2865, 110
      %v2960 = vpop.permute.xlu0 %2959
      %2961 = vrot.lane.b32.xlu0 %v2877, 110
      %v2962 = vpop.permute.xlu0 %2961
      %2963 = vrot.lane.b32.xlu0 %v2878, 110
      %v2964 = vpop.permute.xlu0 %2963
      %2965 = vrot.lane.b32.xlu0 %v2879, 110
      %v2966 = vpop.permute.xlu0 %2965
      %2967 = vrot.lane.b32.xlu0 %v2873, 110
      %v2968 = vpop.permute.xlu0 %2967
      %2969 = vrot.lane.b32.xlu0 %v2904, 110
      %v2970 = vpop.permute.xlu0 %2969
      %2971 = vrot.lane.b32.xlu0 %v2905, 110
      %v2972 = vpop.permute.xlu0 %2971
      %2973 = vrot.lane.b32.xlu0 %v2906, 110
      %v2974 = vpop.permute.xlu0 %2973
      %2975 = vrot.lane.b32.xlu0 %v2895, 110
      %v2976 = vpop.permute.xlu0 %2975
      %2977 = vrot.lane.b32.xlu0 %v2907, 110
      %v2978 = vpop.permute.xlu0 %2977
      %2979 = vrot.lane.b32.xlu0 %v2908, 110
      %v2980 = vpop.permute.xlu0 %2979
      %2981 = vrot.lane.b32.xlu0 %v2909, 110
      %v2982 = vpop.permute.xlu0 %2981
      %2983 = vrot.lane.b32.xlu0 %v2903, 110
      %v2984 = vpop.permute.xlu0 %2983
      %v2985 = vsel %vm865, %v2938, %v2940
      %v2986 = vsel %vm865, %v2940, %v2942
      %v2987 = vsel %vm865, %v2942, %v2944
      %v2988 = vsel %vm865, %v2946, %v2948
      %v2989 = vsel %vm865, %v2948, %v2950
      %v2990 = vsel %vm865, %v2950, %v2952
      %v2991 = vsel %vm865, %v2954, %v2956
      %v2992 = vsel %vm865, %v2956, %v2958
      %v2993 = vsel %vm865, %v2958, %v2960
      %v2994 = vsel %vm865, %v2962, %v2964
      %v2995 = vsel %vm865, %v2964, %v2966
      %v2996 = vsel %vm865, %v2966, %v2968
      %v2997 = vsel %vm865, %v2970, %v2972
      %v2998 = vsel %vm865, %v2972, %v2974
      %v2999 = vsel %vm865, %v2974, %v2976
      %v3000 = vsel %vm865, %v2978, %v2980
      %v3001 = vsel %vm865, %v2980, %v2982
      %v3002 = vsel %vm865, %v2982, %v2984
      %v3028 = vsel %vm1626, %v2935, 0
      %v3031 = vsel %vm1626, %v2936, 0
      %3033 = vmatpush.bf16.msra.mxu0 0
      %3034 = vmatpush.bf16.msra.mxu0 0
      %3035 = vmatpush.bf16.msra.mxu0 %v3000
      %3036 = vmatpush.bf16.msra.mxu0 %v2997
      %3037 = vmatpush.bf16.msra.mxu0 %v2994
      %3038 = vmatpush.bf16.msra.mxu0 %v2991
      %3039 = vmatpush.bf16.msra.mxu0 %v2988
      %3040 = vmatpush.bf16.msra.mxu0 %v2985
      %3041 = vmatmul.bf16.gmra.mxu0 %v3028
      %v3042 = vpop.f32.mrf.mxu0
      %v3043 = vadd.f32 0.0, %v3042
      %v3044 = vpop.f32.mrf.mxu0
      %v3045 = vadd.f32 0.0, %v3044
      %3046 = vmatmul.bf16.gmra.mxu0 %v3031
      %v3047 = vpop.f32.mrf.mxu0
      %v3048 = vadd.f32 0.0, %v3047
      %v3049 = vpop.f32.mrf.mxu0
      %v3050 = vadd.f32 0.0, %v3049
      %3051 = vdwg.mxu0
      %3052 = vmatpush.bf16.msra.mxu0 0
      %3053 = vmatpush.bf16.msra.mxu0 0
      %3054 = vmatpush.bf16.msra.mxu0 %v3001
      %3055 = vmatpush.bf16.msra.mxu0 %v2998
      %3056 = vmatpush.bf16.msra.mxu0 %v2995
      %3057 = vmatpush.bf16.msra.mxu0 %v2992
      %3058 = vmatpush.bf16.msra.mxu0 %v2989
      %3059 = vmatpush.bf16.msra.mxu0 %v2986
      %3060 = vmatmul.bf16.gmra.mxu0 %v3028
      %v3061 = vpop.f32.mrf.mxu0
      %v3062 = vadd.f32 0.0, %v3061
      %v3063 = vpop.f32.mrf.mxu0
      %v3064 = vadd.f32 0.0, %v3063
      %3065 = vmatmul.bf16.gmra.mxu0 %v3031
      %v3066 = vpop.f32.mrf.mxu0
      %v3067 = vadd.f32 0.0, %v3066
      %v3068 = vpop.f32.mrf.mxu0
      %v3069 = vadd.f32 0.0, %v3068
      %3070 = vdwg.mxu0
      %3071 = vmatpush.bf16.msra.mxu0 0
      %3072 = vmatpush.bf16.msra.mxu0 0
      %3073 = vmatpush.bf16.msra.mxu0 %v3002
      %3074 = vmatpush.bf16.msra.mxu0 %v2999
      %3075 = vmatpush.bf16.msra.mxu0 %v2996
      %3076 = vmatpush.bf16.msra.mxu0 %v2993
      %3077 = vmatpush.bf16.msra.mxu0 %v2990
      %3078 = vmatpush.bf16.msra.mxu0 %v2987
      %3079 = vmatmul.bf16.gmra.mxu0 %v3028
      %v3080 = vpop.f32.mrf.mxu0
      %v3081 = vadd.f32 0.0, %v3080
      %v3082 = vpop.f32.mrf.mxu0
      %v3083 = vadd.f32 0.0, %v3082
      %3084 = vmatmul.bf16.gmra.mxu0 %v3031
      %v3085 = vpop.f32.mrf.mxu0
      %v3086 = vadd.f32 0.0, %v3085
      %v3087 = vpop.f32.mrf.mxu0
      %v3088 = vadd.f32 0.0, %v3087
      %3089 = vdwg.mxu0
      %3090 = vmatpush.bf16.msra.mxu0 0
      %3091 = vmatpush.bf16.msra.mxu0 0
      %3092 = vmatpush.bf16.msra.mxu0 %v2984
      %3093 = vmatpush.bf16.msra.mxu0 %v2976
      %3094 = vmatpush.bf16.msra.mxu0 %v2968
      %3095 = vmatpush.bf16.msra.mxu0 %v2960
      %3096 = vmatpush.bf16.msra.mxu0 %v2952
      %3097 = vmatpush.bf16.msra.mxu0 %v2944
      %3098 = vmatmul.bf16.gmra.mxu0 %v3028
      %v3099 = vpop.f32.mrf.mxu0
      %v3100 = vadd.f32 0.0, %v3099
      %v3101 = vpop.f32.mrf.mxu0
      %v3102 = vadd.f32 0.0, %v3101
      %3103 = vmatmul.bf16.gmra.mxu0 %v3031
      %v3104 = vpop.f32.mrf.mxu0
      %v3105 = vadd.f32 0.0, %v3104
      %v3106 = vpop.f32.mrf.mxu0
      %v3107 = vadd.f32 0.0, %v3106
      %3108 = vdwg.mxu0
      %v3113 = vunpack.c.l.b16 %v2918
      %v3114 = vunpack.c.l.b16 %v2919
      %v3115 = vunpack.c.l.b16 %v2920
      %v3116 = vunpack.c.l.b16 %v2921
      %v3117 = vpack.c.b16 %v3114, %v3113
      %v3118 = vpack.c.b16 %v3116, %v3115
      %v3120 = vsel %vm1626, %v3117, 0
      %v3123 = vsel %vm1626, %v3118, 0
      %3125 = vmatpush.bf16.msra.mxu0 0
      %3126 = vmatpush.bf16.msra.mxu0 0
      %3127 = vmatpush.bf16.msra.mxu0 %v2907
      %3128 = vmatpush.bf16.msra.mxu0 %v2904
      %3129 = vmatpush.bf16.msra.mxu0 %v2877
      %3130 = vmatpush.bf16.msra.mxu0 %v2874
      %3131 = vmatpush.bf16.msra.mxu0 %v2846
      %3132 = vmatpush.bf16.msra.mxu0 %v2843
      %3133 = vmatmul.bf16.gmra.mxu0 %v3120
      %v3134 = vpop.f32.mrf.mxu0
      %v3135 = vadd.f32 %v3043, %v3134
      %v3136 = vpop.f32.mrf.mxu0
      %v3137 = vadd.f32 %v3045, %v3136
      %3138 = vmatmul.bf16.gmra.mxu0 %v3123
      %v3139 = vpop.f32.mrf.mxu0
      %v3140 = vadd.f32 %v3048, %v3139
      %v3141 = vpop.f32.mrf.mxu0
      %v3142 = vadd.f32 %v3050, %v3141
      %3143 = vdwg.mxu0
      %3144 = vmatpush.bf16.msra.mxu0 0
      %3145 = vmatpush.bf16.msra.mxu0 0
      %3146 = vmatpush.bf16.msra.mxu0 %v2908
      %3147 = vmatpush.bf16.msra.mxu0 %v2905
      %3148 = vmatpush.bf16.msra.mxu0 %v2878
      %3149 = vmatpush.bf16.msra.mxu0 %v2875
      %3150 = vmatpush.bf16.msra.mxu0 %v2835
      %3151 = vmatpush.bf16.msra.mxu0 %v2832
      %3152 = vmatmul.bf16.gmra.mxu0 %v3120
      %v3153 = vpop.f32.mrf.mxu0
      %v3154 = vadd.f32 %v3062, %v3153
      %v3155 = vpop.f32.mrf.mxu0
      %v3156 = vadd.f32 %v3064, %v3155
      %3157 = vmatmul.bf16.gmra.mxu0 %v3123
      %v3158 = vpop.f32.mrf.mxu0
      %v3159 = vadd.f32 %v3067, %v3158
      %v3160 = vpop.f32.mrf.mxu0
      %v3161 = vadd.f32 %v3069, %v3160
      %3162 = vdwg.mxu0
      %3163 = vmatpush.bf16.msra.mxu0 0
      %3164 = vmatpush.bf16.msra.mxu0 0
      %3165 = vmatpush.bf16.msra.mxu0 %v2909
      %3166 = vmatpush.bf16.msra.mxu0 %v2906
      %3167 = vmatpush.bf16.msra.mxu0 %v2879
      %3168 = vmatpush.bf16.msra.mxu0 %v2876
      %3169 = vmatpush.bf16.msra.mxu0 %v2836
      %3170 = vmatpush.bf16.msra.mxu0 %v2833
      %3171 = vmatmul.bf16.gmra.mxu0 %v3120
      %v3172 = vpop.f32.mrf.mxu0
      %v3173 = vadd.f32 %v3081, %v3172
      %v3174 = vpop.f32.mrf.mxu0
      %v3175 = vadd.f32 %v3083, %v3174
      %3176 = vmatmul.bf16.gmra.mxu0 %v3123
      %v3177 = vpop.f32.mrf.mxu0
      %v3178 = vadd.f32 %v3086, %v3177
      %v3179 = vpop.f32.mrf.mxu0
      %v3180 = vadd.f32 %v3088, %v3179
      %3181 = vdwg.mxu0
      %3182 = vmatpush.bf16.msra.mxu0 0
      %3183 = vmatpush.bf16.msra.mxu0 0
      %3184 = vmatpush.bf16.msra.mxu0 %v2903
      %3185 = vmatpush.bf16.msra.mxu0 %v2895
      %3186 = vmatpush.bf16.msra.mxu0 %v2873
      %3187 = vmatpush.bf16.msra.mxu0 %v2865
      %3188 = vmatpush.bf16.msra.mxu0 %v2852
      %3189 = vmatpush.bf16.msra.mxu0 %v2849
      %3190 = vmatmul.bf16.gmra.mxu0 %v3120
      %v3191 = vpop.f32.mrf.mxu0
      %v3192 = vadd.f32 %v3100, %v3191
      %v3193 = vpop.f32.mrf.mxu0
      %v3194 = vadd.f32 %v3102, %v3193
      %3195 = vmatmul.bf16.gmra.mxu0 %v3123
      %v3196 = vpop.f32.mrf.mxu0
      %v3197 = vadd.f32 %v3105, %v3196
      %v3198 = vpop.f32.mrf.mxu0
      %v3199 = vadd.f32 %v3107, %v3198
      %3200 = vdwg.mxu0
      %s3201 = scalar_lea.vmem %s8, 32
      %v3202 = vld [vmem:[%s3201] sm:$0xf]
      %v3203 = vld [vmem:[%s3201 + $0x4] sm:$0xf]
      %v3204 = vld [vmem:[%s3201 + $0x8] sm:$0xf]
      %v3205 = vld [vmem:[%s3201 + $0xc] sm:$0xf]
      %v3210 = vunpack.c.l.b16 %v3202
      %v3211 = vunpack.c.l.b16 %v3203
      %v3212 = vunpack.c.l.b16 %v3204
      %v3213 = vunpack.c.l.b16 %v3205
      %v3214 = vpack.c.b16 %v3211, %v3210
      %v3215 = vpack.c.b16 %v3213, %v3212
      %3216 = vrot.lane.b32.xlu0 %v2843, 92
      %v3217 = vpop.permute.xlu0 %3216
      %3218 = vrot.lane.b32.xlu0 %v2832, 92
      %v3219 = vpop.permute.xlu0 %3218
      %3220 = vrot.lane.b32.xlu0 %v2833, 92
      %v3221 = vpop.permute.xlu0 %3220
      %3222 = vrot.lane.b32.xlu0 %v2849, 92
      %v3223 = vpop.permute.xlu0 %3222
      %3224 = vrot.lane.b32.xlu0 %v2846, 92
      %v3225 = vpop.permute.xlu0 %3224
      %3226 = vrot.lane.b32.xlu0 %v2835, 92
      %v3227 = vpop.permute.xlu0 %3226
      %3228 = vrot.lane.b32.xlu0 %v2836, 92
      %v3229 = vpop.permute.xlu0 %3228
      %3230 = vrot.lane.b32.xlu0 %v2852, 92
      %v3231 = vpop.permute.xlu0 %3230
      %3232 = vrot.lane.b32.xlu0 %v2874, 92
      %v3233 = vpop.permute.xlu0 %3232
      %3234 = vrot.lane.b32.xlu0 %v2875, 92
      %v3235 = vpop.permute.xlu0 %3234
      %3236 = vrot.lane.b32.xlu0 %v2876, 92
      %v3237 = vpop.permute.xlu0 %3236
      %3238 = vrot.lane.b32.xlu0 %v2865, 92
      %v3239 = vpop.permute.xlu0 %3238
      %3240 = vrot.lane.b32.xlu0 %v2877, 92
      %v3241 = vpop.permute.xlu0 %3240
      %3242 = vrot.lane.b32.xlu0 %v2878, 92
      %v3243 = vpop.permute.xlu0 %3242
      %3244 = vrot.lane.b32.xlu0 %v2879, 92
      %v3245 = vpop.permute.xlu0 %3244
      %3246 = vrot.lane.b32.xlu0 %v2873, 92
      %v3247 = vpop.permute.xlu0 %3246
      %3248 = vrot.lane.b32.xlu0 %v2904, 92
      %v3249 = vpop.permute.xlu0 %3248
      %3250 = vrot.lane.b32.xlu0 %v2905, 92
      %v3251 = vpop.permute.xlu0 %3250
      %3252 = vrot.lane.b32.xlu0 %v2906, 92
      %v3253 = vpop.permute.xlu0 %3252
      %3254 = vrot.lane.b32.xlu0 %v2895, 92
      %v3255 = vpop.permute.xlu0 %3254
      %3256 = vrot.lane.b32.xlu0 %v2907, 92
      %v3257 = vpop.permute.xlu0 %3256
      %3258 = vrot.lane.b32.xlu0 %v2908, 92
      %v3259 = vpop.permute.xlu0 %3258
      %3260 = vrot.lane.b32.xlu0 %v2909, 92
      %v3261 = vpop.permute.xlu0 %3260
      %3262 = vrot.lane.b32.xlu0 %v2903, 92
      %v3263 = vpop.permute.xlu0 %3262
      %v3264 = vsel %vm1174, %v3217, %v3219
      %v3265 = vsel %vm1174, %v3219, %v3221
      %v3266 = vsel %vm1174, %v3221, %v3223
      %v3267 = vsel %vm1174, %v3225, %v3227
      %v3268 = vsel %vm1174, %v3227, %v3229
      %v3269 = vsel %vm1174, %v3229, %v3231
      %v3270 = vsel %vm1174, %v3233, %v3235
      %v3271 = vsel %vm1174, %v3235, %v3237
      %v3272 = vsel %vm1174, %v3237, %v3239
      %v3273 = vsel %vm1174, %v3241, %v3243
      %v3274 = vsel %vm1174, %v3243, %v3245
      %v3275 = vsel %vm1174, %v3245, %v3247
      %v3276 = vsel %vm1174, %v3249, %v3251
      %v3277 = vsel %vm1174, %v3251, %v3253
      %v3278 = vsel %vm1174, %v3253, %v3255
      %v3279 = vsel %vm1174, %v3257, %v3259
      %v3280 = vsel %vm1174, %v3259, %v3261
      %v3281 = vsel %vm1174, %v3261, %v3263
      %v3307 = vsel %vm1626, %v3214, 0
      %v3310 = vsel %vm1626, %v3215, 0
      %3312 = vmatpush.bf16.msra.mxu0 0
      %3313 = vmatpush.bf16.msra.mxu0 0
      %3314 = vmatpush.bf16.msra.mxu0 %v3279
      %3315 = vmatpush.bf16.msra.mxu0 %v3276
      %3316 = vmatpush.bf16.msra.mxu0 %v3273
      %3317 = vmatpush.bf16.msra.mxu0 %v3270
      %3318 = vmatpush.bf16.msra.mxu0 %v3267
      %3319 = vmatpush.bf16.msra.mxu0 %v3264
      %3320 = vmatmul.bf16.gmra.mxu0 %v3307
      %v3321 = vpop.f32.mrf.mxu0
      %v3322 = vadd.f32 0.0, %v3321
      %v3323 = vpop.f32.mrf.mxu0
      %v3324 = vadd.f32 0.0, %v3323
      %3325 = vmatmul.bf16.gmra.mxu0 %v3310
      %v3326 = vpop.f32.mrf.mxu0
      %v3327 = vadd.f32 0.0, %v3326
      %v3328 = vpop.f32.mrf.mxu0
      %v3329 = vadd.f32 0.0, %v3328
      %3330 = vdwg.mxu0
      %3331 = vmatpush.bf16.msra.mxu0 0
      %3332 = vmatpush.bf16.msra.mxu0 0
      %3333 = vmatpush.bf16.msra.mxu0 %v3280
      %3334 = vmatpush.bf16.msra.mxu0 %v3277
      %3335 = vmatpush.bf16.msra.mxu0 %v3274
      %3336 = vmatpush.bf16.msra.mxu0 %v3271
      %3337 = vmatpush.bf16.msra.mxu0 %v3268
      %3338 = vmatpush.bf16.msra.mxu0 %v3265
      %3339 = vmatmul.bf16.gmra.mxu0 %v3307
      %v3340 = vpop.f32.mrf.mxu0
      %v3341 = vadd.f32 0.0, %v3340
      %v3342 = vpop.f32.mrf.mxu0
      %v3343 = vadd.f32 0.0, %v3342
      %3344 = vmatmul.bf16.gmra.mxu0 %v3310
      %v3345 = vpop.f32.mrf.mxu0
      %v3346 = vadd.f32 0.0, %v3345
      %v3347 = vpop.f32.mrf.mxu0
      %v3348 = vadd.f32 0.0, %v3347
      %3349 = vdwg.mxu0
      %3350 = vmatpush.bf16.msra.mxu0 0
      %3351 = vmatpush.bf16.msra.mxu0 0
      %3352 = vmatpush.bf16.msra.mxu0 %v3281
      %3353 = vmatpush.bf16.msra.mxu0 %v3278
      %3354 = vmatpush.bf16.msra.mxu0 %v3275
      %3355 = vmatpush.bf16.msra.mxu0 %v3272
      %3356 = vmatpush.bf16.msra.mxu0 %v3269
      %3357 = vmatpush.bf16.msra.mxu0 %v3266
      %3358 = vmatmul.bf16.gmra.mxu0 %v3307
      %v3359 = vpop.f32.mrf.mxu0
      %v3360 = vadd.f32 0.0, %v3359
      %v3361 = vpop.f32.mrf.mxu0
      %v3362 = vadd.f32 0.0, %v3361
      %3363 = vmatmul.bf16.gmra.mxu0 %v3310
      %v3364 = vpop.f32.mrf.mxu0
      %v3365 = vadd.f32 0.0, %v3364
      %v3366 = vpop.f32.mrf.mxu0
      %v3367 = vadd.f32 0.0, %v3366
      %3368 = vdwg.mxu0
      %3369 = vmatpush.bf16.msra.mxu0 0
      %3370 = vmatpush.bf16.msra.mxu0 0
      %3371 = vmatpush.bf16.msra.mxu0 %v3263
      %3372 = vmatpush.bf16.msra.mxu0 %v3255
      %3373 = vmatpush.bf16.msra.mxu0 %v3247
      %3374 = vmatpush.bf16.msra.mxu0 %v3239
      %3375 = vmatpush.bf16.msra.mxu0 %v3231
      %3376 = vmatpush.bf16.msra.mxu0 %v3223
      %3377 = vmatmul.bf16.gmra.mxu0 %v3307
      %v3378 = vpop.f32.mrf.mxu0
      %v3379 = vadd.f32 0.0, %v3378
      %v3380 = vpop.f32.mrf.mxu0
      %v3381 = vadd.f32 0.0, %v3380
      %3382 = vmatmul.bf16.gmra.mxu0 %v3310
      %v3383 = vpop.f32.mrf.mxu0
      %v3384 = vadd.f32 0.0, %v3383
      %v3385 = vpop.f32.mrf.mxu0
      %v3386 = vadd.f32 0.0, %v3385
      %3387 = vdwg.mxu0
      %v3388 = vadd.f32 %v3135, %v3322
      %v3389 = vadd.f32 %v3154, %v3341
      %v3390 = vadd.f32 %v3173, %v3360
      %v3391 = vadd.f32 %v3192, %v3379
      %v3392 = vadd.f32 %v3137, %v3324
      %v3393 = vadd.f32 %v3156, %v3343
      %v3394 = vadd.f32 %v3175, %v3362
      %v3395 = vadd.f32 %v3194, %v3381
      %v3396 = vadd.f32 %v3140, %v3327
      %v3397 = vadd.f32 %v3159, %v3346
      %v3398 = vadd.f32 %v3178, %v3365
      %v3399 = vadd.f32 %v3197, %v3384
      %v3400 = vadd.f32 %v3142, %v3329
      %v3401 = vadd.f32 %v3161, %v3348
      %v3402 = vadd.f32 %v3180, %v3367
      %v3403 = vadd.f32 %v3199, %v3386
      %v3404 = vld [vmem:[%s9] sm:$0xff]
      %v3405 = vld [vmem:[%s9 + $0x8] sm:$0xff]
      %v3406 = vld [vmem:[%s9 + $0x10] sm:$0xff]
      %v3407 = vld [vmem:[%s9 + $0x18] sm:$0xff]
      %3409 = vset.pattern.permute.xlu0 0
      %3410 = vperm.xlu0 %3409, %v3404
      %v3411 = vpop.permute.xlu0 %3410
      %3414 = vset.pattern.permute.xlu0 0
      %3415 = vperm.xlu0 %3414, %v3405
      %v3416 = vpop.permute.xlu0 %3415
      %3419 = vset.pattern.permute.xlu0 0
      %3420 = vperm.xlu0 %3419, %v3406
      %v3421 = vpop.permute.xlu0 %3420
      %3424 = vset.pattern.permute.xlu0 0
      %3425 = vperm.xlu0 %3424, %v3407
      %v3426 = vpop.permute.xlu0 %3425
      %v3428 = vadd.f32 %v3388, %v3411
      %v3429 = vadd.f32 %v3389, %v3411
      %v3430 = vadd.f32 %v3390, %v3411
      %v3431 = vadd.f32 %v3391, %v3411
      %v3432 = vadd.f32 %v3392, %v3416
      %v3433 = vadd.f32 %v3393, %v3416
      %v3434 = vadd.f32 %v3394, %v3416
      %v3435 = vadd.f32 %v3395, %v3416
      %v3436 = vadd.f32 %v3396, %v3421
      %v3437 = vadd.f32 %v3397, %v3421
      %v3438 = vadd.f32 %v3398, %v3421
      %v3439 = vadd.f32 %v3399, %v3421
      %v3440 = vadd.f32 %v3400, %v3426
      %v3441 = vadd.f32 %v3401, %v3426
      %v3442 = vadd.f32 %v3402, %v3426
      %v3443 = vadd.f32 %v3403, %v3426
      %v3444 = vmax.f32 %v3428, 0.0
      %v3445 = vmax.f32 %v3429, 0.0
      %v3446 = vmax.f32 %v3430, 0.0
      %v3447 = vmax.f32 %v3431, 0.0
      %v3448 = vmax.f32 %v3432, 0.0
      %v3449 = vmax.f32 %v3433, 0.0
      %v3450 = vmax.f32 %v3434, 0.0
      %v3451 = vmax.f32 %v3435, 0.0
      %v3452 = vmax.f32 %v3436, 0.0
      %v3453 = vmax.f32 %v3437, 0.0
      %v3454 = vmax.f32 %v3438, 0.0
      %v3455 = vmax.f32 %v3439, 0.0
      %v3456 = vmax.f32 %v3440, 0.0
      %v3457 = vmax.f32 %v3441, 0.0
      %v3458 = vmax.f32 %v3442, 0.0
      %v3459 = vmax.f32 %v3443, 0.0
      %v3460 = vmul.f32 %v3444, %v1345
      %v3461 = vmul.f32 %v3445, %v1346
      %v3462 = vmul.f32 %v3446, %v1347
      %v3463 = vmul.f32 %v3447, %v1348
      %v3464 = vmul.f32 %v3448, %v1345
      %v3465 = vmul.f32 %v3449, %v1346
      %v3466 = vmul.f32 %v3450, %v1347
      %v3467 = vmul.f32 %v3451, %v1348
      %v3468 = vmul.f32 %v3452, %v1345
      %v3469 = vmul.f32 %v3453, %v1346
      %v3470 = vmul.f32 %v3454, %v1347
      %v3471 = vmul.f32 %v3455, %v1348
      %v3472 = vmul.f32 %v3456, %v1345
      %v3473 = vmul.f32 %v3457, %v1346
      %v3474 = vmul.f32 %v3458, %v1347
      %v3475 = vmul.f32 %v3459, %v1348
      %v3476 = vpack.c.bf16 %v3461, %v3460
      %v3477 = vpack.c.bf16 %v3463, %v3462
      %v3478 = vpack.c.bf16 %v3465, %v3464
      %v3479 = vpack.c.bf16 %v3467, %v3466
      %v3480 = vpack.c.bf16 %v3469, %v3468
      %v3481 = vpack.c.bf16 %v3471, %v3470
      %v3482 = vpack.c.bf16 %v3473, %v3472
      %v3483 = vpack.c.bf16 %v3475, %v3474
      %v3492 = vunpack.c.l.b16 %v3476
      %v3493 = vunpack.c.h.b16 %v3476
      %v3494 = vunpack.c.l.b16 %v3477
      %v3495 = vunpack.c.h.b16 %v3477
      %v3496 = vunpack.c.l.b16 %v3478
      %v3497 = vunpack.c.h.b16 %v3478
      %v3498 = vunpack.c.l.b16 %v3479
      %v3499 = vunpack.c.h.b16 %v3479
      %v3500 = vunpack.c.l.b16 %v3480
      %v3501 = vunpack.c.h.b16 %v3480
      %v3502 = vunpack.c.l.b16 %v3481
      %v3503 = vunpack.c.h.b16 %v3481
      %v3504 = vunpack.c.l.b16 %v3482
      %v3505 = vunpack.c.h.b16 %v3482
      %v3506 = vunpack.c.l.b16 %v3483
      %v3507 = vunpack.c.h.b16 %v3483
      %v3508 = vpack.c.b16 %v3496, %v3492
      %v3509 = vpack.c.b16 %v3497, %v3493
      %v3510 = vpack.c.b16 %v3498, %v3494
      %v3511 = vpack.c.b16 %v3499, %v3495
      %v3512 = vpack.c.b16 %v3504, %v3500
      %v3513 = vpack.c.b16 %v3505, %v3501
      %v3514 = vpack.c.b16 %v3506, %v3502
      %v3515 = vpack.c.b16 %v3507, %v3503
      %3516 = vrot.lane.b32.xlu0 %v3508, 19
      %v3517 = vpop.permute.xlu0 %3516
      %3518 = vrot.lane.b32.xlu0 %v3509, 19
      %v3519 = vpop.permute.xlu0 %3518
      %3520 = vrot.lane.b32.xlu0 %v3510, 19
      %v3521 = vpop.permute.xlu0 %3520
      %3522 = vrot.lane.b32.xlu0 %v3511, 19
      %v3523 = vpop.permute.xlu0 %3522
      %3524 = vrot.lane.b32.xlu0 %v3512, 19
      %v3525 = vpop.permute.xlu0 %3524
      %3526 = vrot.lane.b32.xlu0 %v3513, 19
      %v3527 = vpop.permute.xlu0 %3526
      %3528 = vrot.lane.b32.xlu0 %v3514, 19
      %v3529 = vpop.permute.xlu0 %3528
      %3530 = vrot.lane.b32.xlu0 %v3515, 19
      %v3531 = vpop.permute.xlu0 %3530
      %v3532 = vsel %vm1425, %v3517, %v3519
      %v3533 = vsel %vm1425, %v3519, %v3521
      %v3534 = vsel %vm1425, %v3521, %v3523
      %v3535 = vsel %vm1425, %v3525, %v3527
      %v3536 = vsel %vm1425, %v3527, %v3529
      %v3537 = vsel %vm1425, %v3529, %v3531
      %v3543 = vsel %vm1436, 0, %v3517
      %v3546 = vsel %vm1436, 0, %v3525
      %v3549 = vsel %vm1444, %v3534, 0
      %v3552 = vsel %vm1444, %v3537, 0
      %3558 = vrot.lane.b32.xlu0 %v3543, 127
      %v3559 = vpop.permute.xlu0 %3558
      %3560 = vrot.lane.b32.xlu0 %v3532, 127
      %v3561 = vpop.permute.xlu0 %3560
      %3562 = vrot.lane.b32.xlu0 %v3533, 127
      %v3563 = vpop.permute.xlu0 %3562
      %3564 = vrot.lane.b32.xlu0 %v3549, 127
      %v3565 = vpop.permute.xlu0 %3564
      %3566 = vrot.lane.b32.xlu0 %v3546, 127
      %v3567 = vpop.permute.xlu0 %3566
      %3568 = vrot.lane.b32.xlu0 %v3535, 127
      %v3569 = vpop.permute.xlu0 %3568
      %3570 = vrot.lane.b32.xlu0 %v3536, 127
      %v3571 = vpop.permute.xlu0 %3570
      %3572 = vrot.lane.b32.xlu0 %v3552, 127
      %v3573 = vpop.permute.xlu0 %3572
      %v3574 = vsel %vm1471, %v3559, %v3561
      %v3575 = vsel %vm1471, %v3561, %v3563
      %v3576 = vsel %vm1471, %v3563, %v3565
      %v3577 = vsel %vm1471, %v3567, %v3569
      %v3578 = vsel %vm1471, %v3569, %v3571
      %v3579 = vsel %vm1471, %v3571, %v3573
      %3588 = vrot.lane.b32.xlu0 %v3543, 126
      %v3589 = vpop.permute.xlu0 %3588
      %3590 = vrot.lane.b32.xlu0 %v3532, 126
      %v3591 = vpop.permute.xlu0 %3590
      %3592 = vrot.lane.b32.xlu0 %v3533, 126
      %v3593 = vpop.permute.xlu0 %3592
      %3594 = vrot.lane.b32.xlu0 %v3549, 126
      %v3595 = vpop.permute.xlu0 %3594
      %3596 = vrot.lane.b32.xlu0 %v3546, 126
      %v3597 = vpop.permute.xlu0 %3596
      %3598 = vrot.lane.b32.xlu0 %v3535, 126
      %v3599 = vpop.permute.xlu0 %3598
      %3600 = vrot.lane.b32.xlu0 %v3536, 126
      %v3601 = vpop.permute.xlu0 %3600
      %3602 = vrot.lane.b32.xlu0 %v3552, 126
      %v3603 = vpop.permute.xlu0 %3602
      %v3604 = vsel %vm1502, %v3589, %v3591
      %v3605 = vsel %vm1502, %v3591, %v3593
      %v3606 = vsel %vm1502, %v3593, %v3595
      %v3607 = vsel %vm1502, %v3597, %v3599
      %v3608 = vsel %vm1502, %v3599, %v3601
      %v3609 = vsel %vm1502, %v3601, %v3603
      %v3618 = vld [vmem:[%s10] sm:$0xff]
      %v3619 = vld [vmem:[%s10 + $0x8] sm:$0xff]
      %v3620 = vld [vmem:[%s10 + $0x10] sm:$0xff]
      %v3621 = vld [vmem:[%s10 + $0x18] sm:$0xff]
      %s3622 = scalar_lea.vmem %s10, 32
      %v3623 = vld [vmem:[%s3622] sm:$0xff]
      %v3624 = vld [vmem:[%s3622 + $0x8] sm:$0xff]
      %v3625 = vld [vmem:[%s3622 + $0x10] sm:$0xff]
      %v3626 = vld [vmem:[%s3622 + $0x18] sm:$0xff]
      %v3631 = vunpack.c.l.b16 %v3623
      %v3632 = vunpack.c.h.b16 %v3623
      %v3633 = vunpack.c.l.b16 %v3624
      %v3634 = vunpack.c.h.b16 %v3624
      %v3635 = vunpack.c.l.b16 %v3625
      %v3636 = vunpack.c.h.b16 %v3625
      %v3637 = vunpack.c.l.b16 %v3626
      %v3638 = vunpack.c.h.b16 %v3626
      %v3639 = vpack.c.b16 %v3633, %v3631
      %v3640 = vpack.c.b16 %v3634, %v3632
      %v3641 = vpack.c.b16 %v3637, %v3635
      %v3642 = vpack.c.b16 %v3638, %v3636
      %3645 = vrot.lane.b32.xlu0 %v3543, 110
      %v3646 = vpop.permute.xlu0 %3645
      %3647 = vrot.lane.b32.xlu0 %v3532, 110
      %v3648 = vpop.permute.xlu0 %3647
      %3649 = vrot.lane.b32.xlu0 %v3533, 110
      %v3650 = vpop.permute.xlu0 %3649
      %3651 = vrot.lane.b32.xlu0 %v3549, 110
      %v3652 = vpop.permute.xlu0 %3651
      %3653 = vrot.lane.b32.xlu0 %v3546, 110
      %v3654 = vpop.permute.xlu0 %3653
      %3655 = vrot.lane.b32.xlu0 %v3535, 110
      %v3656 = vpop.permute.xlu0 %3655
      %3657 = vrot.lane.b32.xlu0 %v3536, 110
      %v3658 = vpop.permute.xlu0 %3657
      %3659 = vrot.lane.b32.xlu0 %v3552, 110
      %v3660 = vpop.permute.xlu0 %3659
      %3661 = vrot.lane.b32.xlu0 %v3574, 110
      %v3662 = vpop.permute.xlu0 %3661
      %3663 = vrot.lane.b32.xlu0 %v3575, 110
      %v3664 = vpop.permute.xlu0 %3663
      %3665 = vrot.lane.b32.xlu0 %v3576, 110
      %v3666 = vpop.permute.xlu0 %3665
      %3667 = vrot.lane.b32.xlu0 %v3565, 110
      %v3668 = vpop.permute.xlu0 %3667
      %3669 = vrot.lane.b32.xlu0 %v3577, 110
      %v3670 = vpop.permute.xlu0 %3669
      %3671 = vrot.lane.b32.xlu0 %v3578, 110
      %v3672 = vpop.permute.xlu0 %3671
      %3673 = vrot.lane.b32.xlu0 %v3579, 110
      %v3674 = vpop.permute.xlu0 %3673
      %3675 = vrot.lane.b32.xlu0 %v3573, 110
      %v3676 = vpop.permute.xlu0 %3675
      %3677 = vrot.lane.b32.xlu0 %v3604, 110
      %v3678 = vpop.permute.xlu0 %3677
      %3679 = vrot.lane.b32.xlu0 %v3605, 110
      %v3680 = vpop.permute.xlu0 %3679
      %3681 = vrot.lane.b32.xlu0 %v3606, 110
      %v3682 = vpop.permute.xlu0 %3681
      %3683 = vrot.lane.b32.xlu0 %v3595, 110
      %v3684 = vpop.permute.xlu0 %3683
      %3685 = vrot.lane.b32.xlu0 %v3607, 110
      %v3686 = vpop.permute.xlu0 %3685
      %3687 = vrot.lane.b32.xlu0 %v3608, 110
      %v3688 = vpop.permute.xlu0 %3687
      %3689 = vrot.lane.b32.xlu0 %v3609, 110
      %v3690 = vpop.permute.xlu0 %3689
      %3691 = vrot.lane.b32.xlu0 %v3603, 110
      %v3692 = vpop.permute.xlu0 %3691
      %v3693 = vsel %vm865, %v3646, %v3648
      %v3694 = vsel %vm865, %v3648, %v3650
      %v3695 = vsel %vm865, %v3650, %v3652
      %v3696 = vsel %vm865, %v3654, %v3656
      %v3697 = vsel %vm865, %v3656, %v3658
      %v3698 = vsel %vm865, %v3658, %v3660
      %v3699 = vsel %vm865, %v3662, %v3664
      %v3700 = vsel %vm865, %v3664, %v3666
      %v3701 = vsel %vm865, %v3666, %v3668
      %v3702 = vsel %vm865, %v3670, %v3672
      %v3703 = vsel %vm865, %v3672, %v3674
      %v3704 = vsel %vm865, %v3674, %v3676
      %v3705 = vsel %vm865, %v3678, %v3680
      %v3706 = vsel %vm865, %v3680, %v3682
      %v3707 = vsel %vm865, %v3682, %v3684
      %v3708 = vsel %vm865, %v3686, %v3688
      %v3709 = vsel %vm865, %v3688, %v3690
      %v3710 = vsel %vm865, %v3690, %v3692
      %vm3735 = vcmask 523264
      %v3737 = vsel %vm3735, %v3640, 0
      %v3740 = vsel %vm3735, %v3642, 0
      %3742 = vmatpush.bf16.msra.mxu0 %v3702
      %3743 = vmatpush.bf16.msra.mxu0 %v3699
      %3744 = vmatpush.bf16.msra.mxu0 %v2994
      %3745 = vmatpush.bf16.msra.mxu0 %v2991
      %3746 = vmatpush.bf16.msra.mxu0 %v3696
      %3747 = vmatpush.bf16.msra.mxu0 %v3693
      %3748 = vmatpush.bf16.msra.mxu0 %v2988
      %3749 = vmatpush.bf16.msra.mxu0 %v2985
      %3750 = vmatmul.bf16.gmra.mxu0 %v3639
      %v3751 = vpop.f32.mrf.mxu0
      %v3752 = vadd.f32 0.0, %v3751
      %v3753 = vpop.f32.mrf.mxu0
      %v3754 = vadd.f32 0.0, %v3753
      %3755 = vmatmul.bf16.gmra.mxu0 %v3641
      %v3756 = vpop.f32.mrf.mxu0
      %v3757 = vadd.f32 0.0, %v3756
      %v3758 = vpop.f32.mrf.mxu0
      %v3759 = vadd.f32 0.0, %v3758
      %3760 = vdwg.mxu0
      %3761 = vmatpush.bf16.msra.mxu0 0
      %3762 = vmatpush.bf16.msra.mxu0 0
      %3763 = vmatpush.bf16.msra.mxu0 0
      %3764 = vmatpush.bf16.msra.mxu0 0
      %3765 = vmatpush.bf16.msra.mxu0 %v3708
      %3766 = vmatpush.bf16.msra.mxu0 %v3705
      %3767 = vmatpush.bf16.msra.mxu0 %v3000
      %3768 = vmatpush.bf16.msra.mxu0 %v2997
      %3769 = vmatmul.bf16.gmra.mxu0 %v3737
      %v3770 = vpop.f32.mrf.mxu0
      %v3771 = vadd.f32 %v3752, %v3770
      %v3772 = vpop.f32.mrf.mxu0
      %v3773 = vadd.f32 %v3754, %v3772
      %3774 = vmatmul.bf16.gmra.mxu0 %v3740
      %v3775 = vpop.f32.mrf.mxu0
      %v3776 = vadd.f32 %v3757, %v3775
      %v3777 = vpop.f32.mrf.mxu0
      %v3778 = vadd.f32 %v3759, %v3777
      %3779 = vdwg.mxu0
      %3780 = vmatpush.bf16.msra.mxu0 %v3703
      %3781 = vmatpush.bf16.msra.mxu0 %v3700
      %3782 = vmatpush.bf16.msra.mxu0 %v2995
      %3783 = vmatpush.bf16.msra.mxu0 %v2992
      %3784 = vmatpush.bf16.msra.mxu0 %v3697
      %3785 = vmatpush.bf16.msra.mxu0 %v3694
      %3786 = vmatpush.bf16.msra.mxu0 %v2989
      %3787 = vmatpush.bf16.msra.mxu0 %v2986
      %3788 = vmatmul.bf16.gmra.mxu0 %v3639
      %v3789 = vpop.f32.mrf.mxu0
      %v3790 = vadd.f32 0.0, %v3789
      %v3791 = vpop.f32.mrf.mxu0
      %v3792 = vadd.f32 0.0, %v3791
      %3793 = vmatmul.bf16.gmra.mxu0 %v3641
      %v3794 = vpop.f32.mrf.mxu0
      %v3795 = vadd.f32 0.0, %v3794
      %v3796 = vpop.f32.mrf.mxu0
      %v3797 = vadd.f32 0.0, %v3796
      %3798 = vdwg.mxu0
      %3799 = vmatpush.bf16.msra.mxu0 0
      %3800 = vmatpush.bf16.msra.mxu0 0
      %3801 = vmatpush.bf16.msra.mxu0 0
      %3802 = vmatpush.bf16.msra.mxu0 0
      %3803 = vmatpush.bf16.msra.mxu0 %v3709
      %3804 = vmatpush.bf16.msra.mxu0 %v3706
      %3805 = vmatpush.bf16.msra.mxu0 %v3001
      %3806 = vmatpush.bf16.msra.mxu0 %v2998
      %3807 = vmatmul.bf16.gmra.mxu0 %v3737
      %v3808 = vpop.f32.mrf.mxu0
      %v3809 = vadd.f32 %v3790, %v3808
      %v3810 = vpop.f32.mrf.mxu0
      %v3811 = vadd.f32 %v3792, %v3810
      %3812 = vmatmul.bf16.gmra.mxu0 %v3740
      %v3813 = vpop.f32.mrf.mxu0
      %v3814 = vadd.f32 %v3795, %v3813
      %v3815 = vpop.f32.mrf.mxu0
      %v3816 = vadd.f32 %v3797, %v3815
      %3817 = vdwg.mxu0
      %3818 = vmatpush.bf16.msra.mxu0 %v3704
      %3819 = vmatpush.bf16.msra.mxu0 %v3701
      %3820 = vmatpush.bf16.msra.mxu0 %v2996
      %3821 = vmatpush.bf16.msra.mxu0 %v2993
      %3822 = vmatpush.bf16.msra.mxu0 %v3698
      %3823 = vmatpush.bf16.msra.mxu0 %v3695
      %3824 = vmatpush.bf16.msra.mxu0 %v2990
      %3825 = vmatpush.bf16.msra.mxu0 %v2987
      %3826 = vmatmul.bf16.gmra.mxu0 %v3639
      %v3827 = vpop.f32.mrf.mxu0
      %v3828 = vadd.f32 0.0, %v3827
      %v3829 = vpop.f32.mrf.mxu0
      %v3830 = vadd.f32 0.0, %v3829
      %3831 = vmatmul.bf16.gmra.mxu0 %v3641
      %v3832 = vpop.f32.mrf.mxu0
      %v3833 = vadd.f32 0.0, %v3832
      %v3834 = vpop.f32.mrf.mxu0
      %v3835 = vadd.f32 0.0, %v3834
      %3836 = vdwg.mxu0
      %3837 = vmatpush.bf16.msra.mxu0 0
      %3838 = vmatpush.bf16.msra.mxu0 0
      %3839 = vmatpush.bf16.msra.mxu0 0
      %3840 = vmatpush.bf16.msra.mxu0 0
      %3841 = vmatpush.bf16.msra.mxu0 %v3710
      %3842 = vmatpush.bf16.msra.mxu0 %v3707
      %3843 = vmatpush.bf16.msra.mxu0 %v3002
      %3844 = vmatpush.bf16.msra.mxu0 %v2999
      %3845 = vmatmul.bf16.gmra.mxu0 %v3737
      %v3846 = vpop.f32.mrf.mxu0
      %v3847 = vadd.f32 %v3828, %v3846
      %v3848 = vpop.f32.mrf.mxu0
      %v3849 = vadd.f32 %v3830, %v3848
      %3850 = vmatmul.bf16.gmra.mxu0 %v3740
      %v3851 = vpop.f32.mrf.mxu0
      %v3852 = vadd.f32 %v3833, %v3851
      %v3853 = vpop.f32.mrf.mxu0
      %v3854 = vadd.f32 %v3835, %v3853
      %3855 = vdwg.mxu0
      %3856 = vmatpush.bf16.msra.mxu0 %v3676
      %3857 = vmatpush.bf16.msra.mxu0 %v3668
      %3858 = vmatpush.bf16.msra.mxu0 %v2968
      %3859 = vmatpush.bf16.msra.mxu0 %v2960
      %3860 = vmatpush.bf16.msra.mxu0 %v3660
      %3861 = vmatpush.bf16.msra.mxu0 %v3652
      %3862 = vmatpush.bf16.msra.mxu0 %v2952
      %3863 = vmatpush.bf16.msra.mxu0 %v2944
      %3864 = vmatmul.bf16.gmra.mxu0 %v3639
      %v3865 = vpop.f32.mrf.mxu0
      %v3866 = vadd.f32 0.0, %v3865
      %v3867 = vpop.f32.mrf.mxu0
      %v3868 = vadd.f32 0.0, %v3867
      %3869 = vmatmul.bf16.gmra.mxu0 %v3641
      %v3870 = vpop.f32.mrf.mxu0
      %v3871 = vadd.f32 0.0, %v3870
      %v3872 = vpop.f32.mrf.mxu0
      %v3873 = vadd.f32 0.0, %v3872
      %3874 = vdwg.mxu0
      %3875 = vmatpush.bf16.msra.mxu0 0
      %3876 = vmatpush.bf16.msra.mxu0 0
      %3877 = vmatpush.bf16.msra.mxu0 0
      %3878 = vmatpush.bf16.msra.mxu0 0
      %3879 = vmatpush.bf16.msra.mxu0 %v3692
      %3880 = vmatpush.bf16.msra.mxu0 %v3684
      %3881 = vmatpush.bf16.msra.mxu0 %v2984
      %3882 = vmatpush.bf16.msra.mxu0 %v2976
      %3883 = vmatmul.bf16.gmra.mxu0 %v3737
      %v3884 = vpop.f32.mrf.mxu0
      %v3885 = vadd.f32 %v3866, %v3884
      %v3886 = vpop.f32.mrf.mxu0
      %v3887 = vadd.f32 %v3868, %v3886
      %3888 = vmatmul.bf16.gmra.mxu0 %v3740
      %v3889 = vpop.f32.mrf.mxu0
      %v3890 = vadd.f32 %v3871, %v3889
      %v3891 = vpop.f32.mrf.mxu0
      %v3892 = vadd.f32 %v3873, %v3891
      %3893 = vdwg.mxu0
      %v3898 = vunpack.c.l.b16 %v3618
      %v3899 = vunpack.c.h.b16 %v3618
      %v3900 = vunpack.c.l.b16 %v3619
      %v3901 = vunpack.c.h.b16 %v3619
      %v3902 = vunpack.c.l.b16 %v3620
      %v3903 = vunpack.c.h.b16 %v3620
      %v3904 = vunpack.c.l.b16 %v3621
      %v3905 = vunpack.c.h.b16 %v3621
      %v3906 = vpack.c.b16 %v3900, %v3898
      %v3907 = vpack.c.b16 %v3901, %v3899
      %v3908 = vpack.c.b16 %v3904, %v3902
      %v3909 = vpack.c.b16 %v3905, %v3903
      %v3913 = vsel %vm3735, %v3907, 0
      %v3916 = vsel %vm3735, %v3909, 0
      %3918 = vmatpush.bf16.msra.mxu0 %v3577
      %3919 = vmatpush.bf16.msra.mxu0 %v3574
      %3920 = vmatpush.bf16.msra.mxu0 %v2877
      %3921 = vmatpush.bf16.msra.mxu0 %v2874
      %3922 = vmatpush.bf16.msra.mxu0 %v3546
      %3923 = vmatpush.bf16.msra.mxu0 %v3543
      %3924 = vmatpush.bf16.msra.mxu0 %v2846
      %3925 = vmatpush.bf16.msra.mxu0 %v2843
      %3926 = vmatmul.bf16.gmra.mxu0 %v3906
      %v3927 = vpop.f32.mrf.mxu0
      %v3928 = vadd.f32 %v3771, %v3927
      %v3929 = vpop.f32.mrf.mxu0
      %v3930 = vadd.f32 %v3773, %v3929
      %3931 = vmatmul.bf16.gmra.mxu0 %v3908
      %v3932 = vpop.f32.mrf.mxu0
      %v3933 = vadd.f32 %v3776, %v3932
      %v3934 = vpop.f32.mrf.mxu0
      %v3935 = vadd.f32 %v3778, %v3934
      %3936 = vdwg.mxu0
      %3937 = vmatpush.bf16.msra.mxu0 0
      %3938 = vmatpush.bf16.msra.mxu0 0
      %3939 = vmatpush.bf16.msra.mxu0 0
      %3940 = vmatpush.bf16.msra.mxu0 0
      %3941 = vmatpush.bf16.msra.mxu0 %v3607
      %3942 = vmatpush.bf16.msra.mxu0 %v3604
      %3943 = vmatpush.bf16.msra.mxu0 %v2907
      %3944 = vmatpush.bf16.msra.mxu0 %v2904
      %3945 = vmatmul.bf16.gmra.mxu0 %v3913
      %v3946 = vpop.f32.mrf.mxu0
      %v3947 = vadd.f32 %v3928, %v3946
      %v3948 = vpop.f32.mrf.mxu0
      %v3949 = vadd.f32 %v3930, %v3948
      %3950 = vmatmul.bf16.gmra.mxu0 %v3916
      %v3951 = vpop.f32.mrf.mxu0
      %v3952 = vadd.f32 %v3933, %v3951
      %v3953 = vpop.f32.mrf.mxu0
      %v3954 = vadd.f32 %v3935, %v3953
      %3955 = vdwg.mxu0
      %3956 = vmatpush.bf16.msra.mxu0 %v3578
      %3957 = vmatpush.bf16.msra.mxu0 %v3575
      %3958 = vmatpush.bf16.msra.mxu0 %v2878
      %3959 = vmatpush.bf16.msra.mxu0 %v2875
      %3960 = vmatpush.bf16.msra.mxu0 %v3535
      %3961 = vmatpush.bf16.msra.mxu0 %v3532
      %3962 = vmatpush.bf16.msra.mxu0 %v2835
      %3963 = vmatpush.bf16.msra.mxu0 %v2832
      %3964 = vmatmul.bf16.gmra.mxu0 %v3906
      %v3965 = vpop.f32.mrf.mxu0
      %v3966 = vadd.f32 %v3809, %v3965
      %v3967 = vpop.f32.mrf.mxu0
      %v3968 = vadd.f32 %v3811, %v3967
      %3969 = vmatmul.bf16.gmra.mxu0 %v3908
      %v3970 = vpop.f32.mrf.mxu0
      %v3971 = vadd.f32 %v3814, %v3970
      %v3972 = vpop.f32.mrf.mxu0
      %v3973 = vadd.f32 %v3816, %v3972
      %3974 = vdwg.mxu0
      %3975 = vmatpush.bf16.msra.mxu0 0
      %3976 = vmatpush.bf16.msra.mxu0 0
      %3977 = vmatpush.bf16.msra.mxu0 0
      %3978 = vmatpush.bf16.msra.mxu0 0
      %3979 = vmatpush.bf16.msra.mxu0 %v3608
      %3980 = vmatpush.bf16.msra.mxu0 %v3605
      %3981 = vmatpush.bf16.msra.mxu0 %v2908
      %3982 = vmatpush.bf16.msra.mxu0 %v2905
      %3983 = vmatmul.bf16.gmra.mxu0 %v3913
      %v3984 = vpop.f32.mrf.mxu0
      %v3985 = vadd.f32 %v3966, %v3984
      %v3986 = vpop.f32.mrf.mxu0
      %v3987 = vadd.f32 %v3968, %v3986
      %3988 = vmatmul.bf16.gmra.mxu0 %v3916
      %v3989 = vpop.f32.mrf.mxu0
      %v3990 = vadd.f32 %v3971, %v3989
      %v3991 = vpop.f32.mrf.mxu0
      %v3992 = vadd.f32 %v3973, %v3991
      %3993 = vdwg.mxu0
      %3994 = vmatpush.bf16.msra.mxu0 %v3579
      %3995 = vmatpush.bf16.msra.mxu0 %v3576
      %3996 = vmatpush.bf16.msra.mxu0 %v2879
      %3997 = vmatpush.bf16.msra.mxu0 %v2876
      %3998 = vmatpush.bf16.msra.mxu0 %v3536
      %3999 = vmatpush.bf16.msra.mxu0 %v3533
      %4000 = vmatpush.bf16.msra.mxu0 %v2836
      %4001 = vmatpush.bf16.msra.mxu0 %v2833
      %4002 = vmatmul.bf16.gmra.mxu0 %v3906
      %v4003 = vpop.f32.mrf.mxu0
      %v4004 = vadd.f32 %v3847, %v4003
      %v4005 = vpop.f32.mrf.mxu0
      %v4006 = vadd.f32 %v3849, %v4005
      %4007 = vmatmul.bf16.gmra.mxu0 %v3908
      %v4008 = vpop.f32.mrf.mxu0
      %v4009 = vadd.f32 %v3852, %v4008
      %v4010 = vpop.f32.mrf.mxu0
      %v4011 = vadd.f32 %v3854, %v4010
      %4012 = vdwg.mxu0
      %4013 = vmatpush.bf16.msra.mxu0 0
      %4014 = vmatpush.bf16.msra.mxu0 0
      %4015 = vmatpush.bf16.msra.mxu0 0
      %4016 = vmatpush.bf16.msra.mxu0 0
      %4017 = vmatpush.bf16.msra.mxu0 %v3609
      %4018 = vmatpush.bf16.msra.mxu0 %v3606
      %4019 = vmatpush.bf16.msra.mxu0 %v2909
      %4020 = vmatpush.bf16.msra.mxu0 %v2906
      %4021 = vmatmul.bf16.gmra.mxu0 %v3913
      %v4022 = vpop.f32.mrf.mxu0
      %v4023 = vadd.f32 %v4004, %v4022
      %v4024 = vpop.f32.mrf.mxu0
      %v4025 = vadd.f32 %v4006, %v4024
      %4026 = vmatmul.bf16.gmra.mxu0 %v3916
      %v4027 = vpop.f32.mrf.mxu0
      %v4028 = vadd.f32 %v4009, %v4027
      %v4029 = vpop.f32.mrf.mxu0
      %v4030 = vadd.f32 %v4011, %v4029
      %4031 = vdwg.mxu0
      %4032 = vmatpush.bf16.msra.mxu0 %v3573
      %4033 = vmatpush.bf16.msra.mxu0 %v3565
      %4034 = vmatpush.bf16.msra.mxu0 %v2873
      %4035 = vmatpush.bf16.msra.mxu0 %v2865
      %4036 = vmatpush.bf16.msra.mxu0 %v3552
      %4037 = vmatpush.bf16.msra.mxu0 %v3549
      %4038 = vmatpush.bf16.msra.mxu0 %v2852
      %4039 = vmatpush.bf16.msra.mxu0 %v2849
      %4040 = vmatmul.bf16.gmra.mxu0 %v3906
      %v4041 = vpop.f32.mrf.mxu0
      %v4042 = vadd.f32 %v3885, %v4041
      %v4043 = vpop.f32.mrf.mxu0
      %v4044 = vadd.f32 %v3887, %v4043
      %4045 = vmatmul.bf16.gmra.mxu0 %v3908
      %v4046 = vpop.f32.mrf.mxu0
      %v4047 = vadd.f32 %v3890, %v4046
      %v4048 = vpop.f32.mrf.mxu0
      %v4049 = vadd.f32 %v3892, %v4048
      %4050 = vdwg.mxu0
      %4051 = vmatpush.bf16.msra.mxu0 0
      %4052 = vmatpush.bf16.msra.mxu0 0
      %4053 = vmatpush.bf16.msra.mxu0 0
      %4054 = vmatpush.bf16.msra.mxu0 0
      %4055 = vmatpush.bf16.msra.mxu0 %v3603
      %4056 = vmatpush.bf16.msra.mxu0 %v3595
      %4057 = vmatpush.bf16.msra.mxu0 %v2903
      %4058 = vmatpush.bf16.msra.mxu0 %v2895
      %4059 = vmatmul.bf16.gmra.mxu0 %v3913
      %v4060 = vpop.f32.mrf.mxu0
      %v4061 = vadd.f32 %v4042, %v4060
      %v4062 = vpop.f32.mrf.mxu0
      %v4063 = vadd.f32 %v4044, %v4062
      %4064 = vmatmul.bf16.gmra.mxu0 %v3916
      %v4065 = vpop.f32.mrf.mxu0
      %v4066 = vadd.f32 %v4047, %v4065
      %v4067 = vpop.f32.mrf.mxu0
      %v4068 = vadd.f32 %v4049, %v4067
      %4069 = vdwg.mxu0
      %s4070 = scalar_lea.vmem %s10, 64
      %v4071 = vld [vmem:[%s4070] sm:$0xff]
      %v4072 = vld [vmem:[%s4070 + $0x8] sm:$0xff]
      %v4073 = vld [vmem:[%s4070 + $0x10] sm:$0xff]
      %v4074 = vld [vmem:[%s4070 + $0x18] sm:$0xff]
      %v4079 = vunpack.c.l.b16 %v4071
      %v4080 = vunpack.c.h.b16 %v4071
      %v4081 = vunpack.c.l.b16 %v4072
      %v4082 = vunpack.c.h.b16 %v4072
      %v4083 = vunpack.c.l.b16 %v4073
      %v4084 = vunpack.c.h.b16 %v4073
      %v4085 = vunpack.c.l.b16 %v4074
      %v4086 = vunpack.c.h.b16 %v4074
      %v4087 = vpack.c.b16 %v4081, %v4079
      %v4088 = vpack.c.b16 %v4082, %v4080
      %v4089 = vpack.c.b16 %v4085, %v4083
      %v4090 = vpack.c.b16 %v4086, %v4084
      %4093 = vrot.lane.b32.xlu0 %v3543, 92
      %v4094 = vpop.permute.xlu0 %4093
      %4095 = vrot.lane.b32.xlu0 %v3532, 92
      %v4096 = vpop.permute.xlu0 %4095
      %4097 = vrot.lane.b32.xlu0 %v3533, 92
      %v4098 = vpop.permute.xlu0 %4097
      %4099 = vrot.lane.b32.xlu0 %v3549, 92
      %v4100 = vpop.permute.xlu0 %4099
      %4101 = vrot.lane.b32.xlu0 %v3546, 92
      %v4102 = vpop.permute.xlu0 %4101
      %4103 = vrot.lane.b32.xlu0 %v3535, 92
      %v4104 = vpop.permute.xlu0 %4103
      %4105 = vrot.lane.b32.xlu0 %v3536, 92
      %v4106 = vpop.permute.xlu0 %4105
      %4107 = vrot.lane.b32.xlu0 %v3552, 92
      %v4108 = vpop.permute.xlu0 %4107
      %4109 = vrot.lane.b32.xlu0 %v3574, 92
      %v4110 = vpop.permute.xlu0 %4109
      %4111 = vrot.lane.b32.xlu0 %v3575, 92
      %v4112 = vpop.permute.xlu0 %4111
      %4113 = vrot.lane.b32.xlu0 %v3576, 92
      %v4114 = vpop.permute.xlu0 %4113
      %4115 = vrot.lane.b32.xlu0 %v3565, 92
      %v4116 = vpop.permute.xlu0 %4115
      %4117 = vrot.lane.b32.xlu0 %v3577, 92
      %v4118 = vpop.permute.xlu0 %4117
      %4119 = vrot.lane.b32.xlu0 %v3578, 92
      %v4120 = vpop.permute.xlu0 %4119
      %4121 = vrot.lane.b32.xlu0 %v3579, 92
      %v4122 = vpop.permute.xlu0 %4121
      %4123 = vrot.lane.b32.xlu0 %v3573, 92
      %v4124 = vpop.permute.xlu0 %4123
      %4125 = vrot.lane.b32.xlu0 %v3604, 92
      %v4126 = vpop.permute.xlu0 %4125
      %4127 = vrot.lane.b32.xlu0 %v3605, 92
      %v4128 = vpop.permute.xlu0 %4127
      %4129 = vrot.lane.b32.xlu0 %v3606, 92
      %v4130 = vpop.permute.xlu0 %4129
      %4131 = vrot.lane.b32.xlu0 %v3595, 92
      %v4132 = vpop.permute.xlu0 %4131
      %4133 = vrot.lane.b32.xlu0 %v3607, 92
      %v4134 = vpop.permute.xlu0 %4133
      %4135 = vrot.lane.b32.xlu0 %v3608, 92
      %v4136 = vpop.permute.xlu0 %4135
      %4137 = vrot.lane.b32.xlu0 %v3609, 92
      %v4138 = vpop.permute.xlu0 %4137
      %4139 = vrot.lane.b32.xlu0 %v3603, 92
      %v4140 = vpop.permute.xlu0 %4139
      %v4141 = vsel %vm1174, %v4094, %v4096
      %v4142 = vsel %vm1174, %v4096, %v4098
      %v4143 = vsel %vm1174, %v4098, %v4100
      %v4144 = vsel %vm1174, %v4102, %v4104
      %v4145 = vsel %vm1174, %v4104, %v4106
      %v4146 = vsel %vm1174, %v4106, %v4108
      %v4147 = vsel %vm1174, %v4110, %v4112
      %v4148 = vsel %vm1174, %v4112, %v4114
      %v4149 = vsel %vm1174, %v4114, %v4116
      %v4150 = vsel %vm1174, %v4118, %v4120
      %v4151 = vsel %vm1174, %v4120, %v4122
      %v4152 = vsel %vm1174, %v4122, %v4124
      %v4153 = vsel %vm1174, %v4126, %v4128
      %v4154 = vsel %vm1174, %v4128, %v4130
      %v4155 = vsel %vm1174, %v4130, %v4132
      %v4156 = vsel %vm1174, %v4134, %v4136
      %v4157 = vsel %vm1174, %v4136, %v4138
      %v4158 = vsel %vm1174, %v4138, %v4140
      %v4184 = vsel %vm3735, %v4088, 0
      %v4187 = vsel %vm3735, %v4090, 0
      %4189 = vmatpush.bf16.msra.mxu0 %v4150
      %4190 = vmatpush.bf16.msra.mxu0 %v4147
      %4191 = vmatpush.bf16.msra.mxu0 %v3273
      %4192 = vmatpush.bf16.msra.mxu0 %v3270
      %4193 = vmatpush.bf16.msra.mxu0 %v4144
      %4194 = vmatpush.bf16.msra.mxu0 %v4141
      %4195 = vmatpush.bf16.msra.mxu0 %v3267
      %4196 = vmatpush.bf16.msra.mxu0 %v3264
      %4197 = vmatmul.bf16.gmra.mxu0 %v4087
      %v4198 = vpop.f32.mrf.mxu0
      %v4199 = vadd.f32 0.0, %v4198
      %v4200 = vpop.f32.mrf.mxu0
      %v4201 = vadd.f32 0.0, %v4200
      %4202 = vmatmul.bf16.gmra.mxu0 %v4089
      %v4203 = vpop.f32.mrf.mxu0
      %v4204 = vadd.f32 0.0, %v4203
      %v4205 = vpop.f32.mrf.mxu0
      %v4206 = vadd.f32 0.0, %v4205
      %4207 = vdwg.mxu0
      %4208 = vmatpush.bf16.msra.mxu0 0
      %4209 = vmatpush.bf16.msra.mxu0 0
      %4210 = vmatpush.bf16.msra.mxu0 0
      %4211 = vmatpush.bf16.msra.mxu0 0
      %4212 = vmatpush.bf16.msra.mxu0 %v4156
      %4213 = vmatpush.bf16.msra.mxu0 %v4153
      %4214 = vmatpush.bf16.msra.mxu0 %v3279
      %4215 = vmatpush.bf16.msra.mxu0 %v3276
      %4216 = vmatmul.bf16.gmra.mxu0 %v4184
      %v4217 = vpop.f32.mrf.mxu0
      %v4218 = vadd.f32 %v4199, %v4217
      %v4219 = vpop.f32.mrf.mxu0
      %v4220 = vadd.f32 %v4201, %v4219
      %4221 = vmatmul.bf16.gmra.mxu0 %v4187
      %v4222 = vpop.f32.mrf.mxu0
      %v4223 = vadd.f32 %v4204, %v4222
      %v4224 = vpop.f32.mrf.mxu0
      %v4225 = vadd.f32 %v4206, %v4224
      %4226 = vdwg.mxu0
      %4227 = vmatpush.bf16.msra.mxu0 %v4151
      %4228 = vmatpush.bf16.msra.mxu0 %v4148
      %4229 = vmatpush.bf16.msra.mxu0 %v3274
      %4230 = vmatpush.bf16.msra.mxu0 %v3271
      %4231 = vmatpush.bf16.msra.mxu0 %v4145
      %4232 = vmatpush.bf16.msra.mxu0 %v4142
      %4233 = vmatpush.bf16.msra.mxu0 %v3268
      %4234 = vmatpush.bf16.msra.mxu0 %v3265
      %4235 = vmatmul.bf16.gmra.mxu0 %v4087
      %v4236 = vpop.f32.mrf.mxu0
      %v4237 = vadd.f32 0.0, %v4236
      %v4238 = vpop.f32.mrf.mxu0
      %v4239 = vadd.f32 0.0, %v4238
      %4240 = vmatmul.bf16.gmra.mxu0 %v4089
      %v4241 = vpop.f32.mrf.mxu0
      %v4242 = vadd.f32 0.0, %v4241
      %v4243 = vpop.f32.mrf.mxu0
      %v4244 = vadd.f32 0.0, %v4243
      %4245 = vdwg.mxu0
      %4246 = vmatpush.bf16.msra.mxu0 0
      %4247 = vmatpush.bf16.msra.mxu0 0
      %4248 = vmatpush.bf16.msra.mxu0 0
      %4249 = vmatpush.bf16.msra.mxu0 0
      %4250 = vmatpush.bf16.msra.mxu0 %v4157
      %4251 = vmatpush.bf16.msra.mxu0 %v4154
      %4252 = vmatpush.bf16.msra.mxu0 %v3280
      %4253 = vmatpush.bf16.msra.mxu0 %v3277
      %4254 = vmatmul.bf16.gmra.mxu0 %v4184
      %v4255 = vpop.f32.mrf.mxu0
      %v4256 = vadd.f32 %v4237, %v4255
      %v4257 = vpop.f32.mrf.mxu0
      %v4258 = vadd.f32 %v4239, %v4257
      %4259 = vmatmul.bf16.gmra.mxu0 %v4187
      %v4260 = vpop.f32.mrf.mxu0
      %v4261 = vadd.f32 %v4242, %v4260
      %v4262 = vpop.f32.mrf.mxu0
      %v4263 = vadd.f32 %v4244, %v4262
      %4264 = vdwg.mxu0
      %4265 = vmatpush.bf16.msra.mxu0 %v4152
      %4266 = vmatpush.bf16.msra.mxu0 %v4149
      %4267 = vmatpush.bf16.msra.mxu0 %v3275
      %4268 = vmatpush.bf16.msra.mxu0 %v3272
      %4269 = vmatpush.bf16.msra.mxu0 %v4146
      %4270 = vmatpush.bf16.msra.mxu0 %v4143
      %4271 = vmatpush.bf16.msra.mxu0 %v3269
      %4272 = vmatpush.bf16.msra.mxu0 %v3266
      %4273 = vmatmul.bf16.gmra.mxu0 %v4087
      %v4274 = vpop.f32.mrf.mxu0
      %v4275 = vadd.f32 0.0, %v4274
      %v4276 = vpop.f32.mrf.mxu0
      %v4277 = vadd.f32 0.0, %v4276
      %4278 = vmatmul.bf16.gmra.mxu0 %v4089
      %v4279 = vpop.f32.mrf.mxu0
      %v4280 = vadd.f32 0.0, %v4279
      %v4281 = vpop.f32.mrf.mxu0
      %v4282 = vadd.f32 0.0, %v4281
      %4283 = vdwg.mxu0
      %4284 = vmatpush.bf16.msra.mxu0 0
      %4285 = vmatpush.bf16.msra.mxu0 0
      %4286 = vmatpush.bf16.msra.mxu0 0
      %4287 = vmatpush.bf16.msra.mxu0 0
      %4288 = vmatpush.bf16.msra.mxu0 %v4158
      %4289 = vmatpush.bf16.msra.mxu0 %v4155
      %4290 = vmatpush.bf16.msra.mxu0 %v3281
      %4291 = vmatpush.bf16.msra.mxu0 %v3278
      %4292 = vmatmul.bf16.gmra.mxu0 %v4184
      %v4293 = vpop.f32.mrf.mxu0
      %v4294 = vadd.f32 %v4275, %v4293
      %v4295 = vpop.f32.mrf.mxu0
      %v4296 = vadd.f32 %v4277, %v4295
      %4297 = vmatmul.bf16.gmra.mxu0 %v4187
      %v4298 = vpop.f32.mrf.mxu0
      %v4299 = vadd.f32 %v4280, %v4298
      %v4300 = vpop.f32.mrf.mxu0
      %v4301 = vadd.f32 %v4282, %v4300
      %4302 = vdwg.mxu0
      %4303 = vmatpush.bf16.msra.mxu0 %v4124
      %4304 = vmatpush.bf16.msra.mxu0 %v4116
      %4305 = vmatpush.bf16.msra.mxu0 %v3247
      %4306 = vmatpush.bf16.msra.mxu0 %v3239
      %4307 = vmatpush.bf16.msra.mxu0 %v4108
      %4308 = vmatpush.bf16.msra.mxu0 %v4100
      %4309 = vmatpush.bf16.msra.mxu0 %v3231
      %4310 = vmatpush.bf16.msra.mxu0 %v3223
      %4311 = vmatmul.bf16.gmra.mxu0 %v4087
      %v4312 = vpop.f32.mrf.mxu0
      %v4313 = vadd.f32 0.0, %v4312
      %v4314 = vpop.f32.mrf.mxu0
      %v4315 = vadd.f32 0.0, %v4314
      %4316 = vmatmul.bf16.gmra.mxu0 %v4089
      %v4317 = vpop.f32.mrf.mxu0
      %v4318 = vadd.f32 0.0, %v4317
      %v4319 = vpop.f32.mrf.mxu0
      %v4320 = vadd.f32 0.0, %v4319
      %4321 = vdwg.mxu0
      %4322 = vmatpush.bf16.msra.mxu0 0
      %4323 = vmatpush.bf16.msra.mxu0 0
      %4324 = vmatpush.bf16.msra.mxu0 0
      %4325 = vmatpush.bf16.msra.mxu0 0
      %4326 = vmatpush.bf16.msra.mxu0 %v4140
      %4327 = vmatpush.bf16.msra.mxu0 %v4132
      %4328 = vmatpush.bf16.msra.mxu0 %v3263
      %4329 = vmatpush.bf16.msra.mxu0 %v3255
      %4330 = vmatmul.bf16.gmra.mxu0 %v4184
      %v4331 = vpop.f32.mrf.mxu0
      %v4332 = vadd.f32 %v4313, %v4331
      %v4333 = vpop.f32.mrf.mxu0
      %v4334 = vadd.f32 %v4315, %v4333
      %4335 = vmatmul.bf16.gmra.mxu0 %v4187
      %v4336 = vpop.f32.mrf.mxu0
      %v4337 = vadd.f32 %v4318, %v4336
      %v4338 = vpop.f32.mrf.mxu0
      %v4339 = vadd.f32 %v4320, %v4338
      %4340 = vdwg.mxu0
      %v4341 = vadd.f32 %v3947, %v4218
      %v4342 = vadd.f32 %v3985, %v4256
      %v4343 = vadd.f32 %v4023, %v4294
      %v4344 = vadd.f32 %v4061, %v4332
      %v4345 = vadd.f32 %v3949, %v4220
      %v4346 = vadd.f32 %v3987, %v4258
      %v4347 = vadd.f32 %v4025, %v4296
      %v4348 = vadd.f32 %v4063, %v4334
      %v4349 = vadd.f32 %v3952, %v4223
      %v4350 = vadd.f32 %v3990, %v4261
      %v4351 = vadd.f32 %v4028, %v4299
      %v4352 = vadd.f32 %v4066, %v4337
      %v4353 = vadd.f32 %v3954, %v4225
      %v4354 = vadd.f32 %v3992, %v4263
      %v4355 = vadd.f32 %v4030, %v4301
      %v4356 = vadd.f32 %v4068, %v4339
      %v4357 = vld [vmem:[%s11] sm:$0xff]
      %v4358 = vld [vmem:[%s11 + $0x8] sm:$0xff]
      %v4359 = vld [vmem:[%s11 + $0x10] sm:$0xff]
      %v4360 = vld [vmem:[%s11 + $0x18] sm:$0xff]
      %4362 = vset.pattern.permute.xlu0 0
      %4363 = vperm.xlu0 %4362, %v4357
      %v4364 = vpop.permute.xlu0 %4363
      %4367 = vset.pattern.permute.xlu0 0
      %4368 = vperm.xlu0 %4367, %v4358
      %v4369 = vpop.permute.xlu0 %4368
      %4372 = vset.pattern.permute.xlu0 0
      %4373 = vperm.xlu0 %4372, %v4359
      %v4374 = vpop.permute.xlu0 %4373
      %4377 = vset.pattern.permute.xlu0 0
      %4378 = vperm.xlu0 %4377, %v4360
      %v4379 = vpop.permute.xlu0 %4378
      %v4381 = vadd.f32 %v4341, %v4364
      %v4382 = vadd.f32 %v4342, %v4364
      %v4383 = vadd.f32 %v4343, %v4364
      %v4384 = vadd.f32 %v4344, %v4364
      %v4385 = vadd.f32 %v4345, %v4369
      %v4386 = vadd.f32 %v4346, %v4369
      %v4387 = vadd.f32 %v4347, %v4369
      %v4388 = vadd.f32 %v4348, %v4369
      %v4389 = vadd.f32 %v4349, %v4374
      %v4390 = vadd.f32 %v4350, %v4374
      %v4391 = vadd.f32 %v4351, %v4374
      %v4392 = vadd.f32 %v4352, %v4374
      %v4393 = vadd.f32 %v4353, %v4379
      %v4394 = vadd.f32 %v4354, %v4379
      %v4395 = vadd.f32 %v4355, %v4379
      %v4396 = vadd.f32 %v4356, %v4379
      %v4397 = vmax.f32 %v4381, 0.0
      %v4398 = vmax.f32 %v4382, 0.0
      %v4399 = vmax.f32 %v4383, 0.0
      %v4400 = vmax.f32 %v4384, 0.0
      %v4401 = vmax.f32 %v4385, 0.0
      %v4402 = vmax.f32 %v4386, 0.0
      %v4403 = vmax.f32 %v4387, 0.0
      %v4404 = vmax.f32 %v4388, 0.0
      %v4405 = vmax.f32 %v4389, 0.0
      %v4406 = vmax.f32 %v4390, 0.0
      %v4407 = vmax.f32 %v4391, 0.0
      %v4408 = vmax.f32 %v4392, 0.0
      %v4409 = vmax.f32 %v4393, 0.0
      %v4410 = vmax.f32 %v4394, 0.0
      %v4411 = vmax.f32 %v4395, 0.0
      %v4412 = vmax.f32 %v4396, 0.0
      %v4413 = vmul.f32 %v4397, %v1345
      %v4414 = vmul.f32 %v4398, %v1346
      %v4415 = vmul.f32 %v4399, %v1347
      %v4416 = vmul.f32 %v4400, %v1348
      %v4417 = vmul.f32 %v4401, %v1345
      %v4418 = vmul.f32 %v4402, %v1346
      %v4419 = vmul.f32 %v4403, %v1347
      %v4420 = vmul.f32 %v4404, %v1348
      %v4421 = vmul.f32 %v4405, %v1345
      %v4422 = vmul.f32 %v4406, %v1346
      %v4423 = vmul.f32 %v4407, %v1347
      %v4424 = vmul.f32 %v4408, %v1348
      %v4425 = vmul.f32 %v4409, %v1345
      %v4426 = vmul.f32 %v4410, %v1346
      %v4427 = vmul.f32 %v4411, %v1347
      %v4428 = vmul.f32 %v4412, %v1348
      %v4429 = vpack.c.bf16 %v4414, %v4413
      %v4430 = vpack.c.bf16 %v4416, %v4415
      %v4431 = vpack.c.bf16 %v4418, %v4417
      %v4432 = vpack.c.bf16 %v4420, %v4419
      %v4433 = vpack.c.bf16 %v4422, %v4421
      %v4434 = vpack.c.bf16 %v4424, %v4423
      %v4435 = vpack.c.bf16 %v4426, %v4425
      %v4436 = vpack.c.bf16 %v4428, %v4427
      %v4445 = vunpack.c.l.b16 %v4429
      %v4446 = vunpack.c.h.b16 %v4429
      %v4447 = vunpack.c.l.b16 %v4430
      %v4448 = vunpack.c.h.b16 %v4430
      %v4449 = vunpack.c.l.b16 %v4431
      %v4450 = vunpack.c.h.b16 %v4431
      %v4451 = vunpack.c.l.b16 %v4432
      %v4452 = vunpack.c.h.b16 %v4432
      %v4453 = vunpack.c.l.b16 %v4433
      %v4454 = vunpack.c.h.b16 %v4433
      %v4455 = vunpack.c.l.b16 %v4434
      %v4456 = vunpack.c.h.b16 %v4434
      %v4457 = vunpack.c.l.b16 %v4435
      %v4458 = vunpack.c.h.b16 %v4435
      %v4459 = vunpack.c.l.b16 %v4436
      %v4460 = vunpack.c.h.b16 %v4436
      %v4461 = vpack.c.b16 %v4449, %v4445
      %v4462 = vpack.c.b16 %v4450, %v4446
      %v4463 = vpack.c.b16 %v4451, %v4447
      %v4464 = vpack.c.b16 %v4452, %v4448
      %v4465 = vpack.c.b16 %v4457, %v4453
      %v4466 = vpack.c.b16 %v4458, %v4454
      %v4467 = vpack.c.b16 %v4459, %v4455
      %v4468 = vpack.c.b16 %v4460, %v4456
      %4469 = vrot.lane.b32.xlu0 %v4461, 19
      %v4470 = vpop.permute.xlu0 %4469
      %4471 = vrot.lane.b32.xlu0 %v4462, 19
      %v4472 = vpop.permute.xlu0 %4471
      %4473 = vrot.lane.b32.xlu0 %v4463, 19
      %v4474 = vpop.permute.xlu0 %4473
      %4475 = vrot.lane.b32.xlu0 %v4464, 19
      %v4476 = vpop.permute.xlu0 %4475
      %4477 = vrot.lane.b32.xlu0 %v4465, 19
      %v4478 = vpop.permute.xlu0 %4477
      %4479 = vrot.lane.b32.xlu0 %v4466, 19
      %v4480 = vpop.permute.xlu0 %4479
      %4481 = vrot.lane.b32.xlu0 %v4467, 19
      %v4482 = vpop.permute.xlu0 %4481
      %4483 = vrot.lane.b32.xlu0 %v4468, 19
      %v4484 = vpop.permute.xlu0 %4483
      %v4485 = vsel %vm1425, %v4470, %v4472
      %v4486 = vsel %vm1425, %v4472, %v4474
      %v4487 = vsel %vm1425, %v4474, %v4476
      %v4488 = vsel %vm1425, %v4478, %v4480
      %v4489 = vsel %vm1425, %v4480, %v4482
      %v4490 = vsel %vm1425, %v4482, %v4484
      %v4496 = vsel %vm1436, 0, %v4470
      %v4499 = vsel %vm1436, 0, %v4478
      %v4502 = vsel %vm1444, %v4487, 0
      %v4505 = vsel %vm1444, %v4490, 0
      %4511 = vrot.lane.b32.xlu0 %v4496, 127
      %v4512 = vpop.permute.xlu0 %4511
      %4513 = vrot.lane.b32.xlu0 %v4485, 127
      %v4514 = vpop.permute.xlu0 %4513
      %4515 = vrot.lane.b32.xlu0 %v4486, 127
      %v4516 = vpop.permute.xlu0 %4515
      %4517 = vrot.lane.b32.xlu0 %v4502, 127
      %v4518 = vpop.permute.xlu0 %4517
      %4519 = vrot.lane.b32.xlu0 %v4499, 127
      %v4520 = vpop.permute.xlu0 %4519
      %4521 = vrot.lane.b32.xlu0 %v4488, 127
      %v4522 = vpop.permute.xlu0 %4521
      %4523 = vrot.lane.b32.xlu0 %v4489, 127
      %v4524 = vpop.permute.xlu0 %4523
      %4525 = vrot.lane.b32.xlu0 %v4505, 127
      %v4526 = vpop.permute.xlu0 %4525
      %v4527 = vsel %vm1471, %v4512, %v4514
      %v4528 = vsel %vm1471, %v4514, %v4516
      %v4529 = vsel %vm1471, %v4516, %v4518
      %v4530 = vsel %vm1471, %v4520, %v4522
      %v4531 = vsel %vm1471, %v4522, %v4524
      %v4532 = vsel %vm1471, %v4524, %v4526
      %4541 = vrot.lane.b32.xlu0 %v4496, 126
      %v4542 = vpop.permute.xlu0 %4541
      %4543 = vrot.lane.b32.xlu0 %v4485, 126
      %v4544 = vpop.permute.xlu0 %4543
      %4545 = vrot.lane.b32.xlu0 %v4486, 126
      %v4546 = vpop.permute.xlu0 %4545
      %4547 = vrot.lane.b32.xlu0 %v4502, 126
      %v4548 = vpop.permute.xlu0 %4547
      %4549 = vrot.lane.b32.xlu0 %v4499, 126
      %v4550 = vpop.permute.xlu0 %4549
      %4551 = vrot.lane.b32.xlu0 %v4488, 126
      %v4552 = vpop.permute.xlu0 %4551
      %4553 = vrot.lane.b32.xlu0 %v4489, 126
      %v4554 = vpop.permute.xlu0 %4553
      %4555 = vrot.lane.b32.xlu0 %v4505, 126
      %v4556 = vpop.permute.xlu0 %4555
      %v4557 = vsel %vm1502, %v4542, %v4544
      %v4558 = vsel %vm1502, %v4544, %v4546
      %v4559 = vsel %vm1502, %v4546, %v4548
      %v4560 = vsel %vm1502, %v4550, %v4552
      %v4561 = vsel %vm1502, %v4552, %v4554
      %v4562 = vsel %vm1502, %v4554, %v4556
      %v4571 = vld [vmem:[%s12] sm:$0xff]
      %v4572 = vld [vmem:[%s12 + $0x8] sm:$0xff]
      %v4573 = vld [vmem:[%s12 + $0x10] sm:$0xff]
      %v4574 = vld [vmem:[%s12 + $0x18] sm:$0xff]
      %s4575 = scalar_lea.vmem %s12, 32
      %v4576 = vld [vmem:[%s4575] sm:$0xff]
      %v4577 = vld [vmem:[%s4575 + $0x8] sm:$0xff]
      %v4578 = vld [vmem:[%s4575 + $0x10] sm:$0xff]
      %v4579 = vld [vmem:[%s4575 + $0x18] sm:$0xff]
      %v4584 = vunpack.c.l.b16 %v4576
      %v4585 = vunpack.c.h.b16 %v4576
      %v4586 = vunpack.c.l.b16 %v4577
      %v4587 = vunpack.c.h.b16 %v4577
      %v4588 = vunpack.c.l.b16 %v4578
      %v4589 = vunpack.c.h.b16 %v4578
      %v4590 = vunpack.c.l.b16 %v4579
      %v4591 = vunpack.c.h.b16 %v4579
      %v4592 = vpack.c.b16 %v4586, %v4584
      %v4593 = vpack.c.b16 %v4587, %v4585
      %v4594 = vpack.c.b16 %v4590, %v4588
      %v4595 = vpack.c.b16 %v4591, %v4589
      %4598 = vrot.lane.b32.xlu0 %v4496, 110
      %v4599 = vpop.permute.xlu0 %4598
      %4600 = vrot.lane.b32.xlu0 %v4485, 110
      %v4601 = vpop.permute.xlu0 %4600
      %4602 = vrot.lane.b32.xlu0 %v4486, 110
      %v4603 = vpop.permute.xlu0 %4602
      %4604 = vrot.lane.b32.xlu0 %v4502, 110
      %v4605 = vpop.permute.xlu0 %4604
      %4606 = vrot.lane.b32.xlu0 %v4499, 110
      %v4607 = vpop.permute.xlu0 %4606
      %4608 = vrot.lane.b32.xlu0 %v4488, 110
      %v4609 = vpop.permute.xlu0 %4608
      %4610 = vrot.lane.b32.xlu0 %v4489, 110
      %v4611 = vpop.permute.xlu0 %4610
      %4612 = vrot.lane.b32.xlu0 %v4505, 110
      %v4613 = vpop.permute.xlu0 %4612
      %4614 = vrot.lane.b32.xlu0 %v4527, 110
      %v4615 = vpop.permute.xlu0 %4614
      %4616 = vrot.lane.b32.xlu0 %v4528, 110
      %v4617 = vpop.permute.xlu0 %4616
      %4618 = vrot.lane.b32.xlu0 %v4529, 110
      %v4619 = vpop.permute.xlu0 %4618
      %4620 = vrot.lane.b32.xlu0 %v4518, 110
      %v4621 = vpop.permute.xlu0 %4620
      %4622 = vrot.lane.b32.xlu0 %v4530, 110
      %v4623 = vpop.permute.xlu0 %4622
      %4624 = vrot.lane.b32.xlu0 %v4531, 110
      %v4625 = vpop.permute.xlu0 %4624
      %4626 = vrot.lane.b32.xlu0 %v4532, 110
      %v4627 = vpop.permute.xlu0 %4626
      %4628 = vrot.lane.b32.xlu0 %v4526, 110
      %v4629 = vpop.permute.xlu0 %4628
      %4630 = vrot.lane.b32.xlu0 %v4557, 110
      %v4631 = vpop.permute.xlu0 %4630
      %4632 = vrot.lane.b32.xlu0 %v4558, 110
      %v4633 = vpop.permute.xlu0 %4632
      %4634 = vrot.lane.b32.xlu0 %v4559, 110
      %v4635 = vpop.permute.xlu0 %4634
      %4636 = vrot.lane.b32.xlu0 %v4548, 110
      %v4637 = vpop.permute.xlu0 %4636
      %4638 = vrot.lane.b32.xlu0 %v4560, 110
      %v4639 = vpop.permute.xlu0 %4638
      %4640 = vrot.lane.b32.xlu0 %v4561, 110
      %v4641 = vpop.permute.xlu0 %4640
      %4642 = vrot.lane.b32.xlu0 %v4562, 110
      %v4643 = vpop.permute.xlu0 %4642
      %4644 = vrot.lane.b32.xlu0 %v4556, 110
      %v4645 = vpop.permute.xlu0 %4644
      %v4646 = vsel %vm865, %v4599, %v4601
      %v4647 = vsel %vm865, %v4601, %v4603
      %v4648 = vsel %vm865, %v4603, %v4605
      %v4649 = vsel %vm865, %v4607, %v4609
      %v4650 = vsel %vm865, %v4609, %v4611
      %v4651 = vsel %vm865, %v4611, %v4613
      %v4652 = vsel %vm865, %v4615, %v4617
      %v4653 = vsel %vm865, %v4617, %v4619
      %v4654 = vsel %vm865, %v4619, %v4621
      %v4655 = vsel %vm865, %v4623, %v4625
      %v4656 = vsel %vm865, %v4625, %v4627
      %v4657 = vsel %vm865, %v4627, %v4629
      %v4658 = vsel %vm865, %v4631, %v4633
      %v4659 = vsel %vm865, %v4633, %v4635
      %v4660 = vsel %vm865, %v4635, %v4637
      %v4661 = vsel %vm865, %v4639, %v4641
      %v4662 = vsel %vm865, %v4641, %v4643
      %v4663 = vsel %vm865, %v4643, %v4645
      %v4689 = vsel %vm3735, %v4593, 0
      %v4692 = vsel %vm3735, %v4595, 0
      %4694 = vmatpush.bf16.msra.mxu0 %v4655
      %4695 = vmatpush.bf16.msra.mxu0 %v4652
      %4696 = vmatpush.bf16.msra.mxu0 %v2294
      %4697 = vmatpush.bf16.msra.mxu0 %v2291
      %4698 = vmatpush.bf16.msra.mxu0 %v4649
      %4699 = vmatpush.bf16.msra.mxu0 %v4646
      %4700 = vmatpush.bf16.msra.mxu0 %v2288
      %4701 = vmatpush.bf16.msra.mxu0 %v2285
      %4702 = vmatmul.bf16.gmra.mxu0 %v4592
      %v4703 = vpop.f32.mrf.mxu0
      %v4704 = vadd.f32 0.0, %v4703
      %v4705 = vpop.f32.mrf.mxu0
      %v4706 = vadd.f32 0.0, %v4705
      %4707 = vmatmul.bf16.gmra.mxu0 %v4594
      %v4708 = vpop.f32.mrf.mxu0
      %v4709 = vadd.f32 0.0, %v4708
      %v4710 = vpop.f32.mrf.mxu0
      %v4711 = vadd.f32 0.0, %v4710
      %4712 = vdwg.mxu0
      %4713 = vmatpush.bf16.msra.mxu0 0
      %4714 = vmatpush.bf16.msra.mxu0 0
      %4715 = vmatpush.bf16.msra.mxu0 0
      %4716 = vmatpush.bf16.msra.mxu0 0
      %4717 = vmatpush.bf16.msra.mxu0 %v4661
      %4718 = vmatpush.bf16.msra.mxu0 %v4658
      %4719 = vmatpush.bf16.msra.mxu0 %v2300
      %4720 = vmatpush.bf16.msra.mxu0 %v2297
      %4721 = vmatmul.bf16.gmra.mxu0 %v4689
      %v4722 = vpop.f32.mrf.mxu0
      %v4723 = vadd.f32 %v4704, %v4722
      %v4724 = vpop.f32.mrf.mxu0
      %v4725 = vadd.f32 %v4706, %v4724
      %4726 = vmatmul.bf16.gmra.mxu0 %v4692
      %v4727 = vpop.f32.mrf.mxu0
      %v4728 = vadd.f32 %v4709, %v4727
      %v4729 = vpop.f32.mrf.mxu0
      %v4730 = vadd.f32 %v4711, %v4729
      %4731 = vdwg.mxu0
      %4732 = vmatpush.bf16.msra.mxu0 %v4656
      %4733 = vmatpush.bf16.msra.mxu0 %v4653
      %4734 = vmatpush.bf16.msra.mxu0 %v2295
      %4735 = vmatpush.bf16.msra.mxu0 %v2292
      %4736 = vmatpush.bf16.msra.mxu0 %v4650
      %4737 = vmatpush.bf16.msra.mxu0 %v4647
      %4738 = vmatpush.bf16.msra.mxu0 %v2289
      %4739 = vmatpush.bf16.msra.mxu0 %v2286
      %4740 = vmatmul.bf16.gmra.mxu0 %v4592
      %v4741 = vpop.f32.mrf.mxu0
      %v4742 = vadd.f32 0.0, %v4741
      %v4743 = vpop.f32.mrf.mxu0
      %v4744 = vadd.f32 0.0, %v4743
      %4745 = vmatmul.bf16.gmra.mxu0 %v4594
      %v4746 = vpop.f32.mrf.mxu0
      %v4747 = vadd.f32 0.0, %v4746
      %v4748 = vpop.f32.mrf.mxu0
      %v4749 = vadd.f32 0.0, %v4748
      %4750 = vdwg.mxu0
      %4751 = vmatpush.bf16.msra.mxu0 0
      %4752 = vmatpush.bf16.msra.mxu0 0
      %4753 = vmatpush.bf16.msra.mxu0 0
      %4754 = vmatpush.bf16.msra.mxu0 0
      %4755 = vmatpush.bf16.msra.mxu0 %v4662
      %4756 = vmatpush.bf16.msra.mxu0 %v4659
      %4757 = vmatpush.bf16.msra.mxu0 %v2301
      %4758 = vmatpush.bf16.msra.mxu0 %v2298
      %4759 = vmatmul.bf16.gmra.mxu0 %v4689
      %v4760 = vpop.f32.mrf.mxu0
      %v4761 = vadd.f32 %v4742, %v4760
      %v4762 = vpop.f32.mrf.mxu0
      %v4763 = vadd.f32 %v4744, %v4762
      %4764 = vmatmul.bf16.gmra.mxu0 %v4692
      %v4765 = vpop.f32.mrf.mxu0
      %v4766 = vadd.f32 %v4747, %v4765
      %v4767 = vpop.f32.mrf.mxu0
      %v4768 = vadd.f32 %v4749, %v4767
      %4769 = vdwg.mxu0
      %4770 = vmatpush.bf16.msra.mxu0 %v4657
      %4771 = vmatpush.bf16.msra.mxu0 %v4654
      %4772 = vmatpush.bf16.msra.mxu0 %v2296
      %4773 = vmatpush.bf16.msra.mxu0 %v2293
      %4774 = vmatpush.bf16.msra.mxu0 %v4651
      %4775 = vmatpush.bf16.msra.mxu0 %v4648
      %4776 = vmatpush.bf16.msra.mxu0 %v2290
      %4777 = vmatpush.bf16.msra.mxu0 %v2287
      %4778 = vmatmul.bf16.gmra.mxu0 %v4592
      %v4779 = vpop.f32.mrf.mxu0
      %v4780 = vadd.f32 0.0, %v4779
      %v4781 = vpop.f32.mrf.mxu0
      %v4782 = vadd.f32 0.0, %v4781
      %4783 = vmatmul.bf16.gmra.mxu0 %v4594
      %v4784 = vpop.f32.mrf.mxu0
      %v4785 = vadd.f32 0.0, %v4784
      %v4786 = vpop.f32.mrf.mxu0
      %v4787 = vadd.f32 0.0, %v4786
      %4788 = vdwg.mxu0
      %4789 = vmatpush.bf16.msra.mxu0 0
      %4790 = vmatpush.bf16.msra.mxu0 0
      %4791 = vmatpush.bf16.msra.mxu0 0
      %4792 = vmatpush.bf16.msra.mxu0 0
      %4793 = vmatpush.bf16.msra.mxu0 %v4663
      %4794 = vmatpush.bf16.msra.mxu0 %v4660
      %4795 = vmatpush.bf16.msra.mxu0 %v2302
      %4796 = vmatpush.bf16.msra.mxu0 %v2299
      %4797 = vmatmul.bf16.gmra.mxu0 %v4689
      %v4798 = vpop.f32.mrf.mxu0
      %v4799 = vadd.f32 %v4780, %v4798
      %v4800 = vpop.f32.mrf.mxu0
      %v4801 = vadd.f32 %v4782, %v4800
      %4802 = vmatmul.bf16.gmra.mxu0 %v4692
      %v4803 = vpop.f32.mrf.mxu0
      %v4804 = vadd.f32 %v4785, %v4803
      %v4805 = vpop.f32.mrf.mxu0
      %v4806 = vadd.f32 %v4787, %v4805
      %4807 = vdwg.mxu0
      %4808 = vmatpush.bf16.msra.mxu0 %v4629
      %4809 = vmatpush.bf16.msra.mxu0 %v4621
      %4810 = vmatpush.bf16.msra.mxu0 %v2268
      %4811 = vmatpush.bf16.msra.mxu0 %v2260
      %4812 = vmatpush.bf16.msra.mxu0 %v4613
      %4813 = vmatpush.bf16.msra.mxu0 %v4605
      %4814 = vmatpush.bf16.msra.mxu0 %v2252
      %4815 = vmatpush.bf16.msra.mxu0 %v2244
      %4816 = vmatmul.bf16.gmra.mxu0 %v4592
      %v4817 = vpop.f32.mrf.mxu0
      %v4818 = vadd.f32 0.0, %v4817
      %v4819 = vpop.f32.mrf.mxu0
      %v4820 = vadd.f32 0.0, %v4819
      %4821 = vmatmul.bf16.gmra.mxu0 %v4594
      %v4822 = vpop.f32.mrf.mxu0
      %v4823 = vadd.f32 0.0, %v4822
      %v4824 = vpop.f32.mrf.mxu0
      %v4825 = vadd.f32 0.0, %v4824
      %4826 = vdwg.mxu0
      %4827 = vmatpush.bf16.msra.mxu0 0
      %4828 = vmatpush.bf16.msra.mxu0 0
      %4829 = vmatpush.bf16.msra.mxu0 0
      %4830 = vmatpush.bf16.msra.mxu0 0
      %4831 = vmatpush.bf16.msra.mxu0 %v4645
      %4832 = vmatpush.bf16.msra.mxu0 %v4637
      %4833 = vmatpush.bf16.msra.mxu0 %v2284
      %4834 = vmatpush.bf16.msra.mxu0 %v2276
      %4835 = vmatmul.bf16.gmra.mxu0 %v4689
      %v4836 = vpop.f32.mrf.mxu0
      %v4837 = vadd.f32 %v4818, %v4836
      %v4838 = vpop.f32.mrf.mxu0
      %v4839 = vadd.f32 %v4820, %v4838
      %4840 = vmatmul.bf16.gmra.mxu0 %v4692
      %v4841 = vpop.f32.mrf.mxu0
      %v4842 = vadd.f32 %v4823, %v4841
      %v4843 = vpop.f32.mrf.mxu0
      %v4844 = vadd.f32 %v4825, %v4843
      %4845 = vdwg.mxu0
      %v4850 = vunpack.c.l.b16 %v4571
      %v4851 = vunpack.c.h.b16 %v4571
      %v4852 = vunpack.c.l.b16 %v4572
      %v4853 = vunpack.c.h.b16 %v4572
      %v4854 = vunpack.c.l.b16 %v4573
      %v4855 = vunpack.c.h.b16 %v4573
      %v4856 = vunpack.c.l.b16 %v4574
      %v4857 = vunpack.c.h.b16 %v4574
      %v4858 = vpack.c.b16 %v4852, %v4850
      %v4859 = vpack.c.b16 %v4853, %v4851
      %v4860 = vpack.c.b16 %v4856, %v4854
      %v4861 = vpack.c.b16 %v4857, %v4855
      %v4865 = vsel %vm3735, %v4859, 0
      %v4868 = vsel %vm3735, %v4861, 0
      %4870 = vmatpush.bf16.msra.mxu0 %v4530
      %4871 = vmatpush.bf16.msra.mxu0 %v4527
      %4872 = vmatpush.bf16.msra.mxu0 %v2177
      %4873 = vmatpush.bf16.msra.mxu0 %v2174
      %4874 = vmatpush.bf16.msra.mxu0 %v4499
      %4875 = vmatpush.bf16.msra.mxu0 %v4496
      %4876 = vmatpush.bf16.msra.mxu0 %v2146
      %4877 = vmatpush.bf16.msra.mxu0 %v2143
      %4878 = vmatmul.bf16.gmra.mxu0 %v4858
      %v4879 = vpop.f32.mrf.mxu0
      %v4880 = vadd.f32 %v4723, %v4879
      %v4881 = vpop.f32.mrf.mxu0
      %v4882 = vadd.f32 %v4725, %v4881
      %4883 = vmatmul.bf16.gmra.mxu0 %v4860
      %v4884 = vpop.f32.mrf.mxu0
      %v4885 = vadd.f32 %v4728, %v4884
      %v4886 = vpop.f32.mrf.mxu0
      %v4887 = vadd.f32 %v4730, %v4886
      %4888 = vdwg.mxu0
      %4889 = vmatpush.bf16.msra.mxu0 0
      %4890 = vmatpush.bf16.msra.mxu0 0
      %4891 = vmatpush.bf16.msra.mxu0 0
      %4892 = vmatpush.bf16.msra.mxu0 0
      %4893 = vmatpush.bf16.msra.mxu0 %v4560
      %4894 = vmatpush.bf16.msra.mxu0 %v4557
      %4895 = vmatpush.bf16.msra.mxu0 %v2207
      %4896 = vmatpush.bf16.msra.mxu0 %v2204
      %4897 = vmatmul.bf16.gmra.mxu0 %v4865
      %v4898 = vpop.f32.mrf.mxu0
      %v4899 = vadd.f32 %v4880, %v4898
      %v4900 = vpop.f32.mrf.mxu0
      %v4901 = vadd.f32 %v4882, %v4900
      %4902 = vmatmul.bf16.gmra.mxu0 %v4868
      %v4903 = vpop.f32.mrf.mxu0
      %v4904 = vadd.f32 %v4885, %v4903
      %v4905 = vpop.f32.mrf.mxu0
      %v4906 = vadd.f32 %v4887, %v4905
      %4907 = vdwg.mxu0
      %4908 = vmatpush.bf16.msra.mxu0 %v4531
      %4909 = vmatpush.bf16.msra.mxu0 %v4528
      %4910 = vmatpush.bf16.msra.mxu0 %v2178
      %4911 = vmatpush.bf16.msra.mxu0 %v2175
      %4912 = vmatpush.bf16.msra.mxu0 %v4488
      %4913 = vmatpush.bf16.msra.mxu0 %v4485
      %4914 = vmatpush.bf16.msra.mxu0 %v2135
      %4915 = vmatpush.bf16.msra.mxu0 %v2132
      %4916 = vmatmul.bf16.gmra.mxu0 %v4858
      %v4917 = vpop.f32.mrf.mxu0
      %v4918 = vadd.f32 %v4761, %v4917
      %v4919 = vpop.f32.mrf.mxu0
      %v4920 = vadd.f32 %v4763, %v4919
      %4921 = vmatmul.bf16.gmra.mxu0 %v4860
      %v4922 = vpop.f32.mrf.mxu0
      %v4923 = vadd.f32 %v4766, %v4922
      %v4924 = vpop.f32.mrf.mxu0
      %v4925 = vadd.f32 %v4768, %v4924
      %4926 = vdwg.mxu0
      %4927 = vmatpush.bf16.msra.mxu0 0
      %4928 = vmatpush.bf16.msra.mxu0 0
      %4929 = vmatpush.bf16.msra.mxu0 0
      %4930 = vmatpush.bf16.msra.mxu0 0
      %4931 = vmatpush.bf16.msra.mxu0 %v4561
      %4932 = vmatpush.bf16.msra.mxu0 %v4558
      %4933 = vmatpush.bf16.msra.mxu0 %v2208
      %4934 = vmatpush.bf16.msra.mxu0 %v2205
      %4935 = vmatmul.bf16.gmra.mxu0 %v4865
      %v4936 = vpop.f32.mrf.mxu0
      %v4937 = vadd.f32 %v4918, %v4936
      %v4938 = vpop.f32.mrf.mxu0
      %v4939 = vadd.f32 %v4920, %v4938
      %4940 = vmatmul.bf16.gmra.mxu0 %v4868
      %v4941 = vpop.f32.mrf.mxu0
      %v4942 = vadd.f32 %v4923, %v4941
      %v4943 = vpop.f32.mrf.mxu0
      %v4944 = vadd.f32 %v4925, %v4943
      %4945 = vdwg.mxu0
      %4946 = vmatpush.bf16.msra.mxu0 %v4532
      %4947 = vmatpush.bf16.msra.mxu0 %v4529
      %4948 = vmatpush.bf16.msra.mxu0 %v2179
      %4949 = vmatpush.bf16.msra.mxu0 %v2176
      %4950 = vmatpush.bf16.msra.mxu0 %v4489
      %4951 = vmatpush.bf16.msra.mxu0 %v4486
      %4952 = vmatpush.bf16.msra.mxu0 %v2136
      %4953 = vmatpush.bf16.msra.mxu0 %v2133
      %4954 = vmatmul.bf16.gmra.mxu0 %v4858
      %v4955 = vpop.f32.mrf.mxu0
      %v4956 = vadd.f32 %v4799, %v4955
      %v4957 = vpop.f32.mrf.mxu0
      %v4958 = vadd.f32 %v4801, %v4957
      %4959 = vmatmul.bf16.gmra.mxu0 %v4860
      %v4960 = vpop.f32.mrf.mxu0
      %v4961 = vadd.f32 %v4804, %v4960
      %v4962 = vpop.f32.mrf.mxu0
      %v4963 = vadd.f32 %v4806, %v4962
      %4964 = vdwg.mxu0
      %4965 = vmatpush.bf16.msra.mxu0 0
      %4966 = vmatpush.bf16.msra.mxu0 0
      %4967 = vmatpush.bf16.msra.mxu0 0
      %4968 = vmatpush.bf16.msra.mxu0 0
      %4969 = vmatpush.bf16.msra.mxu0 %v4562
      %4970 = vmatpush.bf16.msra.mxu0 %v4559
      %4971 = vmatpush.bf16.msra.mxu0 %v2209
      %4972 = vmatpush.bf16.msra.mxu0 %v2206
      %4973 = vmatmul.bf16.gmra.mxu0 %v4865
      %v4974 = vpop.f32.mrf.mxu0
      %v4975 = vadd.f32 %v4956, %v4974
      %v4976 = vpop.f32.mrf.mxu0
      %v4977 = vadd.f32 %v4958, %v4976
      %4978 = vmatmul.bf16.gmra.mxu0 %v4868
      %v4979 = vpop.f32.mrf.mxu0
      %v4980 = vadd.f32 %v4961, %v4979
      %v4981 = vpop.f32.mrf.mxu0
      %v4982 = vadd.f32 %v4963, %v4981
      %4983 = vdwg.mxu0
      %4984 = vmatpush.bf16.msra.mxu0 %v4526
      %4985 = vmatpush.bf16.msra.mxu0 %v4518
      %4986 = vmatpush.bf16.msra.mxu0 %v2173
      %4987 = vmatpush.bf16.msra.mxu0 %v2165
      %4988 = vmatpush.bf16.msra.mxu0 %v4505
      %4989 = vmatpush.bf16.msra.mxu0 %v4502
      %4990 = vmatpush.bf16.msra.mxu0 %v2152
      %4991 = vmatpush.bf16.msra.mxu0 %v2149
      %4992 = vmatmul.bf16.gmra.mxu0 %v4858
      %v4993 = vpop.f32.mrf.mxu0
      %v4994 = vadd.f32 %v4837, %v4993
      %v4995 = vpop.f32.mrf.mxu0
      %v4996 = vadd.f32 %v4839, %v4995
      %4997 = vmatmul.bf16.gmra.mxu0 %v4860
      %v4998 = vpop.f32.mrf.mxu0
      %v4999 = vadd.f32 %v4842, %v4998
      %v5000 = vpop.f32.mrf.mxu0
      %v5001 = vadd.f32 %v4844, %v5000
      %5002 = vdwg.mxu0
      %5003 = vmatpush.bf16.msra.mxu0 0
      %5004 = vmatpush.bf16.msra.mxu0 0
      %5005 = vmatpush.bf16.msra.mxu0 0
      %5006 = vmatpush.bf16.msra.mxu0 0
      %5007 = vmatpush.bf16.msra.mxu0 %v4556
      %5008 = vmatpush.bf16.msra.mxu0 %v4548
      %5009 = vmatpush.bf16.msra.mxu0 %v2203
      %5010 = vmatpush.bf16.msra.mxu0 %v2195
      %5011 = vmatmul.bf16.gmra.mxu0 %v4865
      %v5012 = vpop.f32.mrf.mxu0
      %v5013 = vadd.f32 %v4994, %v5012
      %v5014 = vpop.f32.mrf.mxu0
      %v5015 = vadd.f32 %v4996, %v5014
      %5016 = vmatmul.bf16.gmra.mxu0 %v4868
      %v5017 = vpop.f32.mrf.mxu0
      %v5018 = vadd.f32 %v4999, %v5017
      %v5019 = vpop.f32.mrf.mxu0
      %v5020 = vadd.f32 %v5001, %v5019
      %5021 = vdwg.mxu0
      %s5022 = scalar_lea.vmem %s12, 64
      %v5023 = vld [vmem:[%s5022] sm:$0xff]
      %v5024 = vld [vmem:[%s5022 + $0x8] sm:$0xff]
      %v5025 = vld [vmem:[%s5022 + $0x10] sm:$0xff]
      %v5026 = vld [vmem:[%s5022 + $0x18] sm:$0xff]
      %v5031 = vunpack.c.l.b16 %v5023
      %v5032 = vunpack.c.h.b16 %v5023
      %v5033 = vunpack.c.l.b16 %v5024
      %v5034 = vunpack.c.h.b16 %v5024
      %v5035 = vunpack.c.l.b16 %v5025
      %v5036 = vunpack.c.h.b16 %v5025
      %v5037 = vunpack.c.l.b16 %v5026
      %v5038 = vunpack.c.h.b16 %v5026
      %v5039 = vpack.c.b16 %v5033, %v5031
      %v5040 = vpack.c.b16 %v5034, %v5032
      %v5041 = vpack.c.b16 %v5037, %v5035
      %v5042 = vpack.c.b16 %v5038, %v5036
      %5045 = vrot.lane.b32.xlu0 %v4496, 92
      %v5046 = vpop.permute.xlu0 %5045
      %5047 = vrot.lane.b32.xlu0 %v4485, 92
      %v5048 = vpop.permute.xlu0 %5047
      %5049 = vrot.lane.b32.xlu0 %v4486, 92
      %v5050 = vpop.permute.xlu0 %5049
      %5051 = vrot.lane.b32.xlu0 %v4502, 92
      %v5052 = vpop.permute.xlu0 %5051
      %5053 = vrot.lane.b32.xlu0 %v4499, 92
      %v5054 = vpop.permute.xlu0 %5053
      %5055 = vrot.lane.b32.xlu0 %v4488, 92
      %v5056 = vpop.permute.xlu0 %5055
      %5057 = vrot.lane.b32.xlu0 %v4489, 92
      %v5058 = vpop.permute.xlu0 %5057
      %5059 = vrot.lane.b32.xlu0 %v4505, 92
      %v5060 = vpop.permute.xlu0 %5059
      %5061 = vrot.lane.b32.xlu0 %v4527, 92
      %v5062 = vpop.permute.xlu0 %5061
      %5063 = vrot.lane.b32.xlu0 %v4528, 92
      %v5064 = vpop.permute.xlu0 %5063
      %5065 = vrot.lane.b32.xlu0 %v4529, 92
      %v5066 = vpop.permute.xlu0 %5065
      %5067 = vrot.lane.b32.xlu0 %v4518, 92
      %v5068 = vpop.permute.xlu0 %5067
      %5069 = vrot.lane.b32.xlu0 %v4530, 92
      %v5070 = vpop.permute.xlu0 %5069
      %5071 = vrot.lane.b32.xlu0 %v4531, 92
      %v5072 = vpop.permute.xlu0 %5071
      %5073 = vrot.lane.b32.xlu0 %v4532, 92
      %v5074 = vpop.permute.xlu0 %5073
      %5075 = vrot.lane.b32.xlu0 %v4526, 92
      %v5076 = vpop.permute.xlu0 %5075
      %5077 = vrot.lane.b32.xlu0 %v4557, 92
      %v5078 = vpop.permute.xlu0 %5077
      %5079 = vrot.lane.b32.xlu0 %v4558, 92
      %v5080 = vpop.permute.xlu0 %5079
      %5081 = vrot.lane.b32.xlu0 %v4559, 92
      %v5082 = vpop.permute.xlu0 %5081
      %5083 = vrot.lane.b32.xlu0 %v4548, 92
      %v5084 = vpop.permute.xlu0 %5083
      %5085 = vrot.lane.b32.xlu0 %v4560, 92
      %v5086 = vpop.permute.xlu0 %5085
      %5087 = vrot.lane.b32.xlu0 %v4561, 92
      %v5088 = vpop.permute.xlu0 %5087
      %5089 = vrot.lane.b32.xlu0 %v4562, 92
      %v5090 = vpop.permute.xlu0 %5089
      %5091 = vrot.lane.b32.xlu0 %v4556, 92
      %v5092 = vpop.permute.xlu0 %5091
      %v5093 = vsel %vm1174, %v5046, %v5048
      %v5094 = vsel %vm1174, %v5048, %v5050
      %v5095 = vsel %vm1174, %v5050, %v5052
      %v5096 = vsel %vm1174, %v5054, %v5056
      %v5097 = vsel %vm1174, %v5056, %v5058
      %v5098 = vsel %vm1174, %v5058, %v5060
      %v5099 = vsel %vm1174, %v5062, %v5064
      %v5100 = vsel %vm1174, %v5064, %v5066
      %v5101 = vsel %vm1174, %v5066, %v5068
      %v5102 = vsel %vm1174, %v5070, %v5072
      %v5103 = vsel %vm1174, %v5072, %v5074
      %v5104 = vsel %vm1174, %v5074, %v5076
      %v5105 = vsel %vm1174, %v5078, %v5080
      %v5106 = vsel %vm1174, %v5080, %v5082
      %v5107 = vsel %vm1174, %v5082, %v5084
      %v5108 = vsel %vm1174, %v5086, %v5088
      %v5109 = vsel %vm1174, %v5088, %v5090
      %v5110 = vsel %vm1174, %v5090, %v5092
      %v5136 = vsel %vm3735, %v5040, 0
      %v5139 = vsel %vm3735, %v5042, 0
      %5141 = vmatpush.bf16.msra.mxu0 %v5102
      %5142 = vmatpush.bf16.msra.mxu0 %v5099
      %5143 = vmatpush.bf16.msra.mxu0 %v2573
      %5144 = vmatpush.bf16.msra.mxu0 %v2570
      %5145 = vmatpush.bf16.msra.mxu0 %v5096
      %5146 = vmatpush.bf16.msra.mxu0 %v5093
      %5147 = vmatpush.bf16.msra.mxu0 %v2567
      %5148 = vmatpush.bf16.msra.mxu0 %v2564
      %5149 = vmatmul.bf16.gmra.mxu0 %v5039
      %v5150 = vpop.f32.mrf.mxu0
      %v5151 = vadd.f32 0.0, %v5150
      %v5152 = vpop.f32.mrf.mxu0
      %v5153 = vadd.f32 0.0, %v5152
      %5154 = vmatmul.bf16.gmra.mxu0 %v5041
      %v5155 = vpop.f32.mrf.mxu0
      %v5156 = vadd.f32 0.0, %v5155
      %v5157 = vpop.f32.mrf.mxu0
      %v5158 = vadd.f32 0.0, %v5157
      %5159 = vdwg.mxu0
      %5160 = vmatpush.bf16.msra.mxu0 0
      %5161 = vmatpush.bf16.msra.mxu0 0
      %5162 = vmatpush.bf16.msra.mxu0 0
      %5163 = vmatpush.bf16.msra.mxu0 0
      %5164 = vmatpush.bf16.msra.mxu0 %v5108
      %5165 = vmatpush.bf16.msra.mxu0 %v5105
      %5166 = vmatpush.bf16.msra.mxu0 %v2579
      %5167 = vmatpush.bf16.msra.mxu0 %v2576
      %5168 = vmatmul.bf16.gmra.mxu0 %v5136
      %v5169 = vpop.f32.mrf.mxu0
      %v5170 = vadd.f32 %v5151, %v5169
      %v5171 = vpop.f32.mrf.mxu0
      %v5172 = vadd.f32 %v5153, %v5171
      %5173 = vmatmul.bf16.gmra.mxu0 %v5139
      %v5174 = vpop.f32.mrf.mxu0
      %v5175 = vadd.f32 %v5156, %v5174
      %v5176 = vpop.f32.mrf.mxu0
      %v5177 = vadd.f32 %v5158, %v5176
      %5178 = vdwg.mxu0
      %5179 = vmatpush.bf16.msra.mxu0 %v5103
      %5180 = vmatpush.bf16.msra.mxu0 %v5100
      %5181 = vmatpush.bf16.msra.mxu0 %v2574
      %5182 = vmatpush.bf16.msra.mxu0 %v2571
      %5183 = vmatpush.bf16.msra.mxu0 %v5097
      %5184 = vmatpush.bf16.msra.mxu0 %v5094
      %5185 = vmatpush.bf16.msra.mxu0 %v2568
      %5186 = vmatpush.bf16.msra.mxu0 %v2565
      %5187 = vmatmul.bf16.gmra.mxu0 %v5039
      %v5188 = vpop.f32.mrf.mxu0
      %v5189 = vadd.f32 0.0, %v5188
      %v5190 = vpop.f32.mrf.mxu0
      %v5191 = vadd.f32 0.0, %v5190
      %5192 = vmatmul.bf16.gmra.mxu0 %v5041
      %v5193 = vpop.f32.mrf.mxu0
      %v5194 = vadd.f32 0.0, %v5193
      %v5195 = vpop.f32.mrf.mxu0
      %v5196 = vadd.f32 0.0, %v5195
      %5197 = vdwg.mxu0
      %5198 = vmatpush.bf16.msra.mxu0 0
      %5199 = vmatpush.bf16.msra.mxu0 0
      %5200 = vmatpush.bf16.msra.mxu0 0
      %5201 = vmatpush.bf16.msra.mxu0 0
      %5202 = vmatpush.bf16.msra.mxu0 %v5109
      %5203 = vmatpush.bf16.msra.mxu0 %v5106
      %5204 = vmatpush.bf16.msra.mxu0 %v2580
      %5205 = vmatpush.bf16.msra.mxu0 %v2577
      %5206 = vmatmul.bf16.gmra.mxu0 %v5136
      %v5207 = vpop.f32.mrf.mxu0
      %v5208 = vadd.f32 %v5189, %v5207
      %v5209 = vpop.f32.mrf.mxu0
      %v5210 = vadd.f32 %v5191, %v5209
      %5211 = vmatmul.bf16.gmra.mxu0 %v5139
      %v5212 = vpop.f32.mrf.mxu0
      %v5213 = vadd.f32 %v5194, %v5212
      %v5214 = vpop.f32.mrf.mxu0
      %v5215 = vadd.f32 %v5196, %v5214
      %5216 = vdwg.mxu0
      %5217 = vmatpush.bf16.msra.mxu0 %v5104
      %5218 = vmatpush.bf16.msra.mxu0 %v5101
      %5219 = vmatpush.bf16.msra.mxu0 %v2575
      %5220 = vmatpush.bf16.msra.mxu0 %v2572
      %5221 = vmatpush.bf16.msra.mxu0 %v5098
      %5222 = vmatpush.bf16.msra.mxu0 %v5095
      %5223 = vmatpush.bf16.msra.mxu0 %v2569
      %5224 = vmatpush.bf16.msra.mxu0 %v2566
      %5225 = vmatmul.bf16.gmra.mxu0 %v5039
      %v5226 = vpop.f32.mrf.mxu0
      %v5227 = vadd.f32 0.0, %v5226
      %v5228 = vpop.f32.mrf.mxu0
      %v5229 = vadd.f32 0.0, %v5228
      %5230 = vmatmul.bf16.gmra.mxu0 %v5041
      %v5231 = vpop.f32.mrf.mxu0
      %v5232 = vadd.f32 0.0, %v5231
      %v5233 = vpop.f32.mrf.mxu0
      %v5234 = vadd.f32 0.0, %v5233
      %5235 = vdwg.mxu0
      %5236 = vmatpush.bf16.msra.mxu0 0
      %5237 = vmatpush.bf16.msra.mxu0 0
      %5238 = vmatpush.bf16.msra.mxu0 0
      %5239 = vmatpush.bf16.msra.mxu0 0
      %5240 = vmatpush.bf16.msra.mxu0 %v5110
      %5241 = vmatpush.bf16.msra.mxu0 %v5107
      %5242 = vmatpush.bf16.msra.mxu0 %v2581
      %5243 = vmatpush.bf16.msra.mxu0 %v2578
      %5244 = vmatmul.bf16.gmra.mxu0 %v5136
      %v5245 = vpop.f32.mrf.mxu0
      %v5246 = vadd.f32 %v5227, %v5245
      %v5247 = vpop.f32.mrf.mxu0
      %v5248 = vadd.f32 %v5229, %v5247
      %5249 = vmatmul.bf16.gmra.mxu0 %v5139
      %v5250 = vpop.f32.mrf.mxu0
      %v5251 = vadd.f32 %v5232, %v5250
      %v5252 = vpop.f32.mrf.mxu0
      %v5253 = vadd.f32 %v5234, %v5252
      %5254 = vdwg.mxu0
      %5255 = vmatpush.bf16.msra.mxu0 %v5076
      %5256 = vmatpush.bf16.msra.mxu0 %v5068
      %5257 = vmatpush.bf16.msra.mxu0 %v2547
      %5258 = vmatpush.bf16.msra.mxu0 %v2539
      %5259 = vmatpush.bf16.msra.mxu0 %v5060
      %5260 = vmatpush.bf16.msra.mxu0 %v5052
      %5261 = vmatpush.bf16.msra.mxu0 %v2531
      %5262 = vmatpush.bf16.msra.mxu0 %v2523
      %5263 = vmatmul.bf16.gmra.mxu0 %v5039
      %v5264 = vpop.f32.mrf.mxu0
      %v5265 = vadd.f32 0.0, %v5264
      %v5266 = vpop.f32.mrf.mxu0
      %v5267 = vadd.f32 0.0, %v5266
      %5268 = vmatmul.bf16.gmra.mxu0 %v5041
      %v5269 = vpop.f32.mrf.mxu0
      %v5270 = vadd.f32 0.0, %v5269
      %v5271 = vpop.f32.mrf.mxu0
      %v5272 = vadd.f32 0.0, %v5271
      %5273 = vdwg.mxu0
      %5274 = vmatpush.bf16.msra.mxu0 0
      %5275 = vmatpush.bf16.msra.mxu0 0
      %5276 = vmatpush.bf16.msra.mxu0 0
      %5277 = vmatpush.bf16.msra.mxu0 0
      %5278 = vmatpush.bf16.msra.mxu0 %v5092
      %5279 = vmatpush.bf16.msra.mxu0 %v5084
      %5280 = vmatpush.bf16.msra.mxu0 %v2563
      %5281 = vmatpush.bf16.msra.mxu0 %v2555
      %5282 = vmatmul.bf16.gmra.mxu0 %v5136
      %v5283 = vpop.f32.mrf.mxu0
      %v5284 = vadd.f32 %v5265, %v5283
      %v5285 = vpop.f32.mrf.mxu0
      %v5286 = vadd.f32 %v5267, %v5285
      %5287 = vmatmul.bf16.gmra.mxu0 %v5139
      %v5288 = vpop.f32.mrf.mxu0
      %v5289 = vadd.f32 %v5270, %v5288
      %v5290 = vpop.f32.mrf.mxu0
      %v5291 = vadd.f32 %v5272, %v5290
      %5292 = vdwg.mxu0
      %v5293 = vadd.f32 %v4899, %v5170
      %v5294 = vadd.f32 %v4937, %v5208
      %v5295 = vadd.f32 %v4975, %v5246
      %v5296 = vadd.f32 %v5013, %v5284
      %v5297 = vadd.f32 %v4901, %v5172
      %v5298 = vadd.f32 %v4939, %v5210
      %v5299 = vadd.f32 %v4977, %v5248
      %v5300 = vadd.f32 %v5015, %v5286
      %v5301 = vadd.f32 %v4904, %v5175
      %v5302 = vadd.f32 %v4942, %v5213
      %v5303 = vadd.f32 %v4980, %v5251
      %v5304 = vadd.f32 %v5018, %v5289
      %v5305 = vadd.f32 %v4906, %v5177
      %v5306 = vadd.f32 %v4944, %v5215
      %v5307 = vadd.f32 %v4982, %v5253
      %v5308 = vadd.f32 %v5020, %v5291
      %v5309 = vld [vmem:[%s13] sm:$0xff]
      %v5310 = vld [vmem:[%s13 + $0x8] sm:$0xff]
      %v5311 = vld [vmem:[%s13 + $0x10] sm:$0xff]
      %v5312 = vld [vmem:[%s13 + $0x18] sm:$0xff]
      %5314 = vset.pattern.permute.xlu0 0
      %5315 = vperm.xlu0 %5314, %v5309
      %v5316 = vpop.permute.xlu0 %5315
      %5319 = vset.pattern.permute.xlu0 0
      %5320 = vperm.xlu0 %5319, %v5310
      %v5321 = vpop.permute.xlu0 %5320
      %5324 = vset.pattern.permute.xlu0 0
      %5325 = vperm.xlu0 %5324, %v5311
      %v5326 = vpop.permute.xlu0 %5325
      %5329 = vset.pattern.permute.xlu0 0
      %5330 = vperm.xlu0 %5329, %v5312
      %v5331 = vpop.permute.xlu0 %5330
      %v5333 = vadd.f32 %v5293, %v5316
      %v5334 = vadd.f32 %v5294, %v5316
      %v5335 = vadd.f32 %v5295, %v5316
      %v5336 = vadd.f32 %v5296, %v5316
      %v5337 = vadd.f32 %v5297, %v5321
      %v5338 = vadd.f32 %v5298, %v5321
      %v5339 = vadd.f32 %v5299, %v5321
      %v5340 = vadd.f32 %v5300, %v5321
      %v5341 = vadd.f32 %v5301, %v5326
      %v5342 = vadd.f32 %v5302, %v5326
      %v5343 = vadd.f32 %v5303, %v5326
      %v5344 = vadd.f32 %v5304, %v5326
      %v5345 = vadd.f32 %v5305, %v5331
      %v5346 = vadd.f32 %v5306, %v5331
      %v5347 = vadd.f32 %v5307, %v5331
      %v5348 = vadd.f32 %v5308, %v5331
      %v5349 = vmax.f32 %v5333, 0.0
      %v5350 = vmax.f32 %v5334, 0.0
      %v5351 = vmax.f32 %v5335, 0.0
      %v5352 = vmax.f32 %v5336, 0.0
      %v5353 = vmax.f32 %v5337, 0.0
      %v5354 = vmax.f32 %v5338, 0.0
      %v5355 = vmax.f32 %v5339, 0.0
      %v5356 = vmax.f32 %v5340, 0.0
      %v5357 = vmax.f32 %v5341, 0.0
      %v5358 = vmax.f32 %v5342, 0.0
      %v5359 = vmax.f32 %v5343, 0.0
      %v5360 = vmax.f32 %v5344, 0.0
      %v5361 = vmax.f32 %v5345, 0.0
      %v5362 = vmax.f32 %v5346, 0.0
      %v5363 = vmax.f32 %v5347, 0.0
      %v5364 = vmax.f32 %v5348, 0.0
      %v5365 = vmul.f32 %v5349, %v1345
      %v5366 = vmul.f32 %v5350, %v1346
      %v5367 = vmul.f32 %v5351, %v1347
      %v5368 = vmul.f32 %v5352, %v1348
      %v5369 = vmul.f32 %v5353, %v1345
      %v5370 = vmul.f32 %v5354, %v1346
      %v5371 = vmul.f32 %v5355, %v1347
      %v5372 = vmul.f32 %v5356, %v1348
      %v5373 = vmul.f32 %v5357, %v1345
      %v5374 = vmul.f32 %v5358, %v1346
      %v5375 = vmul.f32 %v5359, %v1347
      %v5376 = vmul.f32 %v5360, %v1348
      %v5377 = vmul.f32 %v5361, %v1345
      %v5378 = vmul.f32 %v5362, %v1346
      %v5379 = vmul.f32 %v5363, %v1347
      %v5380 = vmul.f32 %v5364, %v1348
      %v5381 = vpack.c.bf16 %v5366, %v5365
      %v5382 = vpack.c.bf16 %v5368, %v5367
      %v5383 = vpack.c.bf16 %v5370, %v5369
      %v5384 = vpack.c.bf16 %v5372, %v5371
      %v5385 = vpack.c.bf16 %v5374, %v5373
      %v5386 = vpack.c.bf16 %v5376, %v5375
      %v5387 = vpack.c.bf16 %v5378, %v5377
      %v5388 = vpack.c.bf16 %v5380, %v5379
      %v5397 = vunpack.c.l.b16 %v5381
      %v5398 = vunpack.c.h.b16 %v5381
      %v5399 = vunpack.c.l.b16 %v5382
      %v5400 = vunpack.c.h.b16 %v5382
      %v5401 = vunpack.c.l.b16 %v5383
      %v5402 = vunpack.c.h.b16 %v5383
      %v5403 = vunpack.c.l.b16 %v5384
      %v5404 = vunpack.c.h.b16 %v5384
      %v5405 = vunpack.c.l.b16 %v5385
      %v5406 = vunpack.c.h.b16 %v5385
      %v5407 = vunpack.c.l.b16 %v5386
      %v5408 = vunpack.c.h.b16 %v5386
      %v5409 = vunpack.c.l.b16 %v5387
      %v5410 = vunpack.c.h.b16 %v5387
      %v5411 = vunpack.c.l.b16 %v5388
      %v5412 = vunpack.c.h.b16 %v5388
      %v5413 = vpack.c.b16 %v5401, %v5397
      %v5414 = vpack.c.b16 %v5402, %v5398
      %v5415 = vpack.c.b16 %v5403, %v5399
      %v5416 = vpack.c.b16 %v5404, %v5400
      %v5417 = vpack.c.b16 %v5409, %v5405
      %v5418 = vpack.c.b16 %v5410, %v5406
      %v5419 = vpack.c.b16 %v5411, %v5407
      %v5420 = vpack.c.b16 %v5412, %v5408
      %5421 = vrot.lane.b32.xlu0 %v5413, 19
      %v5422 = vpop.permute.xlu0 %5421
      %5423 = vrot.lane.b32.xlu0 %v5414, 19
      %v5424 = vpop.permute.xlu0 %5423
      %5425 = vrot.lane.b32.xlu0 %v5415, 19
      %v5426 = vpop.permute.xlu0 %5425
      %5427 = vrot.lane.b32.xlu0 %v5416, 19
      %v5428 = vpop.permute.xlu0 %5427
      %5429 = vrot.lane.b32.xlu0 %v5417, 19
      %v5430 = vpop.permute.xlu0 %5429
      %5431 = vrot.lane.b32.xlu0 %v5418, 19
      %v5432 = vpop.permute.xlu0 %5431
      %5433 = vrot.lane.b32.xlu0 %v5419, 19
      %v5434 = vpop.permute.xlu0 %5433
      %5435 = vrot.lane.b32.xlu0 %v5420, 19
      %v5436 = vpop.permute.xlu0 %5435
      %v5437 = vsel %vm1425, %v5422, %v5424
      %v5438 = vsel %vm1425, %v5424, %v5426
      %v5439 = vsel %vm1425, %v5426, %v5428
      %v5440 = vsel %vm1425, %v5430, %v5432
      %v5441 = vsel %vm1425, %v5432, %v5434
      %v5442 = vsel %vm1425, %v5434, %v5436
      %v5448 = vsel %vm1436, 0, %v5422
      %v5451 = vsel %vm1436, 0, %v5430
      %v5454 = vsel %vm1444, %v5439, 0
      %v5457 = vsel %vm1444, %v5442, 0
      %5463 = vrot.lane.b32.xlu0 %v5448, 127
      %v5464 = vpop.permute.xlu0 %5463
      %5465 = vrot.lane.b32.xlu0 %v5437, 127
      %v5466 = vpop.permute.xlu0 %5465
      %5467 = vrot.lane.b32.xlu0 %v5438, 127
      %v5468 = vpop.permute.xlu0 %5467
      %5469 = vrot.lane.b32.xlu0 %v5454, 127
      %v5470 = vpop.permute.xlu0 %5469
      %5471 = vrot.lane.b32.xlu0 %v5451, 127
      %v5472 = vpop.permute.xlu0 %5471
      %5473 = vrot.lane.b32.xlu0 %v5440, 127
      %v5474 = vpop.permute.xlu0 %5473
      %5475 = vrot.lane.b32.xlu0 %v5441, 127
      %v5476 = vpop.permute.xlu0 %5475
      %5477 = vrot.lane.b32.xlu0 %v5457, 127
      %v5478 = vpop.permute.xlu0 %5477
      %v5479 = vsel %vm1471, %v5464, %v5466
      %v5480 = vsel %vm1471, %v5466, %v5468
      %v5481 = vsel %vm1471, %v5468, %v5470
      %v5482 = vsel %vm1471, %v5472, %v5474
      %v5483 = vsel %vm1471, %v5474, %v5476
      %v5484 = vsel %vm1471, %v5476, %v5478
      %5493 = vrot.lane.b32.xlu0 %v5448, 126
      %v5494 = vpop.permute.xlu0 %5493
      %5495 = vrot.lane.b32.xlu0 %v5437, 126
      %v5496 = vpop.permute.xlu0 %5495
      %5497 = vrot.lane.b32.xlu0 %v5438, 126
      %v5498 = vpop.permute.xlu0 %5497
      %5499 = vrot.lane.b32.xlu0 %v5454, 126
      %v5500 = vpop.permute.xlu0 %5499
      %5501 = vrot.lane.b32.xlu0 %v5451, 126
      %v5502 = vpop.permute.xlu0 %5501
      %5503 = vrot.lane.b32.xlu0 %v5440, 126
      %v5504 = vpop.permute.xlu0 %5503
      %5505 = vrot.lane.b32.xlu0 %v5441, 126
      %v5506 = vpop.permute.xlu0 %5505
      %5507 = vrot.lane.b32.xlu0 %v5457, 126
      %v5508 = vpop.permute.xlu0 %5507
      %v5509 = vsel %vm1502, %v5494, %v5496
      %v5510 = vsel %vm1502, %v5496, %v5498
      %v5511 = vsel %vm1502, %v5498, %v5500
      %v5512 = vsel %vm1502, %v5502, %v5504
      %v5513 = vsel %vm1502, %v5504, %v5506
      %v5514 = vsel %vm1502, %v5506, %v5508
      %v5523 = vld [vmem:[%s14] sm:$0x77]
      %s5524 = scalar_lea.vmem %s14, 8
      %v5525 = vld [vmem:[%s5524] sm:$0x77]
      %v5527 = vunpack.c.l.b16 %v5525
      %v5528 = vunpack.c.h.b16 %v5525
      %v5529 = vpack.c.b16 %v5527, %v5527
      %v5530 = vpack.c.b16 %v5528, %v5528
      %5532 = vrot.lane.b32.xlu0 %v5448, 110
      %v5533 = vpop.permute.xlu0 %5532
      %5534 = vrot.lane.b32.xlu0 %v5437, 110
      %v5535 = vpop.permute.xlu0 %5534
      %5536 = vrot.lane.b32.xlu0 %v5438, 110
      %v5537 = vpop.permute.xlu0 %5536
      %5538 = vrot.lane.b32.xlu0 %v5454, 110
      %v5539 = vpop.permute.xlu0 %5538
      %5540 = vrot.lane.b32.xlu0 %v5451, 110
      %v5541 = vpop.permute.xlu0 %5540
      %5542 = vrot.lane.b32.xlu0 %v5440, 110
      %v5543 = vpop.permute.xlu0 %5542
      %5544 = vrot.lane.b32.xlu0 %v5441, 110
      %v5545 = vpop.permute.xlu0 %5544
      %5546 = vrot.lane.b32.xlu0 %v5457, 110
      %v5547 = vpop.permute.xlu0 %5546
      %5548 = vrot.lane.b32.xlu0 %v5479, 110
      %v5549 = vpop.permute.xlu0 %5548
      %5550 = vrot.lane.b32.xlu0 %v5480, 110
      %v5551 = vpop.permute.xlu0 %5550
      %5552 = vrot.lane.b32.xlu0 %v5481, 110
      %v5553 = vpop.permute.xlu0 %5552
      %5554 = vrot.lane.b32.xlu0 %v5470, 110
      %v5555 = vpop.permute.xlu0 %5554
      %5556 = vrot.lane.b32.xlu0 %v5482, 110
      %v5557 = vpop.permute.xlu0 %5556
      %5558 = vrot.lane.b32.xlu0 %v5483, 110
      %v5559 = vpop.permute.xlu0 %5558
      %5560 = vrot.lane.b32.xlu0 %v5484, 110
      %v5561 = vpop.permute.xlu0 %5560
      %5562 = vrot.lane.b32.xlu0 %v5478, 110
      %v5563 = vpop.permute.xlu0 %5562
      %5564 = vrot.lane.b32.xlu0 %v5509, 110
      %v5565 = vpop.permute.xlu0 %5564
      %5566 = vrot.lane.b32.xlu0 %v5510, 110
      %v5567 = vpop.permute.xlu0 %5566
      %5568 = vrot.lane.b32.xlu0 %v5511, 110
      %v5569 = vpop.permute.xlu0 %5568
      %5570 = vrot.lane.b32.xlu0 %v5500, 110
      %v5571 = vpop.permute.xlu0 %5570
      %5572 = vrot.lane.b32.xlu0 %v5512, 110
      %v5573 = vpop.permute.xlu0 %5572
      %5574 = vrot.lane.b32.xlu0 %v5513, 110
      %v5575 = vpop.permute.xlu0 %5574
      %5576 = vrot.lane.b32.xlu0 %v5514, 110
      %v5577 = vpop.permute.xlu0 %5576
      %5578 = vrot.lane.b32.xlu0 %v5508, 110
      %v5579 = vpop.permute.xlu0 %5578
      %v5580 = vsel %vm865, %v5533, %v5535
      %v5581 = vsel %vm865, %v5535, %v5537
      %v5582 = vsel %vm865, %v5537, %v5539
      %v5583 = vsel %vm865, %v5541, %v5543
      %v5584 = vsel %vm865, %v5543, %v5545
      %v5585 = vsel %vm865, %v5545, %v5547
      %v5586 = vsel %vm865, %v5549, %v5551
      %v5587 = vsel %vm865, %v5551, %v5553
      %v5588 = vsel %vm865, %v5553, %v5555
      %v5589 = vsel %vm865, %v5557, %v5559
      %v5590 = vsel %vm865, %v5559, %v5561
      %v5591 = vsel %vm865, %v5561, %v5563
      %v5592 = vsel %vm865, %v5565, %v5567
      %v5593 = vsel %vm865, %v5567, %v5569
      %v5594 = vsel %vm865, %v5569, %v5571
      %v5595 = vsel %vm865, %v5573, %v5575
      %v5596 = vsel %vm865, %v5575, %v5577
      %v5597 = vsel %vm865, %v5577, %v5579
      %v5623 = vsel %vm3735, %v5530, 0
      %5625 = vmatpush.bf16.msra.mxu0 %v5589
      %5626 = vmatpush.bf16.msra.mxu0 %v5586
      %5627 = vmatpush.bf16.msra.mxu0 %v1593
      %5628 = vmatpush.bf16.msra.mxu0 %v1590
      %5629 = vmatpush.bf16.msra.mxu0 %v5583
      %5630 = vmatpush.bf16.msra.mxu0 %v5580
      %5631 = vmatpush.bf16.msra.mxu0 %v1587
      %5632 = vmatpush.bf16.msra.mxu0 %v1584
      %5633 = vmatmul.bf16.gmra.mxu0 %v5529
      %v5634 = vpop.f32.mrf.mxu0
      %v5635 = vadd.f32 0.0, %v5634
      %v5636 = vpop.f32.mrf.mxu0
      %5637 = vdwg.mxu0
      %5638 = vmatpush.bf16.msra.mxu0 0
      %5639 = vmatpush.bf16.msra.mxu0 0
      %5640 = vmatpush.bf16.msra.mxu0 0
      %5641 = vmatpush.bf16.msra.mxu0 0
      %5642 = vmatpush.bf16.msra.mxu0 %v5595
      %5643 = vmatpush.bf16.msra.mxu0 %v5592
      %5644 = vmatpush.bf16.msra.mxu0 %v1599
      %5645 = vmatpush.bf16.msra.mxu0 %v1596
      %5646 = vmatmul.bf16.gmra.mxu0 %v5623
      %v5647 = vpop.f32.mrf.mxu0
      %v5648 = vadd.f32 %v5635, %v5647
      %v5649 = vpop.f32.mrf.mxu0
      %5650 = vdwg.mxu0
      %5651 = vmatpush.bf16.msra.mxu0 %v5590
      %5652 = vmatpush.bf16.msra.mxu0 %v5587
      %5653 = vmatpush.bf16.msra.mxu0 %v1594
      %5654 = vmatpush.bf16.msra.mxu0 %v1591
      %5655 = vmatpush.bf16.msra.mxu0 %v5584
      %5656 = vmatpush.bf16.msra.mxu0 %v5581
      %5657 = vmatpush.bf16.msra.mxu0 %v1588
      %5658 = vmatpush.bf16.msra.mxu0 %v1585
      %5659 = vmatmul.bf16.gmra.mxu0 %v5529
      %v5660 = vpop.f32.mrf.mxu0
      %v5661 = vadd.f32 0.0, %v5660
      %v5662 = vpop.f32.mrf.mxu0
      %5663 = vdwg.mxu0
      %5664 = vmatpush.bf16.msra.mxu0 0
      %5665 = vmatpush.bf16.msra.mxu0 0
      %5666 = vmatpush.bf16.msra.mxu0 0
      %5667 = vmatpush.bf16.msra.mxu0 0
      %5668 = vmatpush.bf16.msra.mxu0 %v5596
      %5669 = vmatpush.bf16.msra.mxu0 %v5593
      %5670 = vmatpush.bf16.msra.mxu0 %v1600
      %5671 = vmatpush.bf16.msra.mxu0 %v1597
      %5672 = vmatmul.bf16.gmra.mxu0 %v5623
      %v5673 = vpop.f32.mrf.mxu0
      %v5674 = vadd.f32 %v5661, %v5673
      %v5675 = vpop.f32.mrf.mxu0
      %5676 = vdwg.mxu0
      %5677 = vmatpush.bf16.msra.mxu0 %v5591
      %5678 = vmatpush.bf16.msra.mxu0 %v5588
      %5679 = vmatpush.bf16.msra.mxu0 %v1595
      %5680 = vmatpush.bf16.msra.mxu0 %v1592
      %5681 = vmatpush.bf16.msra.mxu0 %v5585
      %5682 = vmatpush.bf16.msra.mxu0 %v5582
      %5683 = vmatpush.bf16.msra.mxu0 %v1589
      %5684 = vmatpush.bf16.msra.mxu0 %v1586
      %5685 = vmatmul.bf16.gmra.mxu0 %v5529
      %v5686 = vpop.f32.mrf.mxu0
      %v5687 = vadd.f32 0.0, %v5686
      %v5688 = vpop.f32.mrf.mxu0
      %5689 = vdwg.mxu0
      %5690 = vmatpush.bf16.msra.mxu0 0
      %5691 = vmatpush.bf16.msra.mxu0 0
      %5692 = vmatpush.bf16.msra.mxu0 0
      %5693 = vmatpush.bf16.msra.mxu0 0
      %5694 = vmatpush.bf16.msra.mxu0 %v5597
      %5695 = vmatpush.bf16.msra.mxu0 %v5594
      %5696 = vmatpush.bf16.msra.mxu0 %v1601
      %5697 = vmatpush.bf16.msra.mxu0 %v1598
      %5698 = vmatmul.bf16.gmra.mxu0 %v5623
      %v5699 = vpop.f32.mrf.mxu0
      %v5700 = vadd.f32 %v5687, %v5699
      %v5701 = vpop.f32.mrf.mxu0
      %5702 = vdwg.mxu0
      %5703 = vmatpush.bf16.msra.mxu0 %v5563
      %5704 = vmatpush.bf16.msra.mxu0 %v5555
      %5705 = vmatpush.bf16.msra.mxu0 %v1567
      %5706 = vmatpush.bf16.msra.mxu0 %v1559
      %5707 = vmatpush.bf16.msra.mxu0 %v5547
      %5708 = vmatpush.bf16.msra.mxu0 %v5539
      %5709 = vmatpush.bf16.msra.mxu0 %v1551
      %5710 = vmatpush.bf16.msra.mxu0 %v1543
      %5711 = vmatmul.bf16.gmra.mxu0 %v5529
      %v5712 = vpop.f32.mrf.mxu0
      %v5713 = vadd.f32 0.0, %v5712
      %v5714 = vpop.f32.mrf.mxu0
      %5715 = vdwg.mxu0
      %5716 = vmatpush.bf16.msra.mxu0 0
      %5717 = vmatpush.bf16.msra.mxu0 0
      %5718 = vmatpush.bf16.msra.mxu0 0
      %5719 = vmatpush.bf16.msra.mxu0 0
      %5720 = vmatpush.bf16.msra.mxu0 %v5579
      %5721 = vmatpush.bf16.msra.mxu0 %v5571
      %5722 = vmatpush.bf16.msra.mxu0 %v1583
      %5723 = vmatpush.bf16.msra.mxu0 %v1575
      %5724 = vmatmul.bf16.gmra.mxu0 %v5623
      %v5725 = vpop.f32.mrf.mxu0
      %v5726 = vadd.f32 %v5713, %v5725
      %v5727 = vpop.f32.mrf.mxu0
      %5728 = vdwg.mxu0
      %v5730 = vunpack.c.l.b16 %v5523
      %v5731 = vunpack.c.h.b16 %v5523
      %v5732 = vpack.c.b16 %v5730, %v5730
      %v5733 = vpack.c.b16 %v5731, %v5731
      %v5736 = vsel %vm3735, %v5733, 0
      %5738 = vmatpush.bf16.msra.mxu0 %v5482
      %5739 = vmatpush.bf16.msra.mxu0 %v5479
      %5740 = vmatpush.bf16.msra.mxu0 %v1475
      %5741 = vmatpush.bf16.msra.mxu0 %v1472
      %5742 = vmatpush.bf16.msra.mxu0 %v5451
      %5743 = vmatpush.bf16.msra.mxu0 %v5448
      %5744 = vmatpush.bf16.msra.mxu0 %v1442
      %5745 = vmatpush.bf16.msra.mxu0 %v1439
      %5746 = vmatmul.bf16.gmra.mxu0 %v5732
      %v5747 = vpop.f32.mrf.mxu0
      %v5748 = vadd.f32 %v5648, %v5747
      %v5749 = vpop.f32.mrf.mxu0
      %5750 = vdwg.mxu0
      %5751 = vmatpush.bf16.msra.mxu0 0
      %5752 = vmatpush.bf16.msra.mxu0 0
      %5753 = vmatpush.bf16.msra.mxu0 0
      %5754 = vmatpush.bf16.msra.mxu0 0
      %5755 = vmatpush.bf16.msra.mxu0 %v5512
      %5756 = vmatpush.bf16.msra.mxu0 %v5509
      %5757 = vmatpush.bf16.msra.mxu0 %v1506
      %5758 = vmatpush.bf16.msra.mxu0 %v1503
      %5759 = vmatmul.bf16.gmra.mxu0 %v5736
      %v5760 = vpop.f32.mrf.mxu0
      %v5761 = vadd.f32 %v5748, %v5760
      %v5762 = vpop.f32.mrf.mxu0
      %5763 = vdwg.mxu0
      %5764 = vmatpush.bf16.msra.mxu0 %v5483
      %5765 = vmatpush.bf16.msra.mxu0 %v5480
      %5766 = vmatpush.bf16.msra.mxu0 %v1476
      %5767 = vmatpush.bf16.msra.mxu0 %v1473
      %5768 = vmatpush.bf16.msra.mxu0 %v5440
      %5769 = vmatpush.bf16.msra.mxu0 %v5437
      %5770 = vmatpush.bf16.msra.mxu0 %v1429
      %5771 = vmatpush.bf16.msra.mxu0 %v1426
      %5772 = vmatmul.bf16.gmra.mxu0 %v5732
      %v5773 = vpop.f32.mrf.mxu0
      %v5774 = vadd.f32 %v5674, %v5773
      %v5775 = vpop.f32.mrf.mxu0
      %5776 = vdwg.mxu0
      %5777 = vmatpush.bf16.msra.mxu0 0
      %5778 = vmatpush.bf16.msra.mxu0 0
      %5779 = vmatpush.bf16.msra.mxu0 0
      %5780 = vmatpush.bf16.msra.mxu0 0
      %5781 = vmatpush.bf16.msra.mxu0 %v5513
      %5782 = vmatpush.bf16.msra.mxu0 %v5510
      %5783 = vmatpush.bf16.msra.mxu0 %v1507
      %5784 = vmatpush.bf16.msra.mxu0 %v1504
      %5785 = vmatmul.bf16.gmra.mxu0 %v5736
      %v5786 = vpop.f32.mrf.mxu0
      %v5787 = vadd.f32 %v5774, %v5786
      %v5788 = vpop.f32.mrf.mxu0
      %5789 = vdwg.mxu0
      %5790 = vmatpush.bf16.msra.mxu0 %v5484
      %5791 = vmatpush.bf16.msra.mxu0 %v5481
      %5792 = vmatpush.bf16.msra.mxu0 %v1477
      %5793 = vmatpush.bf16.msra.mxu0 %v1474
      %5794 = vmatpush.bf16.msra.mxu0 %v5441
      %5795 = vmatpush.bf16.msra.mxu0 %v5438
      %5796 = vmatpush.bf16.msra.mxu0 %v1430
      %5797 = vmatpush.bf16.msra.mxu0 %v1427
      %5798 = vmatmul.bf16.gmra.mxu0 %v5732
      %v5799 = vpop.f32.mrf.mxu0
      %v5800 = vadd.f32 %v5700, %v5799
      %v5801 = vpop.f32.mrf.mxu0
      %5802 = vdwg.mxu0
      %5803 = vmatpush.bf16.msra.mxu0 0
      %5804 = vmatpush.bf16.msra.mxu0 0
      %5805 = vmatpush.bf16.msra.mxu0 0
      %5806 = vmatpush.bf16.msra.mxu0 0
      %5807 = vmatpush.bf16.msra.mxu0 %v5514
      %5808 = vmatpush.bf16.msra.mxu0 %v5511
      %5809 = vmatpush.bf16.msra.mxu0 %v1508
      %5810 = vmatpush.bf16.msra.mxu0 %v1505
      %5811 = vmatmul.bf16.gmra.mxu0 %v5736
      %v5812 = vpop.f32.mrf.mxu0
      %v5813 = vadd.f32 %v5800, %v5812
      %v5814 = vpop.f32.mrf.mxu0
      %5815 = vdwg.mxu0
      %5816 = vmatpush.bf16.msra.mxu0 %v5478
      %5817 = vmatpush.bf16.msra.mxu0 %v5470
      %5818 = vmatpush.bf16.msra.mxu0 %v1470
      %5819 = vmatpush.bf16.msra.mxu0 %v1462
      %5820 = vmatpush.bf16.msra.mxu0 %v5457
      %5821 = vmatpush.bf16.msra.mxu0 %v5454
      %5822 = vmatpush.bf16.msra.mxu0 %v1449
      %5823 = vmatpush.bf16.msra.mxu0 %v1446
      %5824 = vmatmul.bf16.gmra.mxu0 %v5732
      %v5825 = vpop.f32.mrf.mxu0
      %v5826 = vadd.f32 %v5726, %v5825
      %v5827 = vpop.f32.mrf.mxu0
      %5828 = vdwg.mxu0
      %5829 = vmatpush.bf16.msra.mxu0 0
      %5830 = vmatpush.bf16.msra.mxu0 0
      %5831 = vmatpush.bf16.msra.mxu0 0
      %5832 = vmatpush.bf16.msra.mxu0 0
      %5833 = vmatpush.bf16.msra.mxu0 %v5508
      %5834 = vmatpush.bf16.msra.mxu0 %v5500
      %5835 = vmatpush.bf16.msra.mxu0 %v1501
      %5836 = vmatpush.bf16.msra.mxu0 %v1493
      %5837 = vmatmul.bf16.gmra.mxu0 %v5736
      %v5838 = vpop.f32.mrf.mxu0
      %v5839 = vadd.f32 %v5826, %v5838
      %v5840 = vpop.f32.mrf.mxu0
      %5841 = vdwg.mxu0
      %s5842 = scalar_lea.vmem %s14, 16
      %v5843 = vld [vmem:[%s5842] sm:$0x77]
      %v5845 = vunpack.c.l.b16 %v5843
      %v5846 = vunpack.c.h.b16 %v5843
      %v5847 = vpack.c.b16 %v5845, %v5845
      %v5848 = vpack.c.b16 %v5846, %v5846
      %5850 = vrot.lane.b32.xlu0 %v5448, 92
      %v5851 = vpop.permute.xlu0 %5850
      %5852 = vrot.lane.b32.xlu0 %v5437, 92
      %v5853 = vpop.permute.xlu0 %5852
      %5854 = vrot.lane.b32.xlu0 %v5438, 92
      %v5855 = vpop.permute.xlu0 %5854
      %5856 = vrot.lane.b32.xlu0 %v5454, 92
      %v5857 = vpop.permute.xlu0 %5856
      %5858 = vrot.lane.b32.xlu0 %v5451, 92
      %v5859 = vpop.permute.xlu0 %5858
      %5860 = vrot.lane.b32.xlu0 %v5440, 92
      %v5861 = vpop.permute.xlu0 %5860
      %5862 = vrot.lane.b32.xlu0 %v5441, 92
      %v5863 = vpop.permute.xlu0 %5862
      %5864 = vrot.lane.b32.xlu0 %v5457, 92
      %v5865 = vpop.permute.xlu0 %5864
      %5866 = vrot.lane.b32.xlu0 %v5479, 92
      %v5867 = vpop.permute.xlu0 %5866
      %5868 = vrot.lane.b32.xlu0 %v5480, 92
      %v5869 = vpop.permute.xlu0 %5868
      %5870 = vrot.lane.b32.xlu0 %v5481, 92
      %v5871 = vpop.permute.xlu0 %5870
      %5872 = vrot.lane.b32.xlu0 %v5470, 92
      %v5873 = vpop.permute.xlu0 %5872
      %5874 = vrot.lane.b32.xlu0 %v5482, 92
      %v5875 = vpop.permute.xlu0 %5874
      %5876 = vrot.lane.b32.xlu0 %v5483, 92
      %v5877 = vpop.permute.xlu0 %5876
      %5878 = vrot.lane.b32.xlu0 %v5484, 92
      %v5879 = vpop.permute.xlu0 %5878
      %5880 = vrot.lane.b32.xlu0 %v5478, 92
      %v5881 = vpop.permute.xlu0 %5880
      %5882 = vrot.lane.b32.xlu0 %v5509, 92
      %v5883 = vpop.permute.xlu0 %5882
      %5884 = vrot.lane.b32.xlu0 %v5510, 92
      %v5885 = vpop.permute.xlu0 %5884
      %5886 = vrot.lane.b32.xlu0 %v5511, 92
      %v5887 = vpop.permute.xlu0 %5886
      %5888 = vrot.lane.b32.xlu0 %v5500, 92
      %v5889 = vpop.permute.xlu0 %5888
      %5890 = vrot.lane.b32.xlu0 %v5512, 92
      %v5891 = vpop.permute.xlu0 %5890
      %5892 = vrot.lane.b32.xlu0 %v5513, 92
      %v5893 = vpop.permute.xlu0 %5892
      %5894 = vrot.lane.b32.xlu0 %v5514, 92
      %v5895 = vpop.permute.xlu0 %5894
      %5896 = vrot.lane.b32.xlu0 %v5508, 92
      %v5897 = vpop.permute.xlu0 %5896
      %v5898 = vsel %vm1174, %v5851, %v5853
      %v5899 = vsel %vm1174, %v5853, %v5855
      %v5900 = vsel %vm1174, %v5855, %v5857
      %v5901 = vsel %vm1174, %v5859, %v5861
      %v5902 = vsel %vm1174, %v5861, %v5863
      %v5903 = vsel %vm1174, %v5863, %v5865
      %v5904 = vsel %vm1174, %v5867, %v5869
      %v5905 = vsel %vm1174, %v5869, %v5871
      %v5906 = vsel %vm1174, %v5871, %v5873
      %v5907 = vsel %vm1174, %v5875, %v5877
      %v5908 = vsel %vm1174, %v5877, %v5879
      %v5909 = vsel %vm1174, %v5879, %v5881
      %v5910 = vsel %vm1174, %v5883, %v5885
      %v5911 = vsel %vm1174, %v5885, %v5887
      %v5912 = vsel %vm1174, %v5887, %v5889
      %v5913 = vsel %vm1174, %v5891, %v5893
      %v5914 = vsel %vm1174, %v5893, %v5895
      %v5915 = vsel %vm1174, %v5895, %v5897
      %v5941 = vsel %vm3735, %v5848, 0
      %5943 = vmatpush.bf16.msra.mxu0 %v5907
      %5944 = vmatpush.bf16.msra.mxu0 %v5904
      %5945 = vmatpush.bf16.msra.mxu0 %v1873
      %5946 = vmatpush.bf16.msra.mxu0 %v1870
      %5947 = vmatpush.bf16.msra.mxu0 %v5901
      %5948 = vmatpush.bf16.msra.mxu0 %v5898
      %5949 = vmatpush.bf16.msra.mxu0 %v1867
      %5950 = vmatpush.bf16.msra.mxu0 %v1864
      %5951 = vmatmul.bf16.gmra.mxu0 %v5847
      %v5952 = vpop.f32.mrf.mxu0
      %v5953 = vadd.f32 0.0, %v5952
      %v5954 = vpop.f32.mrf.mxu0
      %5955 = vdwg.mxu0
      %5956 = vmatpush.bf16.msra.mxu0 0
      %5957 = vmatpush.bf16.msra.mxu0 0
      %5958 = vmatpush.bf16.msra.mxu0 0
      %5959 = vmatpush.bf16.msra.mxu0 0
      %5960 = vmatpush.bf16.msra.mxu0 %v5913
      %5961 = vmatpush.bf16.msra.mxu0 %v5910
      %5962 = vmatpush.bf16.msra.mxu0 %v1879
      %5963 = vmatpush.bf16.msra.mxu0 %v1876
      %5964 = vmatmul.bf16.gmra.mxu0 %v5941
      %v5965 = vpop.f32.mrf.mxu0
      %v5966 = vadd.f32 %v5953, %v5965
      %v5967 = vpop.f32.mrf.mxu0
      %5968 = vdwg.mxu0
      %5969 = vmatpush.bf16.msra.mxu0 %v5908
      %5970 = vmatpush.bf16.msra.mxu0 %v5905
      %5971 = vmatpush.bf16.msra.mxu0 %v1874
      %5972 = vmatpush.bf16.msra.mxu0 %v1871
      %5973 = vmatpush.bf16.msra.mxu0 %v5902
      %5974 = vmatpush.bf16.msra.mxu0 %v5899
      %5975 = vmatpush.bf16.msra.mxu0 %v1868
      %5976 = vmatpush.bf16.msra.mxu0 %v1865
      %5977 = vmatmul.bf16.gmra.mxu0 %v5847
      %v5978 = vpop.f32.mrf.mxu0
      %v5979 = vadd.f32 0.0, %v5978
      %v5980 = vpop.f32.mrf.mxu0
      %5981 = vdwg.mxu0
      %5982 = vmatpush.bf16.msra.mxu0 0
      %5983 = vmatpush.bf16.msra.mxu0 0
      %5984 = vmatpush.bf16.msra.mxu0 0
      %5985 = vmatpush.bf16.msra.mxu0 0
      %5986 = vmatpush.bf16.msra.mxu0 %v5914
      %5987 = vmatpush.bf16.msra.mxu0 %v5911
      %5988 = vmatpush.bf16.msra.mxu0 %v1880
      %5989 = vmatpush.bf16.msra.mxu0 %v1877
      %5990 = vmatmul.bf16.gmra.mxu0 %v5941
      %v5991 = vpop.f32.mrf.mxu0
      %v5992 = vadd.f32 %v5979, %v5991
      %v5993 = vpop.f32.mrf.mxu0
      %5994 = vdwg.mxu0
      %5995 = vmatpush.bf16.msra.mxu0 %v5909
      %5996 = vmatpush.bf16.msra.mxu0 %v5906
      %5997 = vmatpush.bf16.msra.mxu0 %v1875
      %5998 = vmatpush.bf16.msra.mxu0 %v1872
      %5999 = vmatpush.bf16.msra.mxu0 %v5903
      %6000 = vmatpush.bf16.msra.mxu0 %v5900
      %6001 = vmatpush.bf16.msra.mxu0 %v1869
      %6002 = vmatpush.bf16.msra.mxu0 %v1866
      %6003 = vmatmul.bf16.gmra.mxu0 %v5847
      %v6004 = vpop.f32.mrf.mxu0
      %v6005 = vadd.f32 0.0, %v6004
      %v6006 = vpop.f32.mrf.mxu0
      %6007 = vdwg.mxu0
      %6008 = vmatpush.bf16.msra.mxu0 0
      %6009 = vmatpush.bf16.msra.mxu0 0
      %6010 = vmatpush.bf16.msra.mxu0 0
      %6011 = vmatpush.bf16.msra.mxu0 0
      %6012 = vmatpush.bf16.msra.mxu0 %v5915
      %6013 = vmatpush.bf16.msra.mxu0 %v5912
      %6014 = vmatpush.bf16.msra.mxu0 %v1881
      %6015 = vmatpush.bf16.msra.mxu0 %v1878
      %6016 = vmatmul.bf16.gmra.mxu0 %v5941
      %v6017 = vpop.f32.mrf.mxu0
      %v6018 = vadd.f32 %v6005, %v6017
      %v6019 = vpop.f32.mrf.mxu0
      %6020 = vdwg.mxu0
      %6021 = vmatpush.bf16.msra.mxu0 %v5881
      %6022 = vmatpush.bf16.msra.mxu0 %v5873
      %6023 = vmatpush.bf16.msra.mxu0 %v1847
      %6024 = vmatpush.bf16.msra.mxu0 %v1839
      %6025 = vmatpush.bf16.msra.mxu0 %v5865
      %6026 = vmatpush.bf16.msra.mxu0 %v5857
      %6027 = vmatpush.bf16.msra.mxu0 %v1831
      %6028 = vmatpush.bf16.msra.mxu0 %v1823
      %6029 = vmatmul.bf16.gmra.mxu0 %v5847
      %v6030 = vpop.f32.mrf.mxu0
      %v6031 = vadd.f32 0.0, %v6030
      %v6032 = vpop.f32.mrf.mxu0
      %6033 = vdwg.mxu0
      %6034 = vmatpush.bf16.msra.mxu0 0
      %6035 = vmatpush.bf16.msra.mxu0 0
      %6036 = vmatpush.bf16.msra.mxu0 0
      %6037 = vmatpush.bf16.msra.mxu0 0
      %6038 = vmatpush.bf16.msra.mxu0 %v5897
      %6039 = vmatpush.bf16.msra.mxu0 %v5889
      %6040 = vmatpush.bf16.msra.mxu0 %v1863
      %6041 = vmatpush.bf16.msra.mxu0 %v1855
      %6042 = vmatmul.bf16.gmra.mxu0 %v5941
      %v6043 = vpop.f32.mrf.mxu0
      %v6044 = vadd.f32 %v6031, %v6043
      %v6045 = vpop.f32.mrf.mxu0
      %6046 = vdwg.mxu0
      %v6047 = vadd.f32 %v5761, %v5966
      %v6048 = vadd.f32 %v5787, %v5992
      %v6049 = vadd.f32 %v5813, %v6018
      %v6050 = vadd.f32 %v5839, %v6044
      %v6051 = vld [vmem:[%s15] sm:$0x3f]
      %6053 = vset.pattern.permute.xlu0 0
      %6054 = vperm.xlu0 %6053, %v6051
      %v6055 = vpop.permute.xlu0 %6054
      %v6057 = vadd.f32 %v6047, %v6055
      %v6058 = vadd.f32 %v6048, %v6055
      %v6059 = vadd.f32 %v6049, %v6055
      %v6060 = vadd.f32 %v6050, %v6055
      %v6061 = vtanh.pop %v6057
      %v6062 = vtanh.pop %v6058
      %v6063 = vtanh.pop %v6059
      %v6064 = vtanh.pop %v6060
      %v6065 = vmax.f32 %v6057, 0.0
      %v6066 = vmax.f32 %v6058, 0.0
      %v6067 = vmax.f32 %v6059, 0.0
      %v6068 = vmax.f32 %v6060, 0.0
      %v6073 = vrot.slane %v6065, 3
      %v6074 = vrot.slane %v6066, 3
      %v6075 = vrot.slane %v6067, 3
      %v6076 = vrot.slane %v6068, 3
      %v6081 = vadd.f32 %v6061, %v6073
      %v6082 = vadd.f32 %v6062, %v6074
      %v6083 = vadd.f32 %v6063, %v6075
      %v6084 = vadd.f32 %v6064, %v6076
      %v6085 = vsub.f32 0.0, %v6081
      %v6086 = vsub.f32 0.0, %v6082
      %v6087 = vsub.f32 0.0, %v6083
      %v6088 = vsub.f32 0.0, %v6084
      %v6089 = vmul.f32 %v675, %v675
      %v6090 = vmul.f32 %v676, %v676
      %6093 = vst [vmem:[#allocation1] ss:$2 sm:$0xff] %v6089
      %s6094 = scalar_lea.vmem [#allocation1], 16
      %6095 = vst [vmem:[%s6094] ss:$2 sm:$0xff] %v6090
      %v6096 = vld.sshfl [vmem:[#allocation1] sm:$0xff pattern:$0x75316420]
      %v6097 = vld.sshfl [vmem:[#allocation1 + $0x8] sm:$0xff pattern:$0x75316420]
      %v6098 = vld.sshfl [vmem:[#allocation1 + $0x10] sm:$0xff pattern:$0x75316420]
      %v6099 = vld.sshfl [vmem:[#allocation1 + $0x18] sm:$0xff pattern:$0x75316420]
      %6100 = vrot.lane.b32.xlu0 %v6096, 109
      %v6101 = vpop.permute.xlu0 %6100
      %6102 = vrot.lane.b32.xlu0 %v6097, 109
      %v6103 = vpop.permute.xlu0 %6102
      %6104 = vrot.lane.b32.xlu0 %v6098, 109
      %v6105 = vpop.permute.xlu0 %6104
      %6106 = vrot.lane.b32.xlu0 %v6099, 109
      %v6107 = vpop.permute.xlu0 %6106
      %vm6108 = vcmask 891904
      %v6109 = vsel %vm6108, %v6101, %v6103
      %v6110 = vsel %vm6108, %v6103, %v6105
      %v6111 = vsel %vm6108, %v6105, %v6107
      %v6116 = vmul.f32 %v6085, %v6109
      %v6117 = vmul.f32 %v6086, %v6110
      %v6118 = vmul.f32 %v6087, %v6111
      %v6119 = vmul.f32 %v6088, %v6107
      %v6120 = vadd.f32 %v6061, 1.0
      %v6121 = vadd.f32 %v6062, 1.0
      %v6122 = vadd.f32 %v6063, 1.0
      %v6123 = vadd.f32 %v6064, 1.0
      %6124 = vst [vmem:[#allocation1] ss:$2 sm:$0xff] %v675
      %s6125 = scalar_lea.vmem [#allocation1], 16
      %6126 = vst [vmem:[%s6125] ss:$2 sm:$0xff] %v676
      %v6127 = vld.sshfl [vmem:[#allocation1] sm:$0xff pattern:$0x75316420]
      %v6128 = vld.sshfl [vmem:[#allocation1 + $0x8] sm:$0xff pattern:$0x75316420]
      %v6129 = vld.sshfl [vmem:[#allocation1 + $0x10] sm:$0xff pattern:$0x75316420]
      %v6130 = vld.sshfl [vmem:[#allocation1 + $0x18] sm:$0xff pattern:$0x75316420]
      %6131 = vrot.lane.b32.xlu0 %v6127, 109
      %v6132 = vpop.permute.xlu0 %6131
      %6133 = vrot.lane.b32.xlu0 %v6128, 109
      %v6134 = vpop.permute.xlu0 %6133
      %6135 = vrot.lane.b32.xlu0 %v6129, 109
      %v6136 = vpop.permute.xlu0 %6135
      %6137 = vrot.lane.b32.xlu0 %v6130, 109
      %v6138 = vpop.permute.xlu0 %6137
      %v6139 = vsel %vm6108, %v6132, %v6134
      %v6140 = vsel %vm6108, %v6134, %v6136
      %v6141 = vsel %vm6108, %v6136, %v6138
      %v6146 = vmul.f32 %v6120, %v6139
      %v6147 = vmul.f32 %v6121, %v6140
      %v6148 = vmul.f32 %v6122, %v6141
      %v6149 = vmul.f32 %v6123, %v6138
      %v6150 = vadd.f32 %v6116, %v6146
      %v6151 = vadd.f32 %v6117, %v6147
      %v6152 = vadd.f32 %v6118, %v6148
      %v6153 = vadd.f32 %v6119, %v6149
      %v6158 = vrot.slane %v6151, 4
      %v6159 = vrot.slane %v6153, 4
      %v6160 = vsel %vm876, %v6150, %v6158
      %v6161 = vsel %vm876, %v6152, %v6159
      %6164 = vst [vmem:[%s655] sm:$0x77] %v6160
      %vm6165 = vcmask 391172
      %vm6166 = vmor %vm6165, %vm745
      %6167 = vst.msk [vmem:[%s655 + $0x8] sm:$0x77] %vm6166, %v6161
      %v6172 = vrot.slane %v6062, 4
      %v6173 = vrot.slane %v6064, 4
      %v6174 = vsel %vm876, %v6061, %v6172
      %v6175 = vsel %vm876, %v6063, %v6173
      %6178 = vst [vmem:[%s664] sm:$0x77] %v6174
      %6179 = vst.msk [vmem:[%s664 + $0x8] sm:$0x77] %vm6166, %v6175
      %v6180 = vrot.slane %v6066, 4
      %v6181 = vrot.slane %v6068, 4
      %v6182 = vsel %vm876, %v6065, %v6180
      %v6183 = vsel %vm876, %v6067, %v6181
      %v6184 = vsel %vm876, %v6180, %v6065
      %v6185 = vrot.slane %v6184, 4
      %v6186 = vsel %vm876, %v6181, %v6067
      %v6187 = vrot.slane %v6186, 4
      %vm6188 = vcmask 1040384
      %vm6189 = vcmask 1044484
      %vm6190 = vmor %vm6188, %vm6189
      %v6191 = vrot.slane %v6182, 7
      %v6192 = vrot.slane %v6191, 4
      %v6193 = vrot.slane %v6185, 7
      %v6194 = vsel %vm6190, %v6192, %v6193
      %v6195 = vrot.slane %v6183, 7
      %v6196 = vrot.slane %v6195, 4
      %v6197 = vrot.slane %v6187, 7
      %v6198 = vsel %vm6190, %v6196, %v6197
      %6201 = vst [vmem:[%s673] sm:$0x77] %v6194
      %6202 = vst.msk [vmem:[%s673 + $0x8] sm:$0x77] %vm6166, %v6198
      %p6203 = scmp.lt.s32.totalorder %s34, 1
      %s6204 = scalar_select %p6203, %s34, 1
      %p6205 = scmp.lt.s32.totalorder %s35, 1
      %s6206 = scalar_select %p6205, %s35, 1
      %s6207 = smul.addr %s6206, 4
      %s6208 = smul.addr %s6204, 8
      %s6209 = sadd.s32 %s6207, %s6208
      %s6210 = smul.addr %s6209, 4
      %s6211 = scalar_lea.vmem %s16, %s6210
      %p6212 = scmp.lt.s32.totalorder %s34, 1
      %s6213 = scalar_select %p6212, %s34, 1
      %p6214 = scmp.lt.s32.totalorder %s35, 1
      %s6215 = scalar_select %p6214, %s35, 1
      %s6216 = smul.addr %s6215, 4
      %s6217 = smul.addr %s6213, 8
      %s6218 = sadd.s32 %s6216, %s6217
      %s6219 = smul.addr %s6218, 4
      %s6220 = scalar_lea.vmem %s17, %s6219
      %p6221 = scmp.lt.s32.totalorder %s34, 1
      %s6222 = scalar_select %p6221, %s34, 1
      %p6223 = scmp.lt.s32.totalorder %s35, 1
      %s6224 = scalar_select %p6223, %s35, 1
      %s6225 = smul.addr %s6224, 4
      %s6226 = smul.addr %s6222, 8
      %s6227 = sadd.s32 %s6225, %s6226
      %s6228 = smul.addr %s6227, 4
      %s6229 = scalar_lea.vmem %s18, %s6228
      // Predicated region
      $region85: #{enhance_net_forward.1} parent=83 // pred_check
        %p6230 = pneg %p410
      $region86: #{enhance_net_forward.1} parent=83 // pred_check_branch
        %6232 = sbr.rel (%p6230) target = $region88
      $region87: #{enhance_net_forward.1} parent=83 // pred_region
        _
      $region88: #{enhance_net_forward.1} parent=83 // pred_fallthru
        _
      // Predicated region
      $region89: #{enhance_net_forward.1} parent=83 // pred_check
        %p6233 = pneg %p438
      $region90: #{enhance_net_forward.1} parent=83 // pred_check_branch
        %6235 = sbr.rel (%p6233) target = $region92
      $region91: #{enhance_net_forward.1} parent=83 // pred_region
        _
      $region92: #{enhance_net_forward.1} parent=83 // pred_fallthru
        _
      // Predicated region
      $region93: #{enhance_net_forward.1} parent=83 // pred_check
        %p6236 = pneg %p466
      $region94: #{enhance_net_forward.1} parent=83 // pred_check_branch
        %6238 = sbr.rel (%p6236) target = $region96
      $region95: #{enhance_net_forward.1} parent=83 // pred_region
        _
      $region96: #{enhance_net_forward.1} parent=83 // pred_fallthru
        _
    $region84: #{enhance_net_forward.1} parent=5 // pred_fallthru
      _
    %p6239 = scmp.le.s32.totalorder 2, %s25
    // Predicated region
    $region97: #{enhance_net_forward.1} parent=5 // pred_check
      %p6240 = pneg %p6239
    $region98: #{enhance_net_forward.1} parent=5 // pred_check_branch
      %6242 = sbr.rel (%p6240) target = $region100
    $region99: #{enhance_net_forward.1} parent=5 // pred_region
      %s6243 = ssub.s32 %s25, 2
      // Predicated region
      $region101: #{enhance_net_forward.1} parent=99 // pred_check
        %p6244 = pneg %p416
      $region102: #{enhance_net_forward.1} parent=99 // pred_check_branch
        %6246 = sbr.rel (%p6244) target = $region104
      $region103: #{enhance_net_forward.1} parent=99 // pred_region
        %p6247 = scmp.lt.s32.totalorder %s36, 1
        %s6248 = scalar_select %p6247, %s36, 1
        %p6249 = scmp.lt.s32.totalorder %s37, 1
        %s6250 = scalar_select %p6249, %s37, 1
        %s6251 = smul.addr %s6250, 4
        %s6252 = smul.addr %s6248, 8
        %s6253 = sadd.s32 %s6251, %s6252
        %s6254 = smul.addr %s6253, 4
        %s6255 = scalar_lea.vmem %s16, %s6254
      $region104: #{enhance_net_forward.1} parent=99 // pred_fallthru
        _
      // Predicated region
      $region105: #{enhance_net_forward.1} parent=99 // pred_check
        %p6256 = pneg %p444
      $region106: #{enhance_net_forward.1} parent=99 // pred_check_branch
        %6258 = sbr.rel (%p6256) target = $region108
      $region107: #{enhance_net_forward.1} parent=99 // pred_region
        %p6259 = scmp.lt.s32.totalorder %s36, 1
        %s6260 = scalar_select %p6259, %s36, 1
        %p6261 = scmp.lt.s32.totalorder %s37, 1
        %s6262 = scalar_select %p6261, %s37, 1
        %s6263 = smul.addr %s6262, 4
        %s6264 = smul.addr %s6260, 8
        %s6265 = sadd.s32 %s6263, %s6264
        %s6266 = smul.addr %s6265, 4
        %s6267 = scalar_lea.vmem %s17, %s6266
      $region108: #{enhance_net_forward.1} parent=99 // pred_fallthru
        _
      // Predicated region
      $region109: #{enhance_net_forward.1} parent=99 // pred_check
        %p6268 = pneg %p472
      $region110: #{enhance_net_forward.1} parent=99 // pred_check_branch
        %6270 = sbr.rel (%p6268) target = $region112
      $region111: #{enhance_net_forward.1} parent=99 // pred_region
        %p6271 = scmp.lt.s32.totalorder %s36, 1
        %s6272 = scalar_select %p6271, %s36, 1
        %p6273 = scmp.lt.s32.totalorder %s37, 1
        %s6274 = scalar_select %p6273, %s37, 1
        %s6275 = smul.addr %s6274, 4
        %s6276 = smul.addr %s6272, 8
        %s6277 = sadd.s32 %s6275, %s6276
        %s6278 = smul.addr %s6277, 4
        %s6279 = scalar_lea.vmem %s18, %s6278
      $region112: #{enhance_net_forward.1} parent=99 // pred_fallthru
        _
    $region100: #{enhance_net_forward.1} parent=5 // pred_fallthru
      _
  $region6: #{enhance_net_forward.1} parent=0 // loop_footer
    %s29 = sadd.s32 1, %s25
  $region7: #{enhance_net_forward.1} parent=0 // loop_footer_branch
    %24 = sbr.rel target = $region3
  $region8: #{enhance_net_forward.1} parent=0 // loop_exit
    _

</llo_original>
